<compile_context>
chip_gen: v7x
topology: tpu7x:2x2x1
jax: 0.10.0
libtpu: 0.0.40
codegen_flags: <defaults>
</compile_context>

<pallas_src>
import functools

import jax
import jax.numpy as jnp
import numpy as np
from jax.experimental import pallas as pl
from jax.experimental.pallas import tpu as pltpu


# ----------------------------- Pallas kernels ------------------------------


def _conv_bn_stats_kernel(x_ref, w_ref, y_ref, stats_ref, *,
                          n_kh, n_kw, tile_h, w_out, c_in):
    # x_ref:     (1, Hp, Wp, C_in)         padded NHWC image of one batch element (resident)
    # w_ref:     (n_kh*n_kw, C_in, C_pad)  per-tap weight matrices (resident)
    # y_ref:     (tile_h*w_out, C_pad)     conv output rows for this row-block
    # stats_ref: (1, 8, C_pad)             row 0 = sum(y), row 1 = sum(y*y) over this block
    hb = pl.program_id(1)
    h0 = hb * tile_h
    tile_rows = tile_h * w_out
    c_pad = w_ref.shape[-1]

    acc = jnp.zeros((tile_rows, c_pad), jnp.float32)
    for kh in range(n_kh):
        for kw in range(n_kw):
            # Shifted window of the padded image for this tap.
            xs = x_ref[0, pl.ds(h0 + kh, tile_h), kw:kw + w_out, :]   # (tile_h, w_out, C_in)
            xs = xs.reshape(tile_rows, c_in).astype(w_ref.dtype)
            acc += jnp.dot(xs, w_ref[kh * n_kw + kw],
                           preferred_element_type=jnp.float32)

    y_ref[...] = acc
    # Fused per-tile BN partial sums (one-pass variance form).
    stats_ref[0, 0:1, :] = jnp.sum(acc, axis=0, keepdims=True)
    stats_ref[0, 1:2, :] = jnp.sum(acc * acc, axis=0, keepdims=True)
    stats_ref[0, 2:8, :] = jnp.zeros((6, c_pad), jnp.float32)


def _bn_relu_kernel(y_ref, scale_ref, shift_ref, o_ref):
    # Affine-folded train-mode BN + ReLU: out = max(y * scale + shift, 0)
    o_ref[...] = jnp.maximum(y_ref[...] * scale_ref[...] + shift_ref[...], 0.0)


# ------------------------------ host wrapper --------------------------------


def _pick_tile_h(h_out, w_out, max_rows):
    """Largest divisor of h_out whose row-block (tile_h * w_out) fits max_rows,
    preferring blocks whose row count is a multiple of 8 (sublane-aligned)."""
    divs = [d for d in range(1, h_out + 1) if h_out % d == 0]
    good = [d for d in divs if d * w_out <= max_rows and (d * w_out) % 8 == 0]
    if good:
        return max(good)
    ok = [d for d in divs if d * w_out <= max_rows]
    # TODO(synk): pad M / mask rows for shapes where no sublane-aligned row tile exists.
    return max(ok) if ok else 1


def basic_conv2d(x_nchw, w_oihw, b, gamma, beta, *, padding=1, eps=1e-5,
                 compute_dtype=jnp.bfloat16, max_tile_rows=512):
    """Forward pass of BasicConv2d (stride=1 conv, train-mode BatchNorm, ReLU)."""
    # TODO(synk): stride > 1 / dilation not implemented (module default stride=1 only).
    N, C_in, H, W = x_nchw.shape
    C_out, _, KH, KW = w_oihw.shape
    C_pad = ((C_out + 127) // 128) * 128          # lane-dense output channels

    # Conv bias is a per-channel constant; train-mode BN subtracts the per-channel batch
    # mean immediately after, so the bias cancels exactly -> never DMA'd or added.
    del b

    # ---- glue: NCHW -> NHWC, spatial zero-pad (input kept at 1x, no im2col) ----
    x = jnp.transpose(x_nchw, (0, 2, 3, 1)).astype(jnp.float32)
    xp = jnp.pad(x, ((0, 0), (padding, padding), (padding, padding), (0, 0)))
    Hp, Wp = H + 2 * padding, W + 2 * padding
    H_out, W_out = Hp - KH + 1, Wp - KW + 1       # stride-1 output spatial size

    # weight: OIHW -> (KH*KW, C_in, C_pad), zero-padded output channels, MXU dtype
    w = jnp.transpose(w_oihw, (2, 3, 1, 0)).reshape(KH * KW, C_in, C_out)
    w = jnp.pad(w, ((0, 0), (0, 0), (0, C_pad - C_out))).astype(compute_dtype)

    tile_h = _pick_tile_h(H_out, W_out, max_tile_rows)
    num_hb = H_out // tile_h
    tile_rows = tile_h * W_out
    num_blocks = N * num_hb
    M = N * H_out * W_out

    # ---- Pallas pass 1: conv (tap-accumulated matmuls) + fused BN partial sums ----
    conv_kernel = functools.partial(
        _conv_bn_stats_kernel,
        n_kh=KH, n_kw=KW, tile_h=tile_h, w_out=W_out, c_in=C_in)

    y_flat, stats = pl.pallas_call(
        conv_kernel,
        out_shape=(
            jax.ShapeDtypeStruct((M, C_pad), jnp.float32),
            jax.ShapeDtypeStruct((num_blocks, 8, C_pad), jnp.float32),
        ),
        grid_spec=pltpu.PrefetchScalarGridSpec(
            num_scalar_prefetch=0,
            grid=(N, num_hb),
            in_specs=[
                # whole padded image of batch element n, resident across row blocks
                pl.BlockSpec((1, Hp, Wp, C_in), lambda n, hb: (n, 0, 0, 0)),
                # all per-tap weights, resident across the whole grid
                pl.BlockSpec((KH * KW, C_in, C_pad), lambda n, hb: (0, 0, 0)),
            ],
            out_specs=[
                pl.BlockSpec((tile_rows, C_pad), lambda n, hb: (n * num_hb + hb, 0)),
                pl.BlockSpec((1, 8, C_pad), lambda n, hb: (n * num_hb + hb, 0, 0)),
            ],
        ),
        compiler_params=pltpu.CompilerParams(
            dimension_semantics=("parallel", "parallel"),
        ),
    )(xp, w)

    # ---- tiny glue: finalize batch stats, fold BN affine into (scale, shift) ----
    tot = jnp.sum(stats[:, 0, :], axis=0)                       # (C_pad,)
    tot_sq = jnp.sum(stats[:, 1, :], axis=0)                    # (C_pad,)
    mean = tot / M
    var = jnp.maximum(tot_sq / M - mean * mean, 0.0)            # biased var, clamp fp noise
    inv_std = jax.lax.rsqrt(var + eps)
    gamma_pad = jnp.pad(gamma.astype(jnp.float32), (0, C_pad - C_out))
    beta_pad = jnp.pad(beta.astype(jnp.float32), (0, C_pad - C_out))
    scale = (gamma_pad * inv_std).reshape(1, C_pad)
    shift = (beta_pad - mean * gamma_pad * inv_std).reshape(1, C_pad)

    # ---- Pallas pass 2: tiled normalize + ReLU (parallel, lane-dense stores) ----
    out_flat = pl.pallas_call(
        _bn_relu_kernel,
        out_shape=jax.ShapeDtypeStruct((M, C_pad), jnp.float32),
        grid_spec=pltpu.PrefetchScalarGridSpec(
            num_scalar_prefetch=0,
            grid=(num_blocks,),
            in_specs=[
                pl.BlockSpec((tile_rows, C_pad), lambda i: (i, 0)),
                pl.BlockSpec((1, C_pad), lambda i: (0, 0)),
                pl.BlockSpec((1, C_pad), lambda i: (0, 0)),
            ],
            out_specs=pl.BlockSpec((tile_rows, C_pad), lambda i: (i, 0)),
        ),
        compiler_params=pltpu.CompilerParams(
            dimension_semantics=("parallel",),
        ),
    )(y_flat, scale, shift)

    # ---- glue: drop channel padding, back to NCHW ----
    out = out_flat.reshape(N, H_out, W_out, C_pad)[..., :C_out]
    return jnp.transpose(out, (0, 3, 1, 2))


# ------------------------------- reference ----------------------------------


def basic_conv2d_ref(x, w, b, gamma, beta, *, padding=1, eps=1e-5,
                     compute_dtype=jnp.float32):
    y = jax.lax.conv_general_dilated(
        x.astype(compute_dtype), w.astype(compute_dtype),
        window_strides=(1, 1),
        padding=((padding, padding), (padding, padding)),
        dimension_numbers=("NCHW", "OIHW", "NCHW"),
        preferred_element_type=jnp.float32,
    ) + b.reshape(1, -1, 1, 1).astype(jnp.float32)
    mean = jnp.mean(y, axis=(0, 2, 3), keepdims=True)
    var = jnp.mean((y - mean) ** 2, axis=(0, 2, 3), keepdims=True)
    normed = (y - mean) * jax.lax.rsqrt(var + eps)
    normed = normed * gamma.reshape(1, -1, 1, 1) + beta.reshape(1, -1, 1, 1)
    return jnp.maximum(normed, 0.0)


# --------------------------------- main --------------------------------------


if __name__ == "__main__":
    # BasicConv2d(in_channels=4, out_channels=8, kernel_size=3, padding=1)
    N, C_in, H, W = 2, 4, 16, 16
    C_out, K = 8, 3

    key = jax.random.PRNGKey(0)
    kx, kw, kb, kg, kbt = jax.random.split(key, 5)

    x = jax.random.normal(kx, (N, C_in, H, W), dtype=jnp.float32)
    # deterministic synthetic parameters (not a checkpoint load)
    conv_w = 0.1 * jax.random.normal(kw, (C_out, C_in, K, K), dtype=jnp.float32)
    conv_b = 0.05 * jax.random.normal(kb, (C_out,), dtype=jnp.float32)
    bn_gamma = 1.0 + 0.1 * jax.random.normal(kg, (C_out,), dtype=jnp.float32)
    bn_beta = 0.05 * jax.random.normal(kbt, (C_out,), dtype=jnp.float32)

    # exact-precision path (f32 MXU inputs) vs f32 reference
    out_f32 = jax.block_until_ready(
        basic_conv2d(x, conv_w, conv_b, bn_gamma, bn_beta, padding=1,
                     compute_dtype=jnp.float32))
    ref_f32 = basic_conv2d_ref(x, conv_w, conv_b, bn_gamma, bn_beta, padding=1)
    np.testing.assert_allclose(np.asarray(out_f32), np.asarray(ref_f32),
                               rtol=1e-4, atol=1e-4)

    # default bf16 MXU path (v6e/v7x guidance) vs a bf16-input reference
    out_bf16 = jax.block_until_ready(
        basic_conv2d(x, conv_w, conv_b, bn_gamma, bn_beta, padding=1))
    ref_bf16 = basic_conv2d_ref(x, conv_w, conv_b, bn_gamma, bn_beta, padding=1,
                                compute_dtype=jnp.bfloat16)
    np.testing.assert_allclose(np.asarray(out_bf16), np.asarray(ref_bf16),
                               rtol=2e-2, atol=2e-2)

    print("KERNEL_OK")
</pallas_src>

<mosaic_0001>
module attributes {stable_mosaic.version = 11 : i64} {
  func.func @_conv_bn_stats_kernel(%arg0: i32, %arg1: i32, %arg2: memref<1x18x18x4xf32, #tpu.memory_space<vmem>>, %arg3: memref<9x4x128xf32, #tpu.memory_space<vmem>>, %arg4: memref<256x128xf32, #tpu.memory_space<vmem>>, %arg5: memref<1x8x128xf32, #tpu.memory_space<vmem>>) attributes {dimension_semantics = [#tpu.dimension_semantics<parallel>, #tpu.dimension_semantics<parallel>], iteration_bounds = array<i64: 2, 1>, scalar_prefetch = 0 : i64, scratch_operands = 0 : i64, tpu.core_type = #tpu.core_type<tc>, window_params = [{transform_indices = @transform_0, window_bounds = array<i64: 1, 18, 18, 4>}, {pipeline_mode = #tpu.pipeline_mode<synchronous>, transform_indices = @transform_1, window_bounds = array<i64: 9, 4, 128>}, {transform_indices = @transform_2, window_bounds = array<i64: 256, 128>}, {transform_indices = @transform_3, window_bounds = array<i64: 1, 8, 128>}]} {
    %c16_i32 = arith.constant 16 : i32
    %0 = arith.muli %arg1, %c16_i32 : i32
    %cst = arith.constant 0.000000e+00 : f32
    %1 = vector.broadcast %cst : f32 to vector<256x128xf32>
    %c0_i32 = arith.constant 0 : i32
    %2 = arith.addi %0, %c0_i32 : i32
    %c0 = arith.constant 0 : index
    %3 = arith.index_cast %2 : i32 to index
    %c0_0 = arith.constant 0 : index
    %c0_1 = arith.constant 0 : index
    %4 = vector.load %arg2[%c0, %3, %c0_0, %c0_1] : memref<1x18x18x4xf32, #tpu.memory_space<vmem>>, vector<1x16x16x4xf32>
    %5 = vector.shape_cast %4 : vector<1x16x16x4xf32> to vector<16x16x4xf32>
    %6 = vector.shape_cast %5 : vector<16x16x4xf32> to vector<256x4xf32>
    %c0_2 = arith.constant 0 : index
    %c0_3 = arith.constant 0 : index
    %c0_4 = arith.constant 0 : index
    %7 = vector.load %arg3[%c0_2, %c0_3, %c0_4] : memref<9x4x128xf32, #tpu.memory_space<vmem>>, vector<1x4x128xf32>
    %8 = vector.shape_cast %7 : vector<1x4x128xf32> to vector<4x128xf32>
    %cst_5 = arith.constant dense<0.000000e+00> : vector<256x128xf32>
    %9 = tpu.matmul %6, %8, %cst_5 {dimension_numbers = #tpu.dot_dimension_numbers<[1], [0], [0], [1], [0, 0, 1, 1], [], []>} : vector<256x4xf32>, vector<4x128xf32>, vector<256x128xf32> -> vector<256x128xf32>
    %10 = arith.addf %1, %9 : vector<256x128xf32>
    %c0_i32_6 = arith.constant 0 : i32
    %11 = arith.addi %0, %c0_i32_6 : i32
    %c0_7 = arith.constant 0 : index
    %12 = arith.index_cast %11 : i32 to index
    %c1 = arith.constant 1 : index
    %c0_8 = arith.constant 0 : index
    %13 = vector.load %arg2[%c0_7, %12, %c1, %c0_8] : memref<1x18x18x4xf32, #tpu.memory_space<vmem>>, vector<1x16x16x4xf32>
    %14 = vector.shape_cast %13 : vector<1x16x16x4xf32> to vector<16x16x4xf32>
    %15 = vector.shape_cast %14 : vector<16x16x4xf32> to vector<256x4xf32>
    %c1_9 = arith.constant 1 : index
    %c0_10 = arith.constant 0 : index
    %c0_11 = arith.constant 0 : index
    %16 = vector.load %arg3[%c1_9, %c0_10, %c0_11] : memref<9x4x128xf32, #tpu.memory_space<vmem>>, vector<1x4x128xf32>
    %17 = vector.shape_cast %16 : vector<1x4x128xf32> to vector<4x128xf32>
    %cst_12 = arith.constant dense<0.000000e+00> : vector<256x128xf32>
    %18 = tpu.matmul %15, %17, %cst_12 {dimension_numbers = #tpu.dot_dimension_numbers<[1], [0], [0], [1], [0, 0, 1, 1], [], []>} : vector<256x4xf32>, vector<4x128xf32>, vector<256x128xf32> -> vector<256x128xf32>
    %19 = arith.addf %10, %18 : vector<256x128xf32>
    %c0_i32_13 = arith.constant 0 : i32
    %20 = arith.addi %0, %c0_i32_13 : i32
    %c0_14 = arith.constant 0 : index
    %21 = arith.index_cast %20 : i32 to index
    %c2 = arith.constant 2 : index
    %c0_15 = arith.constant 0 : index
    %22 = vector.load %arg2[%c0_14, %21, %c2, %c0_15] : memref<1x18x18x4xf32, #tpu.memory_space<vmem>>, vector<1x16x16x4xf32>
    %23 = vector.shape_cast %22 : vector<1x16x16x4xf32> to vector<16x16x4xf32>
    %24 = vector.shape_cast %23 : vector<16x16x4xf32> to vector<256x4xf32>
    %c2_16 = arith.constant 2 : index
    %c0_17 = arith.constant 0 : index
    %c0_18 = arith.constant 0 : index
    %25 = vector.load %arg3[%c2_16, %c0_17, %c0_18] : memref<9x4x128xf32, #tpu.memory_space<vmem>>, vector<1x4x128xf32>
    %26 = vector.shape_cast %25 : vector<1x4x128xf32> to vector<4x128xf32>
    %cst_19 = arith.constant dense<0.000000e+00> : vector<256x128xf32>
    %27 = tpu.matmul %24, %26, %cst_19 {dimension_numbers = #tpu.dot_dimension_numbers<[1], [0], [0], [1], [0, 0, 1, 1], [], []>} : vector<256x4xf32>, vector<4x128xf32>, vector<256x128xf32> -> vector<256x128xf32>
    %28 = arith.addf %19, %27 : vector<256x128xf32>
    %c1_i32 = arith.constant 1 : i32
    %29 = arith.addi %0, %c1_i32 : i32
    %c0_20 = arith.constant 0 : index
    %30 = arith.index_cast %29 : i32 to index
    %c0_21 = arith.constant 0 : index
    %c0_22 = arith.constant 0 : index
    %31 = vector.load %arg2[%c0_20, %30, %c0_21, %c0_22] : memref<1x18x18x4xf32, #tpu.memory_space<vmem>>, vector<1x16x16x4xf32>
    %32 = vector.shape_cast %31 : vector<1x16x16x4xf32> to vector<16x16x4xf32>
    %33 = vector.shape_cast %32 : vector<16x16x4xf32> to vector<256x4xf32>
    %c3 = arith.constant 3 : index
    %c0_23 = arith.constant 0 : index
    %c0_24 = arith.constant 0 : index
    %34 = vector.load %arg3[%c3, %c0_23, %c0_24] : memref<9x4x128xf32, #tpu.memory_space<vmem>>, vector<1x4x128xf32>
    %35 = vector.shape_cast %34 : vector<1x4x128xf32> to vector<4x128xf32>
    %cst_25 = arith.constant dense<0.000000e+00> : vector<256x128xf32>
    %36 = tpu.matmul %33, %35, %cst_25 {dimension_numbers = #tpu.dot_dimension_numbers<[1], [0], [0], [1], [0, 0, 1, 1], [], []>} : vector<256x4xf32>, vector<4x128xf32>, vector<256x128xf32> -> vector<256x128xf32>
    %37 = arith.addf %28, %36 : vector<256x128xf32>
    %c1_i32_26 = arith.constant 1 : i32
    %38 = arith.addi %0, %c1_i32_26 : i32
    %c0_27 = arith.constant 0 : index
    %39 = arith.index_cast %38 : i32 to index
    %c1_28 = arith.constant 1 : index
    %c0_29 = arith.constant 0 : index
    %40 = vector.load %arg2[%c0_27, %39, %c1_28, %c0_29] : memref<1x18x18x4xf32, #tpu.memory_space<vmem>>, vector<1x16x16x4xf32>
    %41 = vector.shape_cast %40 : vector<1x16x16x4xf32> to vector<16x16x4xf32>
    %42 = vector.shape_cast %41 : vector<16x16x4xf32> to vector<256x4xf32>
    %c4 = arith.constant 4 : index
    %c0_30 = arith.constant 0 : index
    %c0_31 = arith.constant 0 : index
    %43 = vector.load %arg3[%c4, %c0_30, %c0_31] : memref<9x4x128xf32, #tpu.memory_space<vmem>>, vector<1x4x128xf32>
    %44 = vector.shape_cast %43 : vector<1x4x128xf32> to vector<4x128xf32>
    %cst_32 = arith.constant dense<0.000000e+00> : vector<256x128xf32>
    %45 = tpu.matmul %42, %44, %cst_32 {dimension_numbers = #tpu.dot_dimension_numbers<[1], [0], [0], [1], [0, 0, 1, 1], [], []>} : vector<256x4xf32>, vector<4x128xf32>, vector<256x128xf32> -> vector<256x128xf32>
    %46 = arith.addf %37, %45 : vector<256x128xf32>
    %c1_i32_33 = arith.constant 1 : i32
    %47 = arith.addi %0, %c1_i32_33 : i32
    %c0_34 = arith.constant 0 : index
    %48 = arith.index_cast %47 : i32 to index
    %c2_35 = arith.constant 2 : index
    %c0_36 = arith.constant 0 : index
    %49 = vector.load %arg2[%c0_34, %48, %c2_35, %c0_36] : memref<1x18x18x4xf32, #tpu.memory_space<vmem>>, vector<1x16x16x4xf32>
    %50 = vector.shape_cast %49 : vector<1x16x16x4xf32> to vector<16x16x4xf32>
    %51 = vector.shape_cast %50 : vector<16x16x4xf32> to vector<256x4xf32>
    %c5 = arith.constant 5 : index
    %c0_37 = arith.constant 0 : index
    %c0_38 = arith.constant 0 : index
    %52 = vector.load %arg3[%c5, %c0_37, %c0_38] : memref<9x4x128xf32, #tpu.memory_space<vmem>>, vector<1x4x128xf32>
    %53 = vector.shape_cast %52 : vector<1x4x128xf32> to vector<4x128xf32>
    %cst_39 = arith.constant dense<0.000000e+00> : vector<256x128xf32>
    %54 = tpu.matmul %51, %53, %cst_39 {dimension_numbers = #tpu.dot_dimension_numbers<[1], [0], [0], [1], [0, 0, 1, 1], [], []>} : vector<256x4xf32>, vector<4x128xf32>, vector<256x128xf32> -> vector<256x128xf32>
    %55 = arith.addf %46, %54 : vector<256x128xf32>
    %c2_i32 = arith.constant 2 : i32
    %56 = arith.addi %0, %c2_i32 : i32
    %c0_40 = arith.constant 0 : index
    %57 = arith.index_cast %56 : i32 to index
    %c0_41 = arith.constant 0 : index
    %c0_42 = arith.constant 0 : index
    %58 = vector.load %arg2[%c0_40, %57, %c0_41, %c0_42] : memref<1x18x18x4xf32, #tpu.memory_space<vmem>>, vector<1x16x16x4xf32>
    %59 = vector.shape_cast %58 : vector<1x16x16x4xf32> to vector<16x16x4xf32>
    %60 = vector.shape_cast %59 : vector<16x16x4xf32> to vector<256x4xf32>
    %c6 = arith.constant 6 : index
    %c0_43 = arith.constant 0 : index
    %c0_44 = arith.constant 0 : index
    %61 = vector.load %arg3[%c6, %c0_43, %c0_44] : memref<9x4x128xf32, #tpu.memory_space<vmem>>, vector<1x4x128xf32>
    %62 = vector.shape_cast %61 : vector<1x4x128xf32> to vector<4x128xf32>
    %cst_45 = arith.constant dense<0.000000e+00> : vector<256x128xf32>
    %63 = tpu.matmul %60, %62, %cst_45 {dimension_numbers = #tpu.dot_dimension_numbers<[1], [0], [0], [1], [0, 0, 1, 1], [], []>} : vector<256x4xf32>, vector<4x128xf32>, vector<256x128xf32> -> vector<256x128xf32>
    %64 = arith.addf %55, %63 : vector<256x128xf32>
    %c2_i32_46 = arith.constant 2 : i32
    %65 = arith.addi %0, %c2_i32_46 : i32
    %c0_47 = arith.constant 0 : index
    %66 = arith.index_cast %65 : i32 to index
    %c1_48 = arith.constant 1 : index
    %c0_49 = arith.constant 0 : index
    %67 = vector.load %arg2[%c0_47, %66, %c1_48, %c0_49] : memref<1x18x18x4xf32, #tpu.memory_space<vmem>>, vector<1x16x16x4xf32>
    %68 = vector.shape_cast %67 : vector<1x16x16x4xf32> to vector<16x16x4xf32>
    %69 = vector.shape_cast %68 : vector<16x16x4xf32> to vector<256x4xf32>
    %c7 = arith.constant 7 : index
    %c0_50 = arith.constant 0 : index
    %c0_51 = arith.constant 0 : index
    %70 = vector.load %arg3[%c7, %c0_50, %c0_51] : memref<9x4x128xf32, #tpu.memory_space<vmem>>, vector<1x4x128xf32>
    %71 = vector.shape_cast %70 : vector<1x4x128xf32> to vector<4x128xf32>
    %cst_52 = arith.constant dense<0.000000e+00> : vector<256x128xf32>
    %72 = tpu.matmul %69, %71, %cst_52 {dimension_numbers = #tpu.dot_dimension_numbers<[1], [0], [0], [1], [0, 0, 1, 1], [], []>} : vector<256x4xf32>, vector<4x128xf32>, vector<256x128xf32> -> vector<256x128xf32>
    %73 = arith.addf %64, %72 : vector<256x128xf32>
    %c2_i32_53 = arith.constant 2 : i32
    %74 = arith.addi %0, %c2_i32_53 : i32
    %c0_54 = arith.constant 0 : index
    %75 = arith.index_cast %74 : i32 to index
    %c2_55 = arith.constant 2 : index
    %c0_56 = arith.constant 0 : index
    %76 = vector.load %arg2[%c0_54, %75, %c2_55, %c0_56] : memref<1x18x18x4xf32, #tpu.memory_space<vmem>>, vector<1x16x16x4xf32>
    %77 = vector.shape_cast %76 : vector<1x16x16x4xf32> to vector<16x16x4xf32>
    %78 = vector.shape_cast %77 : vector<16x16x4xf32> to vector<256x4xf32>
    %c8 = arith.constant 8 : index
    %c0_57 = arith.constant 0 : index
    %c0_58 = arith.constant 0 : index
    %79 = vector.load %arg3[%c8, %c0_57, %c0_58] : memref<9x4x128xf32, #tpu.memory_space<vmem>>, vector<1x4x128xf32>
    %80 = vector.shape_cast %79 : vector<1x4x128xf32> to vector<4x128xf32>
    %cst_59 = arith.constant dense<0.000000e+00> : vector<256x128xf32>
    %81 = tpu.matmul %78, %80, %cst_59 {dimension_numbers = #tpu.dot_dimension_numbers<[1], [0], [0], [1], [0, 0, 1, 1], [], []>} : vector<256x4xf32>, vector<4x128xf32>, vector<256x128xf32> -> vector<256x128xf32>
    %82 = arith.addf %73, %81 : vector<256x128xf32>
    %c0_60 = arith.constant 0 : index
    %c0_61 = arith.constant 0 : index
    %83 = vector.load %arg4[%c0_60, %c0_61] : memref<256x128xf32, #tpu.memory_space<vmem>>, vector<256x128xf32>
    tpu.vector_store %arg4[%c0_60, %c0_61], %82 {strides = array<i32>} : memref<256x128xf32, #tpu.memory_space<vmem>>, vector<256x128xf32>,
    %cst_62 = arith.constant dense<0.000000e+00> : vector<128xf32>
    %84 = vector.multi_reduction <add>, %82, %cst_62 [0] : vector<256x128xf32> to vector<128xf32>
    %85 = vector.shape_cast %84 : vector<128xf32> to vector<1x128xf32>
    %c0_63 = arith.constant 0 : index
    %c0_64 = arith.constant 0 : index
    %c0_65 = arith.constant 0 : index
    %86 = vector.load %arg5[%c0_63, %c0_64, %c0_65] : memref<1x8x128xf32, #tpu.memory_space<vmem>>, vector<1x1x128xf32>
    %87 = vector.shape_cast %86 : vector<1x1x128xf32> to vector<1x128xf32>
    %88 = vector.shape_cast %85 : vector<1x128xf32> to vector<1x1x128xf32>
    tpu.vector_store %arg5[%c0_63, %c0_64, %c0_65], %88 {strides = array<i32>} : memref<1x8x128xf32, #tpu.memory_space<vmem>>, vector<1x1x128xf32>,
    %89 = arith.mulf %82, %82 : vector<256x128xf32>
    %cst_66 = arith.constant dense<0.000000e+00> : vector<128xf32>
    %90 = vector.multi_reduction <add>, %89, %cst_66 [0] : vector<256x128xf32> to vector<128xf32>
    %91 = vector.shape_cast %90 : vector<128xf32> to vector<1x128xf32>
    %c0_67 = arith.constant 0 : index
    %c1_68 = arith.constant 1 : index
    %c0_69 = arith.constant 0 : index
    %92 = vector.load %arg5[%c0_67, %c1_68, %c0_69] : memref<1x8x128xf32, #tpu.memory_space<vmem>>, vector<1x1x128xf32>
    %93 = vector.shape_cast %92 : vector<1x1x128xf32> to vector<1x128xf32>
    %94 = vector.shape_cast %91 : vector<1x128xf32> to vector<1x1x128xf32>
    tpu.vector_store %arg5[%c0_67, %c1_68, %c0_69], %94 {strides = array<i32>} : memref<1x8x128xf32, #tpu.memory_space<vmem>>, vector<1x1x128xf32>,
    %cst_70 = arith.constant 0.000000e+00 : f32
    %95 = vector.broadcast %cst_70 : f32 to vector<6x128xf32>
    %c0_71 = arith.constant 0 : index
    %c2_72 = arith.constant 2 : index
    %c0_73 = arith.constant 0 : index
    %96 = vector.load %arg5[%c0_71, %c2_72, %c0_73] : memref<1x8x128xf32, #tpu.memory_space<vmem>>, vector<1x6x128xf32>
    %97 = vector.shape_cast %96 : vector<1x6x128xf32> to vector<6x128xf32>
    %98 = vector.shape_cast %95 : vector<6x128xf32> to vector<1x6x128xf32>
    tpu.vector_store %arg5[%c0_71, %c2_72, %c0_73], %98 {strides = array<i32>} : memref<1x8x128xf32, #tpu.memory_space<vmem>>, vector<1x6x128xf32>,
    return
  }
  func.func @transform_0(%arg0: i32, %arg1: i32) -> (i32, i32, i32, i32) {
    %c0_i32 = arith.constant 0 : i32
    %c0_i32_0 = arith.constant 0 : i32
    %c0_i32_1 = arith.constant 0 : i32
    %c0_i32_2 = arith.constant 0 : i32
    return %arg0, %c0_i32, %c0_i32_0, %c0_i32_1 : i32, i32, i32, i32
  }
  func.func @transform_1(%arg0: i32, %arg1: i32) -> (i32, i32, i32) {
    %c0_i32 = arith.constant 0 : i32
    %c0_i32_0 = arith.constant 0 : i32
    %c0_i32_1 = arith.constant 0 : i32
    %c0_i32_2 = arith.constant 0 : i32
    return %c0_i32, %c0_i32_0, %c0_i32_1 : i32, i32, i32
  }
  func.func @transform_2(%arg0: i32, %arg1: i32) -> (i32, i32) {
    %c1_i32 = arith.constant 1 : i32
    %0 = arith.muli %arg0, %c1_i32 : i32
    %1 = arith.addi %0, %arg1 : i32
    %c0_i32 = arith.constant 0 : i32
    %c0_i32_0 = arith.constant 0 : i32
    return %1, %c0_i32 : i32, i32
  }
  func.func @transform_3(%arg0: i32, %arg1: i32) -> (i32, i32, i32) {
    %c1_i32 = arith.constant 1 : i32
    %0 = arith.muli %arg0, %c1_i32 : i32
    %1 = arith.addi %0, %arg1 : i32
    %c0_i32 = arith.constant 0 : i32
    %c0_i32_0 = arith.constant 0 : i32
    %c0_i32_1 = arith.constant 0 : i32
    return %1, %c0_i32, %c0_i32_0 : i32, i32, i32
  }
}

</mosaic_0001>

<llo_original>
// kernel: tpu_custom_call.1
$region0: #{tpu_custom_call.1}
  #allocation0 [shape = 'u32[]', space=smem, size = 0x4, offset = 0x4, fixed_abs, tag = 'smem constant byte address 0x4 - core index']
  #allocation1 [shape = 'u32[144,128]{1,0:T(1,128)}', space=vmem, size = 0x12000, scoped, tag = 'internal scratch']
  %s0 = inlined_call_operand.vmem [shape: f32[2,18,18,4], index: 0, kind: input, shape index: {}]
  %s1 = inlined_call_operand.vmem [shape: f32[9,4,128], index: 1, kind: input, shape index: {}]
  %s2 = inlined_call_operand.hbm [shape: f32[512,128], index: 2, kind: output, shape index: {0}]
  %s3 = inlined_call_operand.hbm [shape: f32[2,8,128], index: 3, kind: output, shape index: {1}]
  %4 = xla_tuple %s2, %s3
  %s5 = sld [smem:[#allocation0]]
  $region49: #{tpu_custom_call.1} parent=0
    _
  %s7 = ssub.s32 1, %s5
  %s8 = scalar_select 0, %s7, %s5
  $region1: #{tpu_custom_call.1} parent=0
    #allocation2 [shape = 'u8[262144]{0}', space=vmem, size = 0x40000, scoped, tag = 'output window, operand 0']
    #allocation3 [shape = 's32[2]{0}', space=sflag, size = 0x8, scoped, tag = 'scoped memory for tpu_custom_call.1']
    #allocation4 [shape = 'u8[8192]{0}', space=vmem, size = 0x2000, scoped, tag = 'output window, operand 1']
    #allocation5 [shape = 's32[2]{0}', space=sflag, size = 0x8, scoped, tag = 'scoped memory for tpu_custom_call.1']
    %9 = vsyncpa [#allocation3], 0
    %s10 = scalar_lea.sflag [#allocation3], 1
    %11 = vsyncpa %s10, 0
    %12 = vsyncpa [#allocation5], 0
    %s13 = scalar_lea.sflag [#allocation5], 1
    %14 = vsyncpa %s13, 0
    loop: start=0, step=1, limit=4
    $region2: #{tpu_custom_call.1} parent=1 // loop_pre_header
      _
    $region3: #{tpu_custom_call.1} parent=1 // loop_header
      %s16 = sphi 0, %s20
      %p17 = scmp.ge.s32.totalorder %s16, 4
      %s23 = sphi 0, %s35
      %s24 = sphi 0, %s31
      %s25 = sphi 0, %s23
      %s26 = sphi 0, %s24
      %s27 = sphi 0, %s25
      %s28 = sphi 0, %s26
      %s38 = sphi 0, %s40
      %s41 = sphi 0, %s38
      %s42 = sphi 0, %s41
      %s58 = sphi 0, %s42
      %s62 = sphi 0, %s62
      %s64 = sphi 0, %s62
      %s65 = sphi 0, %s64
      %s79 = sphi 0, %s65
      %s87 = sphi 0, %s89
      %s90 = sphi 0, %s87
      %s91 = sphi 0, %s90
      %s107 = sphi 0, %s91
      %s115 = sphi 0, %s117
      %s118 = sphi 0, %s115
      %s119 = sphi 0, %s118
      %s135 = sphi 0, %s119
    $region4: #{tpu_custom_call.1} parent=1 // loop_header_branch
      %19 = sbr.rel (%p17) target = $region8
    $region5: #{tpu_custom_call.1} parent=1 // loop_body
      %s21 = ssub.s32 %s16, 1
      %s22 = ssub.s32 %s16, 2
      %s29 = sadd.s32 1, %s24
      %p30 = scmp.ge.s32.totalorder %s29, 1
      %s31 = scalar_select %p30, 0, %s29
      %s32 = sadd.s32 1, %s23
      %s33 = scalar_select %p30, %s32, %s23
      %p34 = scmp.ge.s32.totalorder %s33, 2
      %s35 = scalar_select %p34, 0, %s33
      %s36 = ssub.s32 %s23, %s35
      %p37 = scmp.eq.s32.totalorder %s36, 0
      %s39 = sadd.s32 %s38, 1
      %s40 = scalar_select %p37, %s38, %s39
      %p43 = pneg %p37
      %p44 = scmp.eq.s32.totalorder %s16, 1
      %p45 = por %p43, %p44
      %p46 = scmp.ne.s32.totalorder %s38, %s41
      %p47 = scmp.eq.s32.totalorder %s16, 0
      %p48 = por %p46, %p47
      %p49 = scmp.ne.s32.totalorder %s38, %s41
      %p50 = scmp.eq.s32.totalorder %s21, 1
      %p51 = por %p49, %p50
      %p52 = scmp.ne.s32.totalorder %s41, %s42
      %p53 = scmp.eq.s32.totalorder %s21, 0
      %p54 = por %p52, %p53
      %p55 = scmp.ne.s32.totalorder %s41, %s42
      %p56 = scmp.eq.s32.totalorder %s22, 1
      %p57 = por %p55, %p56
      %p59 = scmp.ne.s32.totalorder %s42, %s58
      %p60 = scmp.eq.s32.totalorder %s22, 0
      %p61 = por %p59, %p60
      %s63 = sadd.s32 %s62, 1
      %p66 = scmp.eq.s32.totalorder %s16, 1
      %p67 = scmp.ne.s32.totalorder %s62, %s64
      %p68 = scmp.eq.s32.totalorder %s16, 0
      %p69 = por %p67, %p68
      %p70 = scmp.ne.s32.totalorder %s62, %s64
      %p71 = scmp.eq.s32.totalorder %s21, 1
      %p72 = por %p70, %p71
      %p73 = scmp.ne.s32.totalorder %s64, %s65
      %p74 = scmp.eq.s32.totalorder %s21, 0
      %p75 = por %p73, %p74
      %p76 = scmp.ne.s32.totalorder %s64, %s65
      %p77 = scmp.eq.s32.totalorder %s22, 1
      %p78 = por %p76, %p77
      %p80 = scmp.ne.s32.totalorder %s65, %s79
      %p81 = scmp.eq.s32.totalorder %s22, 0
      %p82 = por %p80, %p81
      %s83 = sadd.s32 %s23, %s24
      %s84 = sadd.s32 %s35, %s31
      %s85 = ssub.s32 %s83, %s84
      %p86 = scmp.eq.s32.totalorder %s85, 0
      %s88 = sadd.s32 %s87, 1
      %s89 = scalar_select %p86, %s87, %s88
      %p92 = pneg %p86
      %p93 = scmp.eq.s32.totalorder %s16, 1
      %p94 = por %p92, %p93
      %p95 = scmp.ne.s32.totalorder %s87, %s90
      %p96 = scmp.eq.s32.totalorder %s16, 0
      %p97 = por %p95, %p96
      %p98 = scmp.ne.s32.totalorder %s87, %s90
      %p99 = scmp.eq.s32.totalorder %s21, 1
      %p100 = por %p98, %p99
      %p101 = scmp.ne.s32.totalorder %s90, %s91
      %p102 = scmp.eq.s32.totalorder %s21, 0
      %p103 = por %p101, %p102
      %p104 = scmp.ne.s32.totalorder %s90, %s91
      %p105 = scmp.eq.s32.totalorder %s22, 1
      %p106 = por %p104, %p105
      %p108 = scmp.ne.s32.totalorder %s91, %s107
      %p109 = scmp.eq.s32.totalorder %s22, 0
      %p110 = por %p108, %p109
      %s111 = sadd.s32 %s23, %s24
      %s112 = sadd.s32 %s35, %s31
      %s113 = ssub.s32 %s111, %s112
      %p114 = scmp.eq.s32.totalorder %s113, 0
      %s116 = sadd.s32 %s115, 1
      %s117 = scalar_select %p114, %s115, %s116
      %p120 = pneg %p114
      %p121 = scmp.eq.s32.totalorder %s16, 1
      %p122 = por %p120, %p121
      %p123 = scmp.ne.s32.totalorder %s115, %s118
      %p124 = scmp.eq.s32.totalorder %s16, 0
      %p125 = por %p123, %p124
      %p126 = scmp.ne.s32.totalorder %s115, %s118
      %p127 = scmp.eq.s32.totalorder %s21, 1
      %p128 = por %p126, %p127
      %p129 = scmp.ne.s32.totalorder %s118, %s119
      %p130 = scmp.eq.s32.totalorder %s21, 0
      %p131 = por %p129, %p130
      %p132 = scmp.ne.s32.totalorder %s118, %s119
      %p133 = scmp.eq.s32.totalorder %s22, 1
      %p134 = por %p132, %p133
      %p136 = scmp.ne.s32.totalorder %s119, %s135
      %p137 = scmp.eq.s32.totalorder %s22, 0
      %p138 = por %p136, %p137
      %p139 = scmp.le.s32.totalorder 1, %s16
      %p140 = scmp.lt.s32.totalorder %s16, 3
      %p141 = pnand %p139, %p140
      %p142 = pneg %p141
      // Predicated region
      $region9: #{tpu_custom_call.1} parent=5 // pred_check
        _
      $region10: #{tpu_custom_call.1} parent=5 // pred_check_branch
        %144 = sbr.rel (%p141) target = $region12
      $region11: #{tpu_custom_call.1} parent=5 // pred_region
        %s145 = ssub.s32 %s16, 1
        // Predicated region
        $region13: #{tpu_custom_call.1} parent=11 // pred_check
          %p146 = pneg %p75
        $region14: #{tpu_custom_call.1} parent=11 // pred_check_branch
          %148 = sbr.rel (%p146) target = $region16
        $region15: #{tpu_custom_call.1} parent=11 // pred_region
          _
        $region16: #{tpu_custom_call.1} parent=11 // pred_fallthru
          _
      $region12: #{tpu_custom_call.1} parent=5 // pred_fallthru
        _
      %p149 = scmp.lt.s32.totalorder %s16, 2
      // Predicated region
      $region17: #{tpu_custom_call.1} parent=5 // pred_check
        %p150 = pneg %p149
      $region18: #{tpu_custom_call.1} parent=5 // pred_check_branch
        %152 = sbr.rel (%p150) target = $region20
      $region19: #{tpu_custom_call.1} parent=5 // pred_region
        // Predicated region
        $region21: #{tpu_custom_call.1} parent=19 // pred_check
          %p153 = pneg %p48
        $region22: #{tpu_custom_call.1} parent=19 // pred_check_branch
          %155 = sbr.rel (%p153) target = $region24
        $region23: #{tpu_custom_call.1} parent=19 // pred_region
          %p156 = scmp.lt.s32.totalorder %s23, 1
          %s157 = scalar_select %p156, %s23, 1
          %s158 = smul.addr %s157, 54
          %s159 = smul.addr %s158, 8
          %s160 = scalar_lea.vmem %s0, %s159
        $region24: #{tpu_custom_call.1} parent=19 // pred_fallthru
          _
      $region20: #{tpu_custom_call.1} parent=5 // pred_fallthru
        _
      %p161 = scmp.le.s32.totalorder 1, %s16
      %p162 = scmp.lt.s32.totalorder %s16, 3
      %p163 = pnand %p161, %p162
      %p164 = pneg %p163
      // Predicated region
      $region25: #{tpu_custom_call.1} parent=5 // pred_check
        _
      $region26: #{tpu_custom_call.1} parent=5 // pred_check_branch
        %166 = sbr.rel (%p163) target = $region28
      $region27: #{tpu_custom_call.1} parent=5 // pred_region
        %s167 = ssub.s32 %s16, 1
        %p168 = scmp.lt.s32.totalorder %s25, 1
        %s169 = scalar_select %p168, %s25, 1
        %s170 = smul.addr %s169, 54
        %s171 = smul.addr %s170, 8
        %s172 = scalar_lea.vmem %s0, %s171
        %p173 = pneg %p54
        %p174 = pneg %p51
        %p175 = pneg %p75
        %p176 = pneg %p72
        %p177 = pneg %p103
        %p178 = pneg %p100
        %s179 = sand.u32 %s90, 1
        %s180 = scalar_lea.sflag [#allocation3], %s179
        %s181 = sand.u32 %s90, 1
        %s182 = smul.addr %s181, 256
        %s183 = scalar_lea.vmem [#allocation2], %s182
        %p184 = pneg %p131
        %p185 = pneg %p128
        %s186 = sand.u32 %s118, 1
        %s187 = scalar_lea.sflag [#allocation5], %s186
        %s188 = sand.u32 %s118, 1
        %s189 = smul.addr %s188, 8
        %s190 = scalar_lea.vmem [#allocation4], %s189
        %p191 = scmp.lt.s32.totalorder %s25, 1
        %s192 = scalar_select %p191, %s25, 1
        %s193 = smul.addr %s192, 54
        %s194 = smul.addr %s193, 8
        %s195 = scalar_lea.vmem %s0, %s194
        %s196 = sadd.s32 %s25, %s26
        %s197 = smul.u32 32, %s196
        %s198 = sadd.s32 %s25, %s26
        %s199 = smul.u32 %s26, 16
        %s200 = smul.u32 %s199, 24
        %s201 = scalar_lea.vmem %s195, %s200
        %v202 = vld [vmem:[%s201] sm:$0xff]
        %v203 = vld [vmem:[%s201 + $0x8] sm:$0xff]
        %v204 = vld [vmem:[%s201 + $0x18] sm:$0xff]
        %v205 = vld [vmem:[%s201 + $0x20] sm:$0xff]
        %v206 = vld [vmem:[%s201 + $0x30] sm:$0xff]
        %v207 = vld [vmem:[%s201 + $0x38] sm:$0xff]
        %v208 = vld [vmem:[%s201 + $0x48] sm:$0xff]
        %v209 = vld [vmem:[%s201 + $0x50] sm:$0xff]
        %v210 = vld [vmem:[%s201 + $0x60] sm:$0xff]
        %v211 = vld [vmem:[%s201 + $0x68] sm:$0xff]
        %v212 = vld [vmem:[%s201 + $0x78] sm:$0xff]
        %v213 = vld [vmem:[%s201 + $0x80] sm:$0xff]
        %v214 = vld [vmem:[%s201 + $0x90] sm:$0xff]
        %v215 = vld [vmem:[%s201 + $0x98] sm:$0xff]
        %v216 = vld [vmem:[%s201 + $0xa8] sm:$0xff]
        %v217 = vld [vmem:[%s201 + $0xb0] sm:$0xff]
        %v218 = vld [vmem:[%s201 + $0xc0] sm:$0xff]
        %v219 = vld [vmem:[%s201 + $0xc8] sm:$0xff]
        %v220 = vld [vmem:[%s201 + $0xd8] sm:$0xff]
        %v221 = vld [vmem:[%s201 + $0xe0] sm:$0xff]
        %v222 = vld [vmem:[%s201 + $0xf0] sm:$0xff]
        %v223 = vld [vmem:[%s201 + $0xf8] sm:$0xff]
        %v224 = vld [vmem:[%s201 + $0x108] sm:$0xff]
        %v225 = vld [vmem:[%s201 + $0x110] sm:$0xff]
        %v226 = vld [vmem:[%s201 + $0x120] sm:$0xff]
        %v227 = vld [vmem:[%s201 + $0x128] sm:$0xff]
        %v228 = vld [vmem:[%s201 + $0x138] sm:$0xff]
        %v229 = vld [vmem:[%s201 + $0x140] sm:$0xff]
        %v230 = vld [vmem:[%s201 + $0x150] sm:$0xff]
        %v231 = vld [vmem:[%s201 + $0x158] sm:$0xff]
        %v232 = vld [vmem:[%s201 + $0x168] sm:$0xff]
        %v233 = vld [vmem:[%s201 + $0x170] sm:$0xff]
        %v234 = vld [vmem:[%s1] sm:$0xf]
        %v235 = vld [vmem:[%s201 + $0x1] sm:$0xff]
        %v236 = vld [vmem:[%s201 + $0x9] sm:$0xff]
        %v237 = vld [vmem:[%s201 + $0x19] sm:$0xff]
        %v238 = vld [vmem:[%s201 + $0x21] sm:$0xff]
        %v239 = vld [vmem:[%s201 + $0x31] sm:$0xff]
        %v240 = vld [vmem:[%s201 + $0x39] sm:$0xff]
        %v241 = vld [vmem:[%s201 + $0x49] sm:$0xff]
        %v242 = vld [vmem:[%s201 + $0x51] sm:$0xff]
        %v243 = vld [vmem:[%s201 + $0x61] sm:$0xff]
        %v244 = vld [vmem:[%s201 + $0x69] sm:$0xff]
        %v245 = vld [vmem:[%s201 + $0x79] sm:$0xff]
        %v246 = vld [vmem:[%s201 + $0x81] sm:$0xff]
        %v247 = vld [vmem:[%s201 + $0x91] sm:$0xff]
        %v248 = vld [vmem:[%s201 + $0x99] sm:$0xff]
        %v249 = vld [vmem:[%s201 + $0xa9] sm:$0xff]
        %v250 = vld [vmem:[%s201 + $0xb1] sm:$0xff]
        %v251 = vld [vmem:[%s201 + $0xc1] sm:$0xff]
        %v252 = vld [vmem:[%s201 + $0xc9] sm:$0xff]
        %v253 = vld [vmem:[%s201 + $0xd9] sm:$0xff]
        %v254 = vld [vmem:[%s201 + $0xe1] sm:$0xff]
        %v255 = vld [vmem:[%s201 + $0xf1] sm:$0xff]
        %v256 = vld [vmem:[%s201 + $0xf9] sm:$0xff]
        %v257 = vld [vmem:[%s201 + $0x109] sm:$0xff]
        %v258 = vld [vmem:[%s201 + $0x111] sm:$0xff]
        %v259 = vld [vmem:[%s201 + $0x121] sm:$0xff]
        %v260 = vld [vmem:[%s201 + $0x129] sm:$0xff]
        %v261 = vld [vmem:[%s201 + $0x139] sm:$0xff]
        %v262 = vld [vmem:[%s201 + $0x141] sm:$0xff]
        %v263 = vld [vmem:[%s201 + $0x151] sm:$0xff]
        %v264 = vld [vmem:[%s201 + $0x159] sm:$0xff]
        %v265 = vld [vmem:[%s201 + $0x169] sm:$0xff]
        %v266 = vld [vmem:[%s201 + $0x171] sm:$0xff]
        %s267 = scalar_lea.vmem %s1, 4
        %v268 = vld [vmem:[%s267] sm:$0xf]
        %vm269 = vcmask 31744
        %v271 = vsel %vm269, %v235, 0
        %v274 = vsel %vm269, %v236, 0
        %v277 = vsel %vm269, %v237, 0
        %v280 = vsel %vm269, %v238, 0
        %v283 = vsel %vm269, %v239, 0
        %v286 = vsel %vm269, %v240, 0
        %v289 = vsel %vm269, %v241, 0
        %v292 = vsel %vm269, %v242, 0
        %v295 = vsel %vm269, %v243, 0
        %v298 = vsel %vm269, %v244, 0
        %v301 = vsel %vm269, %v245, 0
        %v304 = vsel %vm269, %v246, 0
        %v307 = vsel %vm269, %v247, 0
        %v310 = vsel %vm269, %v248, 0
        %v313 = vsel %vm269, %v249, 0
        %v316 = vsel %vm269, %v250, 0
        %v319 = vsel %vm269, %v251, 0
        %v322 = vsel %vm269, %v252, 0
        %v325 = vsel %vm269, %v253, 0
        %v328 = vsel %vm269, %v254, 0
        %v331 = vsel %vm269, %v255, 0
        %v334 = vsel %vm269, %v256, 0
        %v337 = vsel %vm269, %v257, 0
        %v340 = vsel %vm269, %v258, 0
        %v343 = vsel %vm269, %v259, 0
        %v346 = vsel %vm269, %v260, 0
        %v349 = vsel %vm269, %v261, 0
        %v352 = vsel %vm269, %v262, 0
        %v355 = vsel %vm269, %v263, 0
        %v358 = vsel %vm269, %v264, 0
        %v361 = vsel %vm269, %v265, 0
        %v364 = vsel %vm269, %v266, 0
        %vm366 = vcmask 1043456
        %v368 = vsel %vm366, %v268, 0
        %370 = vmatprep.subr.mxu0 0.0
        %371 = vmatpush1.msra.mxu0 %v368
        %372 = vmatprep.subr.mxu0 0.0
        %373 = vmatpush1.msra.mxu0 0.0
        %374 = vmatprep.subr.mxu0 0.0
        %375 = vmatpush1.msra.mxu0 0.0
        %376 = vmatprep.subr.mxu0 0.0
        %377 = vmatpush1.msra.mxu0 0.0
        %378 = vmatprep.subr.mxu0 0.0
        %379 = vmatpush1.msra.mxu0 0.0
        %380 = vmatprep.subr.mxu0 0.0
        %381 = vmatpush1.msra.mxu0 0.0
        %382 = vmatprep.subr.mxu0 0.0
        %383 = vmatpush1.msra.mxu0 0.0
        %384 = vmatprep.subr.mxu0 0.0
        %385 = vmatpush1.msra.mxu0 0.0
        %386 = vmatprep.subr.mxu0 0.0
        %387 = vmatpush1.msra.mxu0 0.0
        %388 = vmatprep.subr.mxu0 0.0
        %389 = vmatpush1.msra.mxu0 0.0
        %390 = vmatprep.subr.mxu0 0.0
        %391 = vmatpush1.msra.mxu0 0.0
        %392 = vmatprep.subr.mxu0 0.0
        %393 = vmatpush1.msra.mxu0 0.0
        %394 = vmatprep.subr.mxu0 0.0
        %395 = vmatpush1.msra.mxu0 0.0
        %396 = vmatprep.subr.mxu0 0.0
        %397 = vmatpush1.msra.mxu0 0.0
        %398 = vmatprep.subr.mxu0 0.0
        %399 = vmatpush1.msra.mxu0 0.0
        %400 = vmatprep.subr.mxu0 0.0
        %401 = vmatpush1.msra.mxu0 0.0
        %402 = vmatprep.subr.mxu0 0.0
        %403 = vmatpush1.msra.mxu0 0.0
        %404 = vmatprep.subr.mxu0 0.0
        %405 = vmatpush1.msra.mxu0 0.0
        %406 = vmatprep.subr.mxu0 0.0
        %407 = vmatpush1.msra.mxu0 0.0
        %408 = vmatprep.subr.mxu0 0.0
        %409 = vmatpush1.msra.mxu0 0.0
        %410 = vmatprep.subr.mxu0 0.0
        %411 = vmatpush1.msra.mxu0 0.0
        %412 = vmatprep.subr.mxu0 0.0
        %413 = vmatpush1.msra.mxu0 0.0
        %414 = vmatprep.subr.mxu0 0.0
        %415 = vmatpush1.msra.mxu0 0.0
        %416 = vmatprep.subr.mxu0 0.0
        %417 = vmatpush1.msra.mxu0 0.0
        %418 = vmatprep.subr.mxu0 0.0
        %419 = vmatpush1.msra.mxu0 0.0
        %420 = vmatprep.subr.mxu0 0.0
        %421 = vmatpush1.msra.mxu0 0.0
        %422 = vmatprep.subr.mxu0 0.0
        %423 = vmatpush1.msra.mxu0 0.0
        %424 = vmatprep.subr.mxu0 0.0
        %425 = vmatpush1.msra.mxu0 0.0
        %426 = vmatprep.subr.mxu0 0.0
        %427 = vmatpush1.msra.mxu0 0.0
        %428 = vmatprep.subr.mxu0 0.0
        %429 = vmatpush1.msra.mxu0 0.0
        %430 = vmatprep.subr.mxu0 0.0
        %431 = vmatpush1.msra.mxu0 0.0
        %432 = vmatprep.subr.mxu0 0.0
        %433 = vmatpush1.msra.mxu0 0.0
        %434 = vmatprep.mubr.f32.mxu0 0.0
        %435 = vmatmul.mubr.f32.gmra.mrb[0].mxu0 %v271
        %v436 = vpop.f32.mrb[0].mxu0
        %v437 = vadd.f32 0.0, %v436
        %v438 = vpop.f32.mrb[0].mxu0
        %439 = vmatprep.mubr.f32.mxu0 0.0
        %440 = vmatmul.mubr.f32.gmra.mrb[0].mxu0 %v274
        %v441 = vpop.f32.mrb[0].mxu0
        %v442 = vadd.f32 0.0, %v441
        %v443 = vpop.f32.mrb[0].mxu0
        %444 = vmatprep.mubr.f32.mxu0 0.0
        %445 = vmatmul.mubr.f32.gmra.mrb[0].mxu0 %v277
        %v446 = vpop.f32.mrb[0].mxu0
        %v447 = vadd.f32 0.0, %v446
        %v448 = vpop.f32.mrb[0].mxu0
        %449 = vmatprep.mubr.f32.mxu0 0.0
        %450 = vmatmul.mubr.f32.gmra.mrb[0].mxu0 %v280
        %v451 = vpop.f32.mrb[0].mxu0
        %v452 = vadd.f32 0.0, %v451
        %v453 = vpop.f32.mrb[0].mxu0
        %454 = vmatprep.mubr.f32.mxu0 0.0
        %455 = vmatmul.mubr.f32.gmra.mrb[0].mxu0 %v283
        %v456 = vpop.f32.mrb[0].mxu0
        %v457 = vadd.f32 0.0, %v456
        %v458 = vpop.f32.mrb[0].mxu0
        %459 = vmatprep.mubr.f32.mxu0 0.0
        %460 = vmatmul.mubr.f32.gmra.mrb[0].mxu0 %v286
        %v461 = vpop.f32.mrb[0].mxu0
        %v462 = vadd.f32 0.0, %v461
        %v463 = vpop.f32.mrb[0].mxu0
        %464 = vmatprep.mubr.f32.mxu0 0.0
        %465 = vmatmul.mubr.f32.gmra.mrb[0].mxu0 %v289
        %v466 = vpop.f32.mrb[0].mxu0
        %v467 = vadd.f32 0.0, %v466
        %v468 = vpop.f32.mrb[0].mxu0
        %469 = vmatprep.mubr.f32.mxu0 0.0
        %470 = vmatmul.mubr.f32.gmra.mrb[0].mxu0 %v292
        %v471 = vpop.f32.mrb[0].mxu0
        %v472 = vadd.f32 0.0, %v471
        %v473 = vpop.f32.mrb[0].mxu0
        %474 = vmatprep.mubr.f32.mxu0 0.0
        %475 = vmatmul.mubr.f32.gmra.mrb[0].mxu0 %v295
        %v476 = vpop.f32.mrb[0].mxu0
        %v477 = vadd.f32 0.0, %v476
        %v478 = vpop.f32.mrb[0].mxu0
        %479 = vmatprep.mubr.f32.mxu0 0.0
        %480 = vmatmul.mubr.f32.gmra.mrb[0].mxu0 %v298
        %v481 = vpop.f32.mrb[0].mxu0
        %v482 = vadd.f32 0.0, %v481
        %v483 = vpop.f32.mrb[0].mxu0
        %484 = vmatprep.mubr.f32.mxu0 0.0
        %485 = vmatmul.mubr.f32.gmra.mrb[0].mxu0 %v301
        %v486 = vpop.f32.mrb[0].mxu0
        %v487 = vadd.f32 0.0, %v486
        %v488 = vpop.f32.mrb[0].mxu0
        %489 = vmatprep.mubr.f32.mxu0 0.0
        %490 = vmatmul.mubr.f32.gmra.mrb[0].mxu0 %v304
        %v491 = vpop.f32.mrb[0].mxu0
        %v492 = vadd.f32 0.0, %v491
        %v493 = vpop.f32.mrb[0].mxu0
        %494 = vmatprep.mubr.f32.mxu0 0.0
        %495 = vmatmul.mubr.f32.gmra.mrb[0].mxu0 %v307
        %v496 = vpop.f32.mrb[0].mxu0
        %v497 = vadd.f32 0.0, %v496
        %v498 = vpop.f32.mrb[0].mxu0
        %499 = vmatprep.mubr.f32.mxu0 0.0
        %500 = vmatmul.mubr.f32.gmra.mrb[0].mxu0 %v310
        %v501 = vpop.f32.mrb[0].mxu0
        %v502 = vadd.f32 0.0, %v501
        %v503 = vpop.f32.mrb[0].mxu0
        %504 = vmatprep.mubr.f32.mxu0 0.0
        %505 = vmatmul.mubr.f32.gmra.mrb[0].mxu0 %v313
        %v506 = vpop.f32.mrb[0].mxu0
        %v507 = vadd.f32 0.0, %v506
        %v508 = vpop.f32.mrb[0].mxu0
        %509 = vmatprep.mubr.f32.mxu0 0.0
        %510 = vmatmul.mubr.f32.gmra.mrb[0].mxu0 %v316
        %v511 = vpop.f32.mrb[0].mxu0
        %v512 = vadd.f32 0.0, %v511
        %v513 = vpop.f32.mrb[0].mxu0
        %514 = vmatprep.mubr.f32.mxu0 0.0
        %515 = vmatmul.mubr.f32.gmra.mrb[0].mxu0 %v319
        %v516 = vpop.f32.mrb[0].mxu0
        %v517 = vadd.f32 0.0, %v516
        %v518 = vpop.f32.mrb[0].mxu0
        %519 = vmatprep.mubr.f32.mxu0 0.0
        %520 = vmatmul.mubr.f32.gmra.mrb[0].mxu0 %v322
        %v521 = vpop.f32.mrb[0].mxu0
        %v522 = vadd.f32 0.0, %v521
        %v523 = vpop.f32.mrb[0].mxu0
        %524 = vmatprep.mubr.f32.mxu0 0.0
        %525 = vmatmul.mubr.f32.gmra.mrb[0].mxu0 %v325
        %v526 = vpop.f32.mrb[0].mxu0
        %v527 = vadd.f32 0.0, %v526
        %v528 = vpop.f32.mrb[0].mxu0
        %529 = vmatprep.mubr.f32.mxu0 0.0
        %530 = vmatmul.mubr.f32.gmra.mrb[0].mxu0 %v328
        %v531 = vpop.f32.mrb[0].mxu0
        %v532 = vadd.f32 0.0, %v531
        %v533 = vpop.f32.mrb[0].mxu0
        %534 = vmatprep.mubr.f32.mxu0 0.0
        %535 = vmatmul.mubr.f32.gmra.mrb[0].mxu0 %v331
        %v536 = vpop.f32.mrb[0].mxu0
        %v537 = vadd.f32 0.0, %v536
        %v538 = vpop.f32.mrb[0].mxu0
        %539 = vmatprep.mubr.f32.mxu0 0.0
        %540 = vmatmul.mubr.f32.gmra.mrb[0].mxu0 %v334
        %v541 = vpop.f32.mrb[0].mxu0
        %v542 = vadd.f32 0.0, %v541
        %v543 = vpop.f32.mrb[0].mxu0
        %544 = vmatprep.mubr.f32.mxu0 0.0
        %545 = vmatmul.mubr.f32.gmra.mrb[0].mxu0 %v337
        %v546 = vpop.f32.mrb[0].mxu0
        %v547 = vadd.f32 0.0, %v546
        %v548 = vpop.f32.mrb[0].mxu0
        %549 = vmatprep.mubr.f32.mxu0 0.0
        %550 = vmatmul.mubr.f32.gmra.mrb[0].mxu0 %v340
        %v551 = vpop.f32.mrb[0].mxu0
        %v552 = vadd.f32 0.0, %v551
        %v553 = vpop.f32.mrb[0].mxu0
        %554 = vmatprep.mubr.f32.mxu0 0.0
        %555 = vmatmul.mubr.f32.gmra.mrb[0].mxu0 %v343
        %v556 = vpop.f32.mrb[0].mxu0
        %v557 = vadd.f32 0.0, %v556
        %v558 = vpop.f32.mrb[0].mxu0
        %559 = vmatprep.mubr.f32.mxu0 0.0
        %560 = vmatmul.mubr.f32.gmra.mrb[0].mxu0 %v346
        %v561 = vpop.f32.mrb[0].mxu0
        %v562 = vadd.f32 0.0, %v561
        %v563 = vpop.f32.mrb[0].mxu0
        %564 = vmatprep.mubr.f32.mxu0 0.0
        %565 = vmatmul.mubr.f32.gmra.mrb[0].mxu0 %v349
        %v566 = vpop.f32.mrb[0].mxu0
        %v567 = vadd.f32 0.0, %v566
        %v568 = vpop.f32.mrb[0].mxu0
        %569 = vmatprep.mubr.f32.mxu0 0.0
        %570 = vmatmul.mubr.f32.gmra.mrb[0].mxu0 %v352
        %v571 = vpop.f32.mrb[0].mxu0
        %v572 = vadd.f32 0.0, %v571
        %v573 = vpop.f32.mrb[0].mxu0
        %574 = vmatprep.mubr.f32.mxu0 0.0
        %575 = vmatmul.mubr.f32.gmra.mrb[0].mxu0 %v355
        %v576 = vpop.f32.mrb[0].mxu0
        %v577 = vadd.f32 0.0, %v576
        %v578 = vpop.f32.mrb[0].mxu0
        %579 = vmatprep.mubr.f32.mxu0 0.0
        %580 = vmatmul.mubr.f32.gmra.mrb[0].mxu0 %v358
        %v581 = vpop.f32.mrb[0].mxu0
        %v582 = vadd.f32 0.0, %v581
        %v583 = vpop.f32.mrb[0].mxu0
        %584 = vmatprep.mubr.f32.mxu0 0.0
        %585 = vmatmul.mubr.f32.gmra.mrb[0].mxu0 %v361
        %v586 = vpop.f32.mrb[0].mxu0
        %v587 = vadd.f32 0.0, %v586
        %v588 = vpop.f32.mrb[0].mxu0
        %589 = vmatprep.mubr.f32.mxu0 0.0
        %590 = vmatmul.mubr.f32.gmra.mrb[0].mxu0 %v364
        %v591 = vpop.f32.mrb[0].mxu0
        %v592 = vadd.f32 0.0, %v591
        %v593 = vpop.f32.mrb[0].mxu0
        %594 = vdwg.mxu0
        %v596 = vsel %vm269, %v202, 0
        %v599 = vsel %vm269, %v203, 0
        %v602 = vsel %vm269, %v204, 0
        %v605 = vsel %vm269, %v205, 0
        %v608 = vsel %vm269, %v206, 0
        %v611 = vsel %vm269, %v207, 0
        %v614 = vsel %vm269, %v208, 0
        %v617 = vsel %vm269, %v209, 0
        %v620 = vsel %vm269, %v210, 0
        %v623 = vsel %vm269, %v211, 0
        %v626 = vsel %vm269, %v212, 0
        %v629 = vsel %vm269, %v213, 0
        %v632 = vsel %vm269, %v214, 0
        %v635 = vsel %vm269, %v215, 0
        %v638 = vsel %vm269, %v216, 0
        %v641 = vsel %vm269, %v217, 0
        %v644 = vsel %vm269, %v218, 0
        %v647 = vsel %vm269, %v219, 0
        %v650 = vsel %vm269, %v220, 0
        %v653 = vsel %vm269, %v221, 0
        %v656 = vsel %vm269, %v222, 0
        %v659 = vsel %vm269, %v223, 0
        %v662 = vsel %vm269, %v224, 0
        %v665 = vsel %vm269, %v225, 0
        %v668 = vsel %vm269, %v226, 0
        %v671 = vsel %vm269, %v227, 0
        %v674 = vsel %vm269, %v228, 0
        %v677 = vsel %vm269, %v229, 0
        %v680 = vsel %vm269, %v230, 0
        %v683 = vsel %vm269, %v231, 0
        %v686 = vsel %vm269, %v232, 0
        %v689 = vsel %vm269, %v233, 0
        %v692 = vsel %vm366, %v234, 0
        %694 = vmatprep.subr.mxu0 0.0
        %695 = vmatpush1.msra.mxu0 %v692
        %696 = vmatprep.subr.mxu0 0.0
        %697 = vmatpush1.msra.mxu0 0.0
        %698 = vmatprep.subr.mxu0 0.0
        %699 = vmatpush1.msra.mxu0 0.0
        %700 = vmatprep.subr.mxu0 0.0
        %701 = vmatpush1.msra.mxu0 0.0
        %702 = vmatprep.subr.mxu0 0.0
        %703 = vmatpush1.msra.mxu0 0.0
        %704 = vmatprep.subr.mxu0 0.0
        %705 = vmatpush1.msra.mxu0 0.0
        %706 = vmatprep.subr.mxu0 0.0
        %707 = vmatpush1.msra.mxu0 0.0
        %708 = vmatprep.subr.mxu0 0.0
        %709 = vmatpush1.msra.mxu0 0.0
        %710 = vmatprep.subr.mxu0 0.0
        %711 = vmatpush1.msra.mxu0 0.0
        %712 = vmatprep.subr.mxu0 0.0
        %713 = vmatpush1.msra.mxu0 0.0
        %714 = vmatprep.subr.mxu0 0.0
        %715 = vmatpush1.msra.mxu0 0.0
        %716 = vmatprep.subr.mxu0 0.0
        %717 = vmatpush1.msra.mxu0 0.0
        %718 = vmatprep.subr.mxu0 0.0
        %719 = vmatpush1.msra.mxu0 0.0
        %720 = vmatprep.subr.mxu0 0.0
        %721 = vmatpush1.msra.mxu0 0.0
        %722 = vmatprep.subr.mxu0 0.0
        %723 = vmatpush1.msra.mxu0 0.0
        %724 = vmatprep.subr.mxu0 0.0
        %725 = vmatpush1.msra.mxu0 0.0
        %726 = vmatprep.subr.mxu0 0.0
        %727 = vmatpush1.msra.mxu0 0.0
        %728 = vmatprep.subr.mxu0 0.0
        %729 = vmatpush1.msra.mxu0 0.0
        %730 = vmatprep.subr.mxu0 0.0
        %731 = vmatpush1.msra.mxu0 0.0
        %732 = vmatprep.subr.mxu0 0.0
        %733 = vmatpush1.msra.mxu0 0.0
        %734 = vmatprep.subr.mxu0 0.0
        %735 = vmatpush1.msra.mxu0 0.0
        %736 = vmatprep.subr.mxu0 0.0
        %737 = vmatpush1.msra.mxu0 0.0
        %738 = vmatprep.subr.mxu0 0.0
        %739 = vmatpush1.msra.mxu0 0.0
        %740 = vmatprep.subr.mxu0 0.0
        %741 = vmatpush1.msra.mxu0 0.0
        %742 = vmatprep.subr.mxu0 0.0
        %743 = vmatpush1.msra.mxu0 0.0
        %744 = vmatprep.subr.mxu0 0.0
        %745 = vmatpush1.msra.mxu0 0.0
        %746 = vmatprep.subr.mxu0 0.0
        %747 = vmatpush1.msra.mxu0 0.0
        %748 = vmatprep.subr.mxu0 0.0
        %749 = vmatpush1.msra.mxu0 0.0
        %750 = vmatprep.subr.mxu0 0.0
        %751 = vmatpush1.msra.mxu0 0.0
        %752 = vmatprep.subr.mxu0 0.0
        %753 = vmatpush1.msra.mxu0 0.0
        %754 = vmatprep.subr.mxu0 0.0
        %755 = vmatpush1.msra.mxu0 0.0
        %756 = vmatprep.subr.mxu0 0.0
        %757 = vmatpush1.msra.mxu0 0.0
        %758 = vmatprep.mubr.f32.mxu0 0.0
        %759 = vmatmul.mubr.f32.gmra.mrb[0].mxu0 %v596
        %v760 = vpop.f32.mrb[0].mxu0
        %v761 = vadd.f32 %v437, %v760
        %v762 = vpop.f32.mrb[0].mxu0
        %763 = vmatprep.mubr.f32.mxu0 0.0
        %764 = vmatmul.mubr.f32.gmra.mrb[0].mxu0 %v599
        %v765 = vpop.f32.mrb[0].mxu0
        %v766 = vadd.f32 %v442, %v765
        %v767 = vpop.f32.mrb[0].mxu0
        %768 = vmatprep.mubr.f32.mxu0 0.0
        %769 = vmatmul.mubr.f32.gmra.mrb[0].mxu0 %v602
        %v770 = vpop.f32.mrb[0].mxu0
        %v771 = vadd.f32 %v447, %v770
        %v772 = vpop.f32.mrb[0].mxu0
        %773 = vmatprep.mubr.f32.mxu0 0.0
        %774 = vmatmul.mubr.f32.gmra.mrb[0].mxu0 %v605
        %v775 = vpop.f32.mrb[0].mxu0
        %v776 = vadd.f32 %v452, %v775
        %v777 = vpop.f32.mrb[0].mxu0
        %778 = vmatprep.mubr.f32.mxu0 0.0
        %779 = vmatmul.mubr.f32.gmra.mrb[0].mxu0 %v608
        %v780 = vpop.f32.mrb[0].mxu0
        %v781 = vadd.f32 %v457, %v780
        %v782 = vpop.f32.mrb[0].mxu0
        %783 = vmatprep.mubr.f32.mxu0 0.0
        %784 = vmatmul.mubr.f32.gmra.mrb[0].mxu0 %v611
        %v785 = vpop.f32.mrb[0].mxu0
        %v786 = vadd.f32 %v462, %v785
        %v787 = vpop.f32.mrb[0].mxu0
        %788 = vmatprep.mubr.f32.mxu0 0.0
        %789 = vmatmul.mubr.f32.gmra.mrb[0].mxu0 %v614
        %v790 = vpop.f32.mrb[0].mxu0
        %v791 = vadd.f32 %v467, %v790
        %v792 = vpop.f32.mrb[0].mxu0
        %793 = vmatprep.mubr.f32.mxu0 0.0
        %794 = vmatmul.mubr.f32.gmra.mrb[0].mxu0 %v617
        %v795 = vpop.f32.mrb[0].mxu0
        %v796 = vadd.f32 %v472, %v795
        %v797 = vpop.f32.mrb[0].mxu0
        %798 = vmatprep.mubr.f32.mxu0 0.0
        %799 = vmatmul.mubr.f32.gmra.mrb[0].mxu0 %v620
        %v800 = vpop.f32.mrb[0].mxu0
        %v801 = vadd.f32 %v477, %v800
        %v802 = vpop.f32.mrb[0].mxu0
        %803 = vmatprep.mubr.f32.mxu0 0.0
        %804 = vmatmul.mubr.f32.gmra.mrb[0].mxu0 %v623
        %v805 = vpop.f32.mrb[0].mxu0
        %v806 = vadd.f32 %v482, %v805
        %v807 = vpop.f32.mrb[0].mxu0
        %808 = vmatprep.mubr.f32.mxu0 0.0
        %809 = vmatmul.mubr.f32.gmra.mrb[0].mxu0 %v626
        %v810 = vpop.f32.mrb[0].mxu0
        %v811 = vadd.f32 %v487, %v810
        %v812 = vpop.f32.mrb[0].mxu0
        %813 = vmatprep.mubr.f32.mxu0 0.0
        %814 = vmatmul.mubr.f32.gmra.mrb[0].mxu0 %v629
        %v815 = vpop.f32.mrb[0].mxu0
        %v816 = vadd.f32 %v492, %v815
        %v817 = vpop.f32.mrb[0].mxu0
        %818 = vmatprep.mubr.f32.mxu0 0.0
        %819 = vmatmul.mubr.f32.gmra.mrb[0].mxu0 %v632
        %v820 = vpop.f32.mrb[0].mxu0
        %v821 = vadd.f32 %v497, %v820
        %v822 = vpop.f32.mrb[0].mxu0
        %823 = vmatprep.mubr.f32.mxu0 0.0
        %824 = vmatmul.mubr.f32.gmra.mrb[0].mxu0 %v635
        %v825 = vpop.f32.mrb[0].mxu0
        %v826 = vadd.f32 %v502, %v825
        %v827 = vpop.f32.mrb[0].mxu0
        %828 = vmatprep.mubr.f32.mxu0 0.0
        %829 = vmatmul.mubr.f32.gmra.mrb[0].mxu0 %v638
        %v830 = vpop.f32.mrb[0].mxu0
        %v831 = vadd.f32 %v507, %v830
        %v832 = vpop.f32.mrb[0].mxu0
        %833 = vmatprep.mubr.f32.mxu0 0.0
        %834 = vmatmul.mubr.f32.gmra.mrb[0].mxu0 %v641
        %v835 = vpop.f32.mrb[0].mxu0
        %v836 = vadd.f32 %v512, %v835
        %v837 = vpop.f32.mrb[0].mxu0
        %838 = vmatprep.mubr.f32.mxu0 0.0
        %839 = vmatmul.mubr.f32.gmra.mrb[0].mxu0 %v644
        %v840 = vpop.f32.mrb[0].mxu0
        %v841 = vadd.f32 %v517, %v840
        %v842 = vpop.f32.mrb[0].mxu0
        %843 = vmatprep.mubr.f32.mxu0 0.0
        %844 = vmatmul.mubr.f32.gmra.mrb[0].mxu0 %v647
        %v845 = vpop.f32.mrb[0].mxu0
        %v846 = vadd.f32 %v522, %v845
        %v847 = vpop.f32.mrb[0].mxu0
        %848 = vmatprep.mubr.f32.mxu0 0.0
        %849 = vmatmul.mubr.f32.gmra.mrb[0].mxu0 %v650
        %v850 = vpop.f32.mrb[0].mxu0
        %v851 = vadd.f32 %v527, %v850
        %v852 = vpop.f32.mrb[0].mxu0
        %853 = vmatprep.mubr.f32.mxu0 0.0
        %854 = vmatmul.mubr.f32.gmra.mrb[0].mxu0 %v653
        %v855 = vpop.f32.mrb[0].mxu0
        %v856 = vadd.f32 %v532, %v855
        %v857 = vpop.f32.mrb[0].mxu0
        %858 = vmatprep.mubr.f32.mxu0 0.0
        %859 = vmatmul.mubr.f32.gmra.mrb[0].mxu0 %v656
        %v860 = vpop.f32.mrb[0].mxu0
        %v861 = vadd.f32 %v537, %v860
        %v862 = vpop.f32.mrb[0].mxu0
        %863 = vmatprep.mubr.f32.mxu0 0.0
        %864 = vmatmul.mubr.f32.gmra.mrb[0].mxu0 %v659
        %v865 = vpop.f32.mrb[0].mxu0
        %v866 = vadd.f32 %v542, %v865
        %v867 = vpop.f32.mrb[0].mxu0
        %868 = vmatprep.mubr.f32.mxu0 0.0
        %869 = vmatmul.mubr.f32.gmra.mrb[0].mxu0 %v662
        %v870 = vpop.f32.mrb[0].mxu0
        %v871 = vadd.f32 %v547, %v870
        %v872 = vpop.f32.mrb[0].mxu0
        %873 = vmatprep.mubr.f32.mxu0 0.0
        %874 = vmatmul.mubr.f32.gmra.mrb[0].mxu0 %v665
        %v875 = vpop.f32.mrb[0].mxu0
        %v876 = vadd.f32 %v552, %v875
        %v877 = vpop.f32.mrb[0].mxu0
        %878 = vmatprep.mubr.f32.mxu0 0.0
        %879 = vmatmul.mubr.f32.gmra.mrb[0].mxu0 %v668
        %v880 = vpop.f32.mrb[0].mxu0
        %v881 = vadd.f32 %v557, %v880
        %v882 = vpop.f32.mrb[0].mxu0
        %883 = vmatprep.mubr.f32.mxu0 0.0
        %884 = vmatmul.mubr.f32.gmra.mrb[0].mxu0 %v671
        %v885 = vpop.f32.mrb[0].mxu0
        %v886 = vadd.f32 %v562, %v885
        %v887 = vpop.f32.mrb[0].mxu0
        %888 = vmatprep.mubr.f32.mxu0 0.0
        %889 = vmatmul.mubr.f32.gmra.mrb[0].mxu0 %v674
        %v890 = vpop.f32.mrb[0].mxu0
        %v891 = vadd.f32 %v567, %v890
        %v892 = vpop.f32.mrb[0].mxu0
        %893 = vmatprep.mubr.f32.mxu0 0.0
        %894 = vmatmul.mubr.f32.gmra.mrb[0].mxu0 %v677
        %v895 = vpop.f32.mrb[0].mxu0
        %v896 = vadd.f32 %v572, %v895
        %v897 = vpop.f32.mrb[0].mxu0
        %898 = vmatprep.mubr.f32.mxu0 0.0
        %899 = vmatmul.mubr.f32.gmra.mrb[0].mxu0 %v680
        %v900 = vpop.f32.mrb[0].mxu0
        %v901 = vadd.f32 %v577, %v900
        %v902 = vpop.f32.mrb[0].mxu0
        %903 = vmatprep.mubr.f32.mxu0 0.0
        %904 = vmatmul.mubr.f32.gmra.mrb[0].mxu0 %v683
        %v905 = vpop.f32.mrb[0].mxu0
        %v906 = vadd.f32 %v582, %v905
        %v907 = vpop.f32.mrb[0].mxu0
        %908 = vmatprep.mubr.f32.mxu0 0.0
        %909 = vmatmul.mubr.f32.gmra.mrb[0].mxu0 %v686
        %v910 = vpop.f32.mrb[0].mxu0
        %v911 = vadd.f32 %v587, %v910
        %v912 = vpop.f32.mrb[0].mxu0
        %913 = vmatprep.mubr.f32.mxu0 0.0
        %914 = vmatmul.mubr.f32.gmra.mrb[0].mxu0 %v689
        %v915 = vpop.f32.mrb[0].mxu0
        %v916 = vadd.f32 %v592, %v915
        %v917 = vpop.f32.mrb[0].mxu0
        %918 = vdwg.mxu0
        %v919 = vld [vmem:[%s201 + $0x2] sm:$0xff]
        %v920 = vld [vmem:[%s201 + $0xa] sm:$0xff]
        %v921 = vld [vmem:[%s201 + $0x1a] sm:$0xff]
        %v922 = vld [vmem:[%s201 + $0x22] sm:$0xff]
        %v923 = vld [vmem:[%s201 + $0x32] sm:$0xff]
        %v924 = vld [vmem:[%s201 + $0x3a] sm:$0xff]
        %v925 = vld [vmem:[%s201 + $0x4a] sm:$0xff]
        %v926 = vld [vmem:[%s201 + $0x52] sm:$0xff]
        %v927 = vld [vmem:[%s201 + $0x62] sm:$0xff]
        %v928 = vld [vmem:[%s201 + $0x6a] sm:$0xff]
        %v929 = vld [vmem:[%s201 + $0x7a] sm:$0xff]
        %v930 = vld [vmem:[%s201 + $0x82] sm:$0xff]
        %v931 = vld [vmem:[%s201 + $0x92] sm:$0xff]
        %v932 = vld [vmem:[%s201 + $0x9a] sm:$0xff]
        %v933 = vld [vmem:[%s201 + $0xaa] sm:$0xff]
        %v934 = vld [vmem:[%s201 + $0xb2] sm:$0xff]
        %v935 = vld [vmem:[%s201 + $0xc2] sm:$0xff]
        %v936 = vld [vmem:[%s201 + $0xca] sm:$0xff]
        %v937 = vld [vmem:[%s201 + $0xda] sm:$0xff]
        %v938 = vld [vmem:[%s201 + $0xe2] sm:$0xff]
        %v939 = vld [vmem:[%s201 + $0xf2] sm:$0xff]
        %v940 = vld [vmem:[%s201 + $0xfa] sm:$0xff]
        %v941 = vld [vmem:[%s201 + $0x10a] sm:$0xff]
        %v942 = vld [vmem:[%s201 + $0x112] sm:$0xff]
        %v943 = vld [vmem:[%s201 + $0x122] sm:$0xff]
        %v944 = vld [vmem:[%s201 + $0x12a] sm:$0xff]
        %v945 = vld [vmem:[%s201 + $0x13a] sm:$0xff]
        %v946 = vld [vmem:[%s201 + $0x142] sm:$0xff]
        %v947 = vld [vmem:[%s201 + $0x152] sm:$0xff]
        %v948 = vld [vmem:[%s201 + $0x15a] sm:$0xff]
        %v949 = vld [vmem:[%s201 + $0x16a] sm:$0xff]
        %v950 = vld [vmem:[%s201 + $0x172] sm:$0xff]
        %s951 = scalar_lea.vmem %s1, 8
        %v952 = vld [vmem:[%s951] sm:$0xf]
        %v954 = vsel %vm269, %v919, 0
        %v957 = vsel %vm269, %v920, 0
        %v960 = vsel %vm269, %v921, 0
        %v963 = vsel %vm269, %v922, 0
        %v966 = vsel %vm269, %v923, 0
        %v969 = vsel %vm269, %v924, 0
        %v972 = vsel %vm269, %v925, 0
        %v975 = vsel %vm269, %v926, 0
        %v978 = vsel %vm269, %v927, 0
        %v981 = vsel %vm269, %v928, 0
        %v984 = vsel %vm269, %v929, 0
        %v987 = vsel %vm269, %v930, 0
        %v990 = vsel %vm269, %v931, 0
        %v993 = vsel %vm269, %v932, 0
        %v996 = vsel %vm269, %v933, 0
        %v999 = vsel %vm269, %v934, 0
        %v1002 = vsel %vm269, %v935, 0
        %v1005 = vsel %vm269, %v936, 0
        %v1008 = vsel %vm269, %v937, 0
        %v1011 = vsel %vm269, %v938, 0
        %v1014 = vsel %vm269, %v939, 0
        %v1017 = vsel %vm269, %v940, 0
        %v1020 = vsel %vm269, %v941, 0
        %v1023 = vsel %vm269, %v942, 0
        %v1026 = vsel %vm269, %v943, 0
        %v1029 = vsel %vm269, %v944, 0
        %v1032 = vsel %vm269, %v945, 0
        %v1035 = vsel %vm269, %v946, 0
        %v1038 = vsel %vm269, %v947, 0
        %v1041 = vsel %vm269, %v948, 0
        %v1044 = vsel %vm269, %v949, 0
        %v1047 = vsel %vm269, %v950, 0
        %v1050 = vsel %vm366, %v952, 0
        %1052 = vmatprep.subr.mxu0 0.0
        %1053 = vmatpush1.msra.mxu0 %v1050
        %1054 = vmatprep.subr.mxu0 0.0
        %1055 = vmatpush1.msra.mxu0 0.0
        %1056 = vmatprep.subr.mxu0 0.0
        %1057 = vmatpush1.msra.mxu0 0.0
        %1058 = vmatprep.subr.mxu0 0.0
        %1059 = vmatpush1.msra.mxu0 0.0
        %1060 = vmatprep.subr.mxu0 0.0
        %1061 = vmatpush1.msra.mxu0 0.0
        %1062 = vmatprep.subr.mxu0 0.0
        %1063 = vmatpush1.msra.mxu0 0.0
        %1064 = vmatprep.subr.mxu0 0.0
        %1065 = vmatpush1.msra.mxu0 0.0
        %1066 = vmatprep.subr.mxu0 0.0
        %1067 = vmatpush1.msra.mxu0 0.0
        %1068 = vmatprep.subr.mxu0 0.0
        %1069 = vmatpush1.msra.mxu0 0.0
        %1070 = vmatprep.subr.mxu0 0.0
        %1071 = vmatpush1.msra.mxu0 0.0
        %1072 = vmatprep.subr.mxu0 0.0
        %1073 = vmatpush1.msra.mxu0 0.0
        %1074 = vmatprep.subr.mxu0 0.0
        %1075 = vmatpush1.msra.mxu0 0.0
        %1076 = vmatprep.subr.mxu0 0.0
        %1077 = vmatpush1.msra.mxu0 0.0
        %1078 = vmatprep.subr.mxu0 0.0
        %1079 = vmatpush1.msra.mxu0 0.0
        %1080 = vmatprep.subr.mxu0 0.0
        %1081 = vmatpush1.msra.mxu0 0.0
        %1082 = vmatprep.subr.mxu0 0.0
        %1083 = vmatpush1.msra.mxu0 0.0
        %1084 = vmatprep.subr.mxu0 0.0
        %1085 = vmatpush1.msra.mxu0 0.0
        %1086 = vmatprep.subr.mxu0 0.0
        %1087 = vmatpush1.msra.mxu0 0.0
        %1088 = vmatprep.subr.mxu0 0.0
        %1089 = vmatpush1.msra.mxu0 0.0
        %1090 = vmatprep.subr.mxu0 0.0
        %1091 = vmatpush1.msra.mxu0 0.0
        %1092 = vmatprep.subr.mxu0 0.0
        %1093 = vmatpush1.msra.mxu0 0.0
        %1094 = vmatprep.subr.mxu0 0.0
        %1095 = vmatpush1.msra.mxu0 0.0
        %1096 = vmatprep.subr.mxu0 0.0
        %1097 = vmatpush1.msra.mxu0 0.0
        %1098 = vmatprep.subr.mxu0 0.0
        %1099 = vmatpush1.msra.mxu0 0.0
        %1100 = vmatprep.subr.mxu0 0.0
        %1101 = vmatpush1.msra.mxu0 0.0
        %1102 = vmatprep.subr.mxu0 0.0
        %1103 = vmatpush1.msra.mxu0 0.0
        %1104 = vmatprep.subr.mxu0 0.0
        %1105 = vmatpush1.msra.mxu0 0.0
        %1106 = vmatprep.subr.mxu0 0.0
        %1107 = vmatpush1.msra.mxu0 0.0
        %1108 = vmatprep.subr.mxu0 0.0
        %1109 = vmatpush1.msra.mxu0 0.0
        %1110 = vmatprep.subr.mxu0 0.0
        %1111 = vmatpush1.msra.mxu0 0.0
        %1112 = vmatprep.subr.mxu0 0.0
        %1113 = vmatpush1.msra.mxu0 0.0
        %1114 = vmatprep.subr.mxu0 0.0
        %1115 = vmatpush1.msra.mxu0 0.0
        %1116 = vmatprep.mubr.f32.mxu0 0.0
        %1117 = vmatmul.mubr.f32.gmra.mrb[0].mxu0 %v954
        %v1118 = vpop.f32.mrb[0].mxu0
        %v1119 = vadd.f32 0.0, %v1118
        %v1120 = vpop.f32.mrb[0].mxu0
        %1121 = vmatprep.mubr.f32.mxu0 0.0
        %1122 = vmatmul.mubr.f32.gmra.mrb[0].mxu0 %v957
        %v1123 = vpop.f32.mrb[0].mxu0
        %v1124 = vadd.f32 0.0, %v1123
        %v1125 = vpop.f32.mrb[0].mxu0
        %1126 = vmatprep.mubr.f32.mxu0 0.0
        %1127 = vmatmul.mubr.f32.gmra.mrb[0].mxu0 %v960
        %v1128 = vpop.f32.mrb[0].mxu0
        %v1129 = vadd.f32 0.0, %v1128
        %v1130 = vpop.f32.mrb[0].mxu0
        %1131 = vmatprep.mubr.f32.mxu0 0.0
        %1132 = vmatmul.mubr.f32.gmra.mrb[0].mxu0 %v963
        %v1133 = vpop.f32.mrb[0].mxu0
        %v1134 = vadd.f32 0.0, %v1133
        %v1135 = vpop.f32.mrb[0].mxu0
        %1136 = vmatprep.mubr.f32.mxu0 0.0
        %1137 = vmatmul.mubr.f32.gmra.mrb[0].mxu0 %v966
        %v1138 = vpop.f32.mrb[0].mxu0
        %v1139 = vadd.f32 0.0, %v1138
        %v1140 = vpop.f32.mrb[0].mxu0
        %1141 = vmatprep.mubr.f32.mxu0 0.0
        %1142 = vmatmul.mubr.f32.gmra.mrb[0].mxu0 %v969
        %v1143 = vpop.f32.mrb[0].mxu0
        %v1144 = vadd.f32 0.0, %v1143
        %v1145 = vpop.f32.mrb[0].mxu0
        %1146 = vmatprep.mubr.f32.mxu0 0.0
        %1147 = vmatmul.mubr.f32.gmra.mrb[0].mxu0 %v972
        %v1148 = vpop.f32.mrb[0].mxu0
        %v1149 = vadd.f32 0.0, %v1148
        %v1150 = vpop.f32.mrb[0].mxu0
        %1151 = vmatprep.mubr.f32.mxu0 0.0
        %1152 = vmatmul.mubr.f32.gmra.mrb[0].mxu0 %v975
        %v1153 = vpop.f32.mrb[0].mxu0
        %v1154 = vadd.f32 0.0, %v1153
        %v1155 = vpop.f32.mrb[0].mxu0
        %1156 = vmatprep.mubr.f32.mxu0 0.0
        %1157 = vmatmul.mubr.f32.gmra.mrb[0].mxu0 %v978
        %v1158 = vpop.f32.mrb[0].mxu0
        %v1159 = vadd.f32 0.0, %v1158
        %v1160 = vpop.f32.mrb[0].mxu0
        %1161 = vmatprep.mubr.f32.mxu0 0.0
        %1162 = vmatmul.mubr.f32.gmra.mrb[0].mxu0 %v981
        %v1163 = vpop.f32.mrb[0].mxu0
        %v1164 = vadd.f32 0.0, %v1163
        %v1165 = vpop.f32.mrb[0].mxu0
        %1166 = vmatprep.mubr.f32.mxu0 0.0
        %1167 = vmatmul.mubr.f32.gmra.mrb[0].mxu0 %v984
        %v1168 = vpop.f32.mrb[0].mxu0
        %v1169 = vadd.f32 0.0, %v1168
        %v1170 = vpop.f32.mrb[0].mxu0
        %1171 = vmatprep.mubr.f32.mxu0 0.0
        %1172 = vmatmul.mubr.f32.gmra.mrb[0].mxu0 %v987
        %v1173 = vpop.f32.mrb[0].mxu0
        %v1174 = vadd.f32 0.0, %v1173
        %v1175 = vpop.f32.mrb[0].mxu0
        %1176 = vmatprep.mubr.f32.mxu0 0.0
        %1177 = vmatmul.mubr.f32.gmra.mrb[0].mxu0 %v990
        %v1178 = vpop.f32.mrb[0].mxu0
        %v1179 = vadd.f32 0.0, %v1178
        %v1180 = vpop.f32.mrb[0].mxu0
        %1181 = vmatprep.mubr.f32.mxu0 0.0
        %1182 = vmatmul.mubr.f32.gmra.mrb[0].mxu0 %v993
        %v1183 = vpop.f32.mrb[0].mxu0
        %v1184 = vadd.f32 0.0, %v1183
        %v1185 = vpop.f32.mrb[0].mxu0
        %1186 = vmatprep.mubr.f32.mxu0 0.0
        %1187 = vmatmul.mubr.f32.gmra.mrb[0].mxu0 %v996
        %v1188 = vpop.f32.mrb[0].mxu0
        %v1189 = vadd.f32 0.0, %v1188
        %v1190 = vpop.f32.mrb[0].mxu0
        %1191 = vmatprep.mubr.f32.mxu0 0.0
        %1192 = vmatmul.mubr.f32.gmra.mrb[0].mxu0 %v999
        %v1193 = vpop.f32.mrb[0].mxu0
        %v1194 = vadd.f32 0.0, %v1193
        %v1195 = vpop.f32.mrb[0].mxu0
        %1196 = vmatprep.mubr.f32.mxu0 0.0
        %1197 = vmatmul.mubr.f32.gmra.mrb[0].mxu0 %v1002
        %v1198 = vpop.f32.mrb[0].mxu0
        %v1199 = vadd.f32 0.0, %v1198
        %v1200 = vpop.f32.mrb[0].mxu0
        %1201 = vmatprep.mubr.f32.mxu0 0.0
        %1202 = vmatmul.mubr.f32.gmra.mrb[0].mxu0 %v1005
        %v1203 = vpop.f32.mrb[0].mxu0
        %v1204 = vadd.f32 0.0, %v1203
        %v1205 = vpop.f32.mrb[0].mxu0
        %1206 = vmatprep.mubr.f32.mxu0 0.0
        %1207 = vmatmul.mubr.f32.gmra.mrb[0].mxu0 %v1008
        %v1208 = vpop.f32.mrb[0].mxu0
        %v1209 = vadd.f32 0.0, %v1208
        %v1210 = vpop.f32.mrb[0].mxu0
        %1211 = vmatprep.mubr.f32.mxu0 0.0
        %1212 = vmatmul.mubr.f32.gmra.mrb[0].mxu0 %v1011
        %v1213 = vpop.f32.mrb[0].mxu0
        %v1214 = vadd.f32 0.0, %v1213
        %v1215 = vpop.f32.mrb[0].mxu0
        %1216 = vmatprep.mubr.f32.mxu0 0.0
        %1217 = vmatmul.mubr.f32.gmra.mrb[0].mxu0 %v1014
        %v1218 = vpop.f32.mrb[0].mxu0
        %v1219 = vadd.f32 0.0, %v1218
        %v1220 = vpop.f32.mrb[0].mxu0
        %1221 = vmatprep.mubr.f32.mxu0 0.0
        %1222 = vmatmul.mubr.f32.gmra.mrb[0].mxu0 %v1017
        %v1223 = vpop.f32.mrb[0].mxu0
        %v1224 = vadd.f32 0.0, %v1223
        %v1225 = vpop.f32.mrb[0].mxu0
        %1226 = vmatprep.mubr.f32.mxu0 0.0
        %1227 = vmatmul.mubr.f32.gmra.mrb[0].mxu0 %v1020
        %v1228 = vpop.f32.mrb[0].mxu0
        %v1229 = vadd.f32 0.0, %v1228
        %v1230 = vpop.f32.mrb[0].mxu0
        %1231 = vmatprep.mubr.f32.mxu0 0.0
        %1232 = vmatmul.mubr.f32.gmra.mrb[0].mxu0 %v1023
        %v1233 = vpop.f32.mrb[0].mxu0
        %v1234 = vadd.f32 0.0, %v1233
        %v1235 = vpop.f32.mrb[0].mxu0
        %1236 = vmatprep.mubr.f32.mxu0 0.0
        %1237 = vmatmul.mubr.f32.gmra.mrb[0].mxu0 %v1026
        %v1238 = vpop.f32.mrb[0].mxu0
        %v1239 = vadd.f32 0.0, %v1238
        %v1240 = vpop.f32.mrb[0].mxu0
        %1241 = vmatprep.mubr.f32.mxu0 0.0
        %1242 = vmatmul.mubr.f32.gmra.mrb[0].mxu0 %v1029
        %v1243 = vpop.f32.mrb[0].mxu0
        %v1244 = vadd.f32 0.0, %v1243
        %v1245 = vpop.f32.mrb[0].mxu0
        %1246 = vmatprep.mubr.f32.mxu0 0.0
        %1247 = vmatmul.mubr.f32.gmra.mrb[0].mxu0 %v1032
        %v1248 = vpop.f32.mrb[0].mxu0
        %v1249 = vadd.f32 0.0, %v1248
        %v1250 = vpop.f32.mrb[0].mxu0
        %1251 = vmatprep.mubr.f32.mxu0 0.0
        %1252 = vmatmul.mubr.f32.gmra.mrb[0].mxu0 %v1035
        %v1253 = vpop.f32.mrb[0].mxu0
        %v1254 = vadd.f32 0.0, %v1253
        %v1255 = vpop.f32.mrb[0].mxu0
        %1256 = vmatprep.mubr.f32.mxu0 0.0
        %1257 = vmatmul.mubr.f32.gmra.mrb[0].mxu0 %v1038
        %v1258 = vpop.f32.mrb[0].mxu0
        %v1259 = vadd.f32 0.0, %v1258
        %v1260 = vpop.f32.mrb[0].mxu0
        %1261 = vmatprep.mubr.f32.mxu0 0.0
        %1262 = vmatmul.mubr.f32.gmra.mrb[0].mxu0 %v1041
        %v1263 = vpop.f32.mrb[0].mxu0
        %v1264 = vadd.f32 0.0, %v1263
        %v1265 = vpop.f32.mrb[0].mxu0
        %1266 = vmatprep.mubr.f32.mxu0 0.0
        %1267 = vmatmul.mubr.f32.gmra.mrb[0].mxu0 %v1044
        %v1268 = vpop.f32.mrb[0].mxu0
        %v1269 = vadd.f32 0.0, %v1268
        %v1270 = vpop.f32.mrb[0].mxu0
        %1271 = vmatprep.mubr.f32.mxu0 0.0
        %1272 = vmatmul.mubr.f32.gmra.mrb[0].mxu0 %v1047
        %v1273 = vpop.f32.mrb[0].mxu0
        %v1274 = vadd.f32 0.0, %v1273
        %v1275 = vpop.f32.mrb[0].mxu0
        %1276 = vdwg.mxu0
        %v1277 = vadd.f32 %v761, %v1119
        %v1278 = vadd.f32 %v766, %v1124
        %v1279 = vadd.f32 %v771, %v1129
        %v1280 = vadd.f32 %v776, %v1134
        %v1281 = vadd.f32 %v781, %v1139
        %v1282 = vadd.f32 %v786, %v1144
        %v1283 = vadd.f32 %v791, %v1149
        %v1284 = vadd.f32 %v796, %v1154
        %v1285 = vadd.f32 %v801, %v1159
        %v1286 = vadd.f32 %v806, %v1164
        %v1287 = vadd.f32 %v811, %v1169
        %v1288 = vadd.f32 %v816, %v1174
        %v1289 = vadd.f32 %v821, %v1179
        %v1290 = vadd.f32 %v826, %v1184
        %v1291 = vadd.f32 %v831, %v1189
        %v1292 = vadd.f32 %v836, %v1194
        %v1293 = vadd.f32 %v841, %v1199
        %v1294 = vadd.f32 %v846, %v1204
        %v1295 = vadd.f32 %v851, %v1209
        %v1296 = vadd.f32 %v856, %v1214
        %v1297 = vadd.f32 %v861, %v1219
        %v1298 = vadd.f32 %v866, %v1224
        %v1299 = vadd.f32 %v871, %v1229
        %v1300 = vadd.f32 %v876, %v1234
        %v1301 = vadd.f32 %v881, %v1239
        %v1302 = vadd.f32 %v886, %v1244
        %v1303 = vadd.f32 %v891, %v1249
        %v1304 = vadd.f32 %v896, %v1254
        %v1305 = vadd.f32 %v901, %v1259
        %v1306 = vadd.f32 %v906, %v1264
        %v1307 = vadd.f32 %v911, %v1269
        %v1308 = vadd.f32 %v916, %v1274
        %s1309 = sadd.s32 %s199, 1
        %s1310 = smul.u32 %s1309, 24
        %s1311 = scalar_lea.vmem %s195, %s1310
        %v1312 = vld [vmem:[%s1311] sm:$0xff]
        %v1313 = vld [vmem:[%s1311 + $0x8] sm:$0xff]
        %v1314 = vld [vmem:[%s1311 + $0x18] sm:$0xff]
        %v1315 = vld [vmem:[%s1311 + $0x20] sm:$0xff]
        %v1316 = vld [vmem:[%s1311 + $0x30] sm:$0xff]
        %v1317 = vld [vmem:[%s1311 + $0x38] sm:$0xff]
        %v1318 = vld [vmem:[%s1311 + $0x48] sm:$0xff]
        %v1319 = vld [vmem:[%s1311 + $0x50] sm:$0xff]
        %v1320 = vld [vmem:[%s1311 + $0x60] sm:$0xff]
        %v1321 = vld [vmem:[%s1311 + $0x68] sm:$0xff]
        %v1322 = vld [vmem:[%s1311 + $0x78] sm:$0xff]
        %v1323 = vld [vmem:[%s1311 + $0x80] sm:$0xff]
        %v1324 = vld [vmem:[%s1311 + $0x90] sm:$0xff]
        %v1325 = vld [vmem:[%s1311 + $0x98] sm:$0xff]
        %v1326 = vld [vmem:[%s1311 + $0xa8] sm:$0xff]
        %v1327 = vld [vmem:[%s1311 + $0xb0] sm:$0xff]
        %v1328 = vld [vmem:[%s1311 + $0xc0] sm:$0xff]
        %v1329 = vld [vmem:[%s1311 + $0xc8] sm:$0xff]
        %v1330 = vld [vmem:[%s1311 + $0xd8] sm:$0xff]
        %v1331 = vld [vmem:[%s1311 + $0xe0] sm:$0xff]
        %v1332 = vld [vmem:[%s1311 + $0xf0] sm:$0xff]
        %v1333 = vld [vmem:[%s1311 + $0xf8] sm:$0xff]
        %v1334 = vld [vmem:[%s1311 + $0x108] sm:$0xff]
        %v1335 = vld [vmem:[%s1311 + $0x110] sm:$0xff]
        %v1336 = vld [vmem:[%s1311 + $0x120] sm:$0xff]
        %v1337 = vld [vmem:[%s1311 + $0x128] sm:$0xff]
        %v1338 = vld [vmem:[%s1311 + $0x138] sm:$0xff]
        %v1339 = vld [vmem:[%s1311 + $0x140] sm:$0xff]
        %v1340 = vld [vmem:[%s1311 + $0x150] sm:$0xff]
        %v1341 = vld [vmem:[%s1311 + $0x158] sm:$0xff]
        %v1342 = vld [vmem:[%s1311 + $0x168] sm:$0xff]
        %v1343 = vld [vmem:[%s1311 + $0x170] sm:$0xff]
        %s1344 = scalar_lea.vmem %s1, 12
        %v1345 = vld [vmem:[%s1344] sm:$0xf]
        %v1347 = vsel %vm269, %v1312, 0
        %v1350 = vsel %vm269, %v1313, 0
        %v1353 = vsel %vm269, %v1314, 0
        %v1356 = vsel %vm269, %v1315, 0
        %v1359 = vsel %vm269, %v1316, 0
        %v1362 = vsel %vm269, %v1317, 0
        %v1365 = vsel %vm269, %v1318, 0
        %v1368 = vsel %vm269, %v1319, 0
        %v1371 = vsel %vm269, %v1320, 0
        %v1374 = vsel %vm269, %v1321, 0
        %v1377 = vsel %vm269, %v1322, 0
        %v1380 = vsel %vm269, %v1323, 0
        %v1383 = vsel %vm269, %v1324, 0
        %v1386 = vsel %vm269, %v1325, 0
        %v1389 = vsel %vm269, %v1326, 0
        %v1392 = vsel %vm269, %v1327, 0
        %v1395 = vsel %vm269, %v1328, 0
        %v1398 = vsel %vm269, %v1329, 0
        %v1401 = vsel %vm269, %v1330, 0
        %v1404 = vsel %vm269, %v1331, 0
        %v1407 = vsel %vm269, %v1332, 0
        %v1410 = vsel %vm269, %v1333, 0
        %v1413 = vsel %vm269, %v1334, 0
        %v1416 = vsel %vm269, %v1335, 0
        %v1419 = vsel %vm269, %v1336, 0
        %v1422 = vsel %vm269, %v1337, 0
        %v1425 = vsel %vm269, %v1338, 0
        %v1428 = vsel %vm269, %v1339, 0
        %v1431 = vsel %vm269, %v1340, 0
        %v1434 = vsel %vm269, %v1341, 0
        %v1437 = vsel %vm269, %v1342, 0
        %v1440 = vsel %vm269, %v1343, 0
        %v1443 = vsel %vm366, %v1345, 0
        %1445 = vmatprep.subr.mxu0 0.0
        %1446 = vmatpush1.msra.mxu0 %v1443
        %1447 = vmatprep.subr.mxu0 0.0
        %1448 = vmatpush1.msra.mxu0 0.0
        %1449 = vmatprep.subr.mxu0 0.0
        %1450 = vmatpush1.msra.mxu0 0.0
        %1451 = vmatprep.subr.mxu0 0.0
        %1452 = vmatpush1.msra.mxu0 0.0
        %1453 = vmatprep.subr.mxu0 0.0
        %1454 = vmatpush1.msra.mxu0 0.0
        %1455 = vmatprep.subr.mxu0 0.0
        %1456 = vmatpush1.msra.mxu0 0.0
        %1457 = vmatprep.subr.mxu0 0.0
        %1458 = vmatpush1.msra.mxu0 0.0
        %1459 = vmatprep.subr.mxu0 0.0
        %1460 = vmatpush1.msra.mxu0 0.0
        %1461 = vmatprep.subr.mxu0 0.0
        %1462 = vmatpush1.msra.mxu0 0.0
        %1463 = vmatprep.subr.mxu0 0.0
        %1464 = vmatpush1.msra.mxu0 0.0
        %1465 = vmatprep.subr.mxu0 0.0
        %1466 = vmatpush1.msra.mxu0 0.0
        %1467 = vmatprep.subr.mxu0 0.0
        %1468 = vmatpush1.msra.mxu0 0.0
        %1469 = vmatprep.subr.mxu0 0.0
        %1470 = vmatpush1.msra.mxu0 0.0
        %1471 = vmatprep.subr.mxu0 0.0
        %1472 = vmatpush1.msra.mxu0 0.0
        %1473 = vmatprep.subr.mxu0 0.0
        %1474 = vmatpush1.msra.mxu0 0.0
        %1475 = vmatprep.subr.mxu0 0.0
        %1476 = vmatpush1.msra.mxu0 0.0
        %1477 = vmatprep.subr.mxu0 0.0
        %1478 = vmatpush1.msra.mxu0 0.0
        %1479 = vmatprep.subr.mxu0 0.0
        %1480 = vmatpush1.msra.mxu0 0.0
        %1481 = vmatprep.subr.mxu0 0.0
        %1482 = vmatpush1.msra.mxu0 0.0
        %1483 = vmatprep.subr.mxu0 0.0
        %1484 = vmatpush1.msra.mxu0 0.0
        %1485 = vmatprep.subr.mxu0 0.0
        %1486 = vmatpush1.msra.mxu0 0.0
        %1487 = vmatprep.subr.mxu0 0.0
        %1488 = vmatpush1.msra.mxu0 0.0
        %1489 = vmatprep.subr.mxu0 0.0
        %1490 = vmatpush1.msra.mxu0 0.0
        %1491 = vmatprep.subr.mxu0 0.0
        %1492 = vmatpush1.msra.mxu0 0.0
        %1493 = vmatprep.subr.mxu0 0.0
        %1494 = vmatpush1.msra.mxu0 0.0
        %1495 = vmatprep.subr.mxu0 0.0
        %1496 = vmatpush1.msra.mxu0 0.0
        %1497 = vmatprep.subr.mxu0 0.0
        %1498 = vmatpush1.msra.mxu0 0.0
        %1499 = vmatprep.subr.mxu0 0.0
        %1500 = vmatpush1.msra.mxu0 0.0
        %1501 = vmatprep.subr.mxu0 0.0
        %1502 = vmatpush1.msra.mxu0 0.0
        %1503 = vmatprep.subr.mxu0 0.0
        %1504 = vmatpush1.msra.mxu0 0.0
        %1505 = vmatprep.subr.mxu0 0.0
        %1506 = vmatpush1.msra.mxu0 0.0
        %1507 = vmatprep.subr.mxu0 0.0
        %1508 = vmatpush1.msra.mxu0 0.0
        %1509 = vmatprep.mubr.f32.mxu0 0.0
        %1510 = vmatmul.mubr.f32.gmra.mrb[0].mxu0 %v1347
        %v1511 = vpop.f32.mrb[0].mxu0
        %v1512 = vadd.f32 0.0, %v1511
        %v1513 = vpop.f32.mrb[0].mxu0
        %1514 = vmatprep.mubr.f32.mxu0 0.0
        %1515 = vmatmul.mubr.f32.gmra.mrb[0].mxu0 %v1350
        %v1516 = vpop.f32.mrb[0].mxu0
        %v1517 = vadd.f32 0.0, %v1516
        %v1518 = vpop.f32.mrb[0].mxu0
        %1519 = vmatprep.mubr.f32.mxu0 0.0
        %1520 = vmatmul.mubr.f32.gmra.mrb[0].mxu0 %v1353
        %v1521 = vpop.f32.mrb[0].mxu0
        %v1522 = vadd.f32 0.0, %v1521
        %v1523 = vpop.f32.mrb[0].mxu0
        %1524 = vmatprep.mubr.f32.mxu0 0.0
        %1525 = vmatmul.mubr.f32.gmra.mrb[0].mxu0 %v1356
        %v1526 = vpop.f32.mrb[0].mxu0
        %v1527 = vadd.f32 0.0, %v1526
        %v1528 = vpop.f32.mrb[0].mxu0
        %1529 = vmatprep.mubr.f32.mxu0 0.0
        %1530 = vmatmul.mubr.f32.gmra.mrb[0].mxu0 %v1359
        %v1531 = vpop.f32.mrb[0].mxu0
        %v1532 = vadd.f32 0.0, %v1531
        %v1533 = vpop.f32.mrb[0].mxu0
        %1534 = vmatprep.mubr.f32.mxu0 0.0
        %1535 = vmatmul.mubr.f32.gmra.mrb[0].mxu0 %v1362
        %v1536 = vpop.f32.mrb[0].mxu0
        %v1537 = vadd.f32 0.0, %v1536
        %v1538 = vpop.f32.mrb[0].mxu0
        %1539 = vmatprep.mubr.f32.mxu0 0.0
        %1540 = vmatmul.mubr.f32.gmra.mrb[0].mxu0 %v1365
        %v1541 = vpop.f32.mrb[0].mxu0
        %v1542 = vadd.f32 0.0, %v1541
        %v1543 = vpop.f32.mrb[0].mxu0
        %1544 = vmatprep.mubr.f32.mxu0 0.0
        %1545 = vmatmul.mubr.f32.gmra.mrb[0].mxu0 %v1368
        %v1546 = vpop.f32.mrb[0].mxu0
        %v1547 = vadd.f32 0.0, %v1546
        %v1548 = vpop.f32.mrb[0].mxu0
        %1549 = vmatprep.mubr.f32.mxu0 0.0
        %1550 = vmatmul.mubr.f32.gmra.mrb[0].mxu0 %v1371
        %v1551 = vpop.f32.mrb[0].mxu0
        %v1552 = vadd.f32 0.0, %v1551
        %v1553 = vpop.f32.mrb[0].mxu0
        %1554 = vmatprep.mubr.f32.mxu0 0.0
        %1555 = vmatmul.mubr.f32.gmra.mrb[0].mxu0 %v1374
        %v1556 = vpop.f32.mrb[0].mxu0
        %v1557 = vadd.f32 0.0, %v1556
        %v1558 = vpop.f32.mrb[0].mxu0
        %1559 = vmatprep.mubr.f32.mxu0 0.0
        %1560 = vmatmul.mubr.f32.gmra.mrb[0].mxu0 %v1377
        %v1561 = vpop.f32.mrb[0].mxu0
        %v1562 = vadd.f32 0.0, %v1561
        %v1563 = vpop.f32.mrb[0].mxu0
        %1564 = vmatprep.mubr.f32.mxu0 0.0
        %1565 = vmatmul.mubr.f32.gmra.mrb[0].mxu0 %v1380
        %v1566 = vpop.f32.mrb[0].mxu0
        %v1567 = vadd.f32 0.0, %v1566
        %v1568 = vpop.f32.mrb[0].mxu0
        %1569 = vmatprep.mubr.f32.mxu0 0.0
        %1570 = vmatmul.mubr.f32.gmra.mrb[0].mxu0 %v1383
        %v1571 = vpop.f32.mrb[0].mxu0
        %v1572 = vadd.f32 0.0, %v1571
        %v1573 = vpop.f32.mrb[0].mxu0
        %1574 = vmatprep.mubr.f32.mxu0 0.0
        %1575 = vmatmul.mubr.f32.gmra.mrb[0].mxu0 %v1386
        %v1576 = vpop.f32.mrb[0].mxu0
        %v1577 = vadd.f32 0.0, %v1576
        %v1578 = vpop.f32.mrb[0].mxu0
        %1579 = vmatprep.mubr.f32.mxu0 0.0
        %1580 = vmatmul.mubr.f32.gmra.mrb[0].mxu0 %v1389
        %v1581 = vpop.f32.mrb[0].mxu0
        %v1582 = vadd.f32 0.0, %v1581
        %v1583 = vpop.f32.mrb[0].mxu0
        %1584 = vmatprep.mubr.f32.mxu0 0.0
        %1585 = vmatmul.mubr.f32.gmra.mrb[0].mxu0 %v1392
        %v1586 = vpop.f32.mrb[0].mxu0
        %v1587 = vadd.f32 0.0, %v1586
        %v1588 = vpop.f32.mrb[0].mxu0
        %1589 = vmatprep.mubr.f32.mxu0 0.0
        %1590 = vmatmul.mubr.f32.gmra.mrb[0].mxu0 %v1395
        %v1591 = vpop.f32.mrb[0].mxu0
        %v1592 = vadd.f32 0.0, %v1591
        %v1593 = vpop.f32.mrb[0].mxu0
        %1594 = vmatprep.mubr.f32.mxu0 0.0
        %1595 = vmatmul.mubr.f32.gmra.mrb[0].mxu0 %v1398
        %v1596 = vpop.f32.mrb[0].mxu0
        %v1597 = vadd.f32 0.0, %v1596
        %v1598 = vpop.f32.mrb[0].mxu0
        %1599 = vmatprep.mubr.f32.mxu0 0.0
        %1600 = vmatmul.mubr.f32.gmra.mrb[0].mxu0 %v1401
        %v1601 = vpop.f32.mrb[0].mxu0
        %v1602 = vadd.f32 0.0, %v1601
        %v1603 = vpop.f32.mrb[0].mxu0
        %1604 = vmatprep.mubr.f32.mxu0 0.0
        %1605 = vmatmul.mubr.f32.gmra.mrb[0].mxu0 %v1404
        %v1606 = vpop.f32.mrb[0].mxu0
        %v1607 = vadd.f32 0.0, %v1606
        %v1608 = vpop.f32.mrb[0].mxu0
        %1609 = vmatprep.mubr.f32.mxu0 0.0
        %1610 = vmatmul.mubr.f32.gmra.mrb[0].mxu0 %v1407
        %v1611 = vpop.f32.mrb[0].mxu0
        %v1612 = vadd.f32 0.0, %v1611
        %v1613 = vpop.f32.mrb[0].mxu0
        %1614 = vmatprep.mubr.f32.mxu0 0.0
        %1615 = vmatmul.mubr.f32.gmra.mrb[0].mxu0 %v1410
        %v1616 = vpop.f32.mrb[0].mxu0
        %v1617 = vadd.f32 0.0, %v1616
        %v1618 = vpop.f32.mrb[0].mxu0
        %1619 = vmatprep.mubr.f32.mxu0 0.0
        %1620 = vmatmul.mubr.f32.gmra.mrb[0].mxu0 %v1413
        %v1621 = vpop.f32.mrb[0].mxu0
        %v1622 = vadd.f32 0.0, %v1621
        %v1623 = vpop.f32.mrb[0].mxu0
        %1624 = vmatprep.mubr.f32.mxu0 0.0
        %1625 = vmatmul.mubr.f32.gmra.mrb[0].mxu0 %v1416
        %v1626 = vpop.f32.mrb[0].mxu0
        %v1627 = vadd.f32 0.0, %v1626
        %v1628 = vpop.f32.mrb[0].mxu0
        %1629 = vmatprep.mubr.f32.mxu0 0.0
        %1630 = vmatmul.mubr.f32.gmra.mrb[0].mxu0 %v1419
        %v1631 = vpop.f32.mrb[0].mxu0
        %v1632 = vadd.f32 0.0, %v1631
        %v1633 = vpop.f32.mrb[0].mxu0
        %1634 = vmatprep.mubr.f32.mxu0 0.0
        %1635 = vmatmul.mubr.f32.gmra.mrb[0].mxu0 %v1422
        %v1636 = vpop.f32.mrb[0].mxu0
        %v1637 = vadd.f32 0.0, %v1636
        %v1638 = vpop.f32.mrb[0].mxu0
        %1639 = vmatprep.mubr.f32.mxu0 0.0
        %1640 = vmatmul.mubr.f32.gmra.mrb[0].mxu0 %v1425
        %v1641 = vpop.f32.mrb[0].mxu0
        %v1642 = vadd.f32 0.0, %v1641
        %v1643 = vpop.f32.mrb[0].mxu0
        %1644 = vmatprep.mubr.f32.mxu0 0.0
        %1645 = vmatmul.mubr.f32.gmra.mrb[0].mxu0 %v1428
        %v1646 = vpop.f32.mrb[0].mxu0
        %v1647 = vadd.f32 0.0, %v1646
        %v1648 = vpop.f32.mrb[0].mxu0
        %1649 = vmatprep.mubr.f32.mxu0 0.0
        %1650 = vmatmul.mubr.f32.gmra.mrb[0].mxu0 %v1431
        %v1651 = vpop.f32.mrb[0].mxu0
        %v1652 = vadd.f32 0.0, %v1651
        %v1653 = vpop.f32.mrb[0].mxu0
        %1654 = vmatprep.mubr.f32.mxu0 0.0
        %1655 = vmatmul.mubr.f32.gmra.mrb[0].mxu0 %v1434
        %v1656 = vpop.f32.mrb[0].mxu0
        %v1657 = vadd.f32 0.0, %v1656
        %v1658 = vpop.f32.mrb[0].mxu0
        %1659 = vmatprep.mubr.f32.mxu0 0.0
        %1660 = vmatmul.mubr.f32.gmra.mrb[0].mxu0 %v1437
        %v1661 = vpop.f32.mrb[0].mxu0
        %v1662 = vadd.f32 0.0, %v1661
        %v1663 = vpop.f32.mrb[0].mxu0
        %1664 = vmatprep.mubr.f32.mxu0 0.0
        %1665 = vmatmul.mubr.f32.gmra.mrb[0].mxu0 %v1440
        %v1666 = vpop.f32.mrb[0].mxu0
        %v1667 = vadd.f32 0.0, %v1666
        %v1668 = vpop.f32.mrb[0].mxu0
        %1669 = vdwg.mxu0
        %v1670 = vadd.f32 %v1277, %v1512
        %v1671 = vadd.f32 %v1278, %v1517
        %v1672 = vadd.f32 %v1279, %v1522
        %v1673 = vadd.f32 %v1280, %v1527
        %v1674 = vadd.f32 %v1281, %v1532
        %v1675 = vadd.f32 %v1282, %v1537
        %v1676 = vadd.f32 %v1283, %v1542
        %v1677 = vadd.f32 %v1284, %v1547
        %v1678 = vadd.f32 %v1285, %v1552
        %v1679 = vadd.f32 %v1286, %v1557
        %v1680 = vadd.f32 %v1287, %v1562
        %v1681 = vadd.f32 %v1288, %v1567
        %v1682 = vadd.f32 %v1289, %v1572
        %v1683 = vadd.f32 %v1290, %v1577
        %v1684 = vadd.f32 %v1291, %v1582
        %v1685 = vadd.f32 %v1292, %v1587
        %v1686 = vadd.f32 %v1293, %v1592
        %v1687 = vadd.f32 %v1294, %v1597
        %v1688 = vadd.f32 %v1295, %v1602
        %v1689 = vadd.f32 %v1296, %v1607
        %v1690 = vadd.f32 %v1297, %v1612
        %v1691 = vadd.f32 %v1298, %v1617
        %v1692 = vadd.f32 %v1299, %v1622
        %v1693 = vadd.f32 %v1300, %v1627
        %v1694 = vadd.f32 %v1301, %v1632
        %v1695 = vadd.f32 %v1302, %v1637
        %v1696 = vadd.f32 %v1303, %v1642
        %v1697 = vadd.f32 %v1304, %v1647
        %v1698 = vadd.f32 %v1305, %v1652
        %v1699 = vadd.f32 %v1306, %v1657
        %v1700 = vadd.f32 %v1307, %v1662
        %v1701 = vadd.f32 %v1308, %v1667
        %v1702 = vld [vmem:[%s1311 + $0x1] sm:$0xff]
        %v1703 = vld [vmem:[%s1311 + $0x9] sm:$0xff]
        %v1704 = vld [vmem:[%s1311 + $0x19] sm:$0xff]
        %v1705 = vld [vmem:[%s1311 + $0x21] sm:$0xff]
        %v1706 = vld [vmem:[%s1311 + $0x31] sm:$0xff]
        %v1707 = vld [vmem:[%s1311 + $0x39] sm:$0xff]
        %v1708 = vld [vmem:[%s1311 + $0x49] sm:$0xff]
        %v1709 = vld [vmem:[%s1311 + $0x51] sm:$0xff]
        %v1710 = vld [vmem:[%s1311 + $0x61] sm:$0xff]
        %v1711 = vld [vmem:[%s1311 + $0x69] sm:$0xff]
        %v1712 = vld [vmem:[%s1311 + $0x79] sm:$0xff]
        %v1713 = vld [vmem:[%s1311 + $0x81] sm:$0xff]
        %v1714 = vld [vmem:[%s1311 + $0x91] sm:$0xff]
        %v1715 = vld [vmem:[%s1311 + $0x99] sm:$0xff]
        %v1716 = vld [vmem:[%s1311 + $0xa9] sm:$0xff]
        %v1717 = vld [vmem:[%s1311 + $0xb1] sm:$0xff]
        %v1718 = vld [vmem:[%s1311 + $0xc1] sm:$0xff]
        %v1719 = vld [vmem:[%s1311 + $0xc9] sm:$0xff]
        %v1720 = vld [vmem:[%s1311 + $0xd9] sm:$0xff]
        %v1721 = vld [vmem:[%s1311 + $0xe1] sm:$0xff]
        %v1722 = vld [vmem:[%s1311 + $0xf1] sm:$0xff]
        %v1723 = vld [vmem:[%s1311 + $0xf9] sm:$0xff]
        %v1724 = vld [vmem:[%s1311 + $0x109] sm:$0xff]
        %v1725 = vld [vmem:[%s1311 + $0x111] sm:$0xff]
        %v1726 = vld [vmem:[%s1311 + $0x121] sm:$0xff]
        %v1727 = vld [vmem:[%s1311 + $0x129] sm:$0xff]
        %v1728 = vld [vmem:[%s1311 + $0x139] sm:$0xff]
        %v1729 = vld [vmem:[%s1311 + $0x141] sm:$0xff]
        %v1730 = vld [vmem:[%s1311 + $0x151] sm:$0xff]
        %v1731 = vld [vmem:[%s1311 + $0x159] sm:$0xff]
        %v1732 = vld [vmem:[%s1311 + $0x169] sm:$0xff]
        %v1733 = vld [vmem:[%s1311 + $0x171] sm:$0xff]
        %s1734 = scalar_lea.vmem %s1, 16
        %v1735 = vld [vmem:[%s1734] sm:$0xf]
        %v1737 = vsel %vm269, %v1702, 0
        %v1740 = vsel %vm269, %v1703, 0
        %v1743 = vsel %vm269, %v1704, 0
        %v1746 = vsel %vm269, %v1705, 0
        %v1749 = vsel %vm269, %v1706, 0
        %v1752 = vsel %vm269, %v1707, 0
        %v1755 = vsel %vm269, %v1708, 0
        %v1758 = vsel %vm269, %v1709, 0
        %v1761 = vsel %vm269, %v1710, 0
        %v1764 = vsel %vm269, %v1711, 0
        %v1767 = vsel %vm269, %v1712, 0
        %v1770 = vsel %vm269, %v1713, 0
        %v1773 = vsel %vm269, %v1714, 0
        %v1776 = vsel %vm269, %v1715, 0
        %v1779 = vsel %vm269, %v1716, 0
        %v1782 = vsel %vm269, %v1717, 0
        %v1785 = vsel %vm269, %v1718, 0
        %v1788 = vsel %vm269, %v1719, 0
        %v1791 = vsel %vm269, %v1720, 0
        %v1794 = vsel %vm269, %v1721, 0
        %v1797 = vsel %vm269, %v1722, 0
        %v1800 = vsel %vm269, %v1723, 0
        %v1803 = vsel %vm269, %v1724, 0
        %v1806 = vsel %vm269, %v1725, 0
        %v1809 = vsel %vm269, %v1726, 0
        %v1812 = vsel %vm269, %v1727, 0
        %v1815 = vsel %vm269, %v1728, 0
        %v1818 = vsel %vm269, %v1729, 0
        %v1821 = vsel %vm269, %v1730, 0
        %v1824 = vsel %vm269, %v1731, 0
        %v1827 = vsel %vm269, %v1732, 0
        %v1830 = vsel %vm269, %v1733, 0
        %v1833 = vsel %vm366, %v1735, 0
        %1835 = vmatprep.subr.mxu0 0.0
        %1836 = vmatpush1.msra.mxu0 %v1833
        %1837 = vmatprep.subr.mxu0 0.0
        %1838 = vmatpush1.msra.mxu0 0.0
        %1839 = vmatprep.subr.mxu0 0.0
        %1840 = vmatpush1.msra.mxu0 0.0
        %1841 = vmatprep.subr.mxu0 0.0
        %1842 = vmatpush1.msra.mxu0 0.0
        %1843 = vmatprep.subr.mxu0 0.0
        %1844 = vmatpush1.msra.mxu0 0.0
        %1845 = vmatprep.subr.mxu0 0.0
        %1846 = vmatpush1.msra.mxu0 0.0
        %1847 = vmatprep.subr.mxu0 0.0
        %1848 = vmatpush1.msra.mxu0 0.0
        %1849 = vmatprep.subr.mxu0 0.0
        %1850 = vmatpush1.msra.mxu0 0.0
        %1851 = vmatprep.subr.mxu0 0.0
        %1852 = vmatpush1.msra.mxu0 0.0
        %1853 = vmatprep.subr.mxu0 0.0
        %1854 = vmatpush1.msra.mxu0 0.0
        %1855 = vmatprep.subr.mxu0 0.0
        %1856 = vmatpush1.msra.mxu0 0.0
        %1857 = vmatprep.subr.mxu0 0.0
        %1858 = vmatpush1.msra.mxu0 0.0
        %1859 = vmatprep.subr.mxu0 0.0
        %1860 = vmatpush1.msra.mxu0 0.0
        %1861 = vmatprep.subr.mxu0 0.0
        %1862 = vmatpush1.msra.mxu0 0.0
        %1863 = vmatprep.subr.mxu0 0.0
        %1864 = vmatpush1.msra.mxu0 0.0
        %1865 = vmatprep.subr.mxu0 0.0
        %1866 = vmatpush1.msra.mxu0 0.0
        %1867 = vmatprep.subr.mxu0 0.0
        %1868 = vmatpush1.msra.mxu0 0.0
        %1869 = vmatprep.subr.mxu0 0.0
        %1870 = vmatpush1.msra.mxu0 0.0
        %1871 = vmatprep.subr.mxu0 0.0
        %1872 = vmatpush1.msra.mxu0 0.0
        %1873 = vmatprep.subr.mxu0 0.0
        %1874 = vmatpush1.msra.mxu0 0.0
        %1875 = vmatprep.subr.mxu0 0.0
        %1876 = vmatpush1.msra.mxu0 0.0
        %1877 = vmatprep.subr.mxu0 0.0
        %1878 = vmatpush1.msra.mxu0 0.0
        %1879 = vmatprep.subr.mxu0 0.0
        %1880 = vmatpush1.msra.mxu0 0.0
        %1881 = vmatprep.subr.mxu0 0.0
        %1882 = vmatpush1.msra.mxu0 0.0
        %1883 = vmatprep.subr.mxu0 0.0
        %1884 = vmatpush1.msra.mxu0 0.0
        %1885 = vmatprep.subr.mxu0 0.0
        %1886 = vmatpush1.msra.mxu0 0.0
        %1887 = vmatprep.subr.mxu0 0.0
        %1888 = vmatpush1.msra.mxu0 0.0
        %1889 = vmatprep.subr.mxu0 0.0
        %1890 = vmatpush1.msra.mxu0 0.0
        %1891 = vmatprep.subr.mxu0 0.0
        %1892 = vmatpush1.msra.mxu0 0.0
        %1893 = vmatprep.subr.mxu0 0.0
        %1894 = vmatpush1.msra.mxu0 0.0
        %1895 = vmatprep.subr.mxu0 0.0
        %1896 = vmatpush1.msra.mxu0 0.0
        %1897 = vmatprep.subr.mxu0 0.0
        %1898 = vmatpush1.msra.mxu0 0.0
        %1899 = vmatprep.mubr.f32.mxu0 0.0
        %1900 = vmatmul.mubr.f32.gmra.mrb[0].mxu0 %v1737
        %v1901 = vpop.f32.mrb[0].mxu0
        %v1902 = vadd.f32 0.0, %v1901
        %v1903 = vpop.f32.mrb[0].mxu0
        %1904 = vmatprep.mubr.f32.mxu0 0.0
        %1905 = vmatmul.mubr.f32.gmra.mrb[0].mxu0 %v1740
        %v1906 = vpop.f32.mrb[0].mxu0
        %v1907 = vadd.f32 0.0, %v1906
        %v1908 = vpop.f32.mrb[0].mxu0
        %1909 = vmatprep.mubr.f32.mxu0 0.0
        %1910 = vmatmul.mubr.f32.gmra.mrb[0].mxu0 %v1743
        %v1911 = vpop.f32.mrb[0].mxu0
        %v1912 = vadd.f32 0.0, %v1911
        %v1913 = vpop.f32.mrb[0].mxu0
        %1914 = vmatprep.mubr.f32.mxu0 0.0
        %1915 = vmatmul.mubr.f32.gmra.mrb[0].mxu0 %v1746
        %v1916 = vpop.f32.mrb[0].mxu0
        %v1917 = vadd.f32 0.0, %v1916
        %v1918 = vpop.f32.mrb[0].mxu0
        %1919 = vmatprep.mubr.f32.mxu0 0.0
        %1920 = vmatmul.mubr.f32.gmra.mrb[0].mxu0 %v1749
        %v1921 = vpop.f32.mrb[0].mxu0
        %v1922 = vadd.f32 0.0, %v1921
        %v1923 = vpop.f32.mrb[0].mxu0
        %1924 = vmatprep.mubr.f32.mxu0 0.0
        %1925 = vmatmul.mubr.f32.gmra.mrb[0].mxu0 %v1752
        %v1926 = vpop.f32.mrb[0].mxu0
        %v1927 = vadd.f32 0.0, %v1926
        %v1928 = vpop.f32.mrb[0].mxu0
        %1929 = vmatprep.mubr.f32.mxu0 0.0
        %1930 = vmatmul.mubr.f32.gmra.mrb[0].mxu0 %v1755
        %v1931 = vpop.f32.mrb[0].mxu0
        %v1932 = vadd.f32 0.0, %v1931
        %v1933 = vpop.f32.mrb[0].mxu0
        %1934 = vmatprep.mubr.f32.mxu0 0.0
        %1935 = vmatmul.mubr.f32.gmra.mrb[0].mxu0 %v1758
        %v1936 = vpop.f32.mrb[0].mxu0
        %v1937 = vadd.f32 0.0, %v1936
        %v1938 = vpop.f32.mrb[0].mxu0
        %1939 = vmatprep.mubr.f32.mxu0 0.0
        %1940 = vmatmul.mubr.f32.gmra.mrb[0].mxu0 %v1761
        %v1941 = vpop.f32.mrb[0].mxu0
        %v1942 = vadd.f32 0.0, %v1941
        %v1943 = vpop.f32.mrb[0].mxu0
        %1944 = vmatprep.mubr.f32.mxu0 0.0
        %1945 = vmatmul.mubr.f32.gmra.mrb[0].mxu0 %v1764
        %v1946 = vpop.f32.mrb[0].mxu0
        %v1947 = vadd.f32 0.0, %v1946
        %v1948 = vpop.f32.mrb[0].mxu0
        %1949 = vmatprep.mubr.f32.mxu0 0.0
        %1950 = vmatmul.mubr.f32.gmra.mrb[0].mxu0 %v1767
        %v1951 = vpop.f32.mrb[0].mxu0
        %v1952 = vadd.f32 0.0, %v1951
        %v1953 = vpop.f32.mrb[0].mxu0
        %1954 = vmatprep.mubr.f32.mxu0 0.0
        %1955 = vmatmul.mubr.f32.gmra.mrb[0].mxu0 %v1770
        %v1956 = vpop.f32.mrb[0].mxu0
        %v1957 = vadd.f32 0.0, %v1956
        %v1958 = vpop.f32.mrb[0].mxu0
        %1959 = vmatprep.mubr.f32.mxu0 0.0
        %1960 = vmatmul.mubr.f32.gmra.mrb[0].mxu0 %v1773
        %v1961 = vpop.f32.mrb[0].mxu0
        %v1962 = vadd.f32 0.0, %v1961
        %v1963 = vpop.f32.mrb[0].mxu0
        %1964 = vmatprep.mubr.f32.mxu0 0.0
        %1965 = vmatmul.mubr.f32.gmra.mrb[0].mxu0 %v1776
        %v1966 = vpop.f32.mrb[0].mxu0
        %v1967 = vadd.f32 0.0, %v1966
        %v1968 = vpop.f32.mrb[0].mxu0
        %1969 = vmatprep.mubr.f32.mxu0 0.0
        %1970 = vmatmul.mubr.f32.gmra.mrb[0].mxu0 %v1779
        %v1971 = vpop.f32.mrb[0].mxu0
        %v1972 = vadd.f32 0.0, %v1971
        %v1973 = vpop.f32.mrb[0].mxu0
        %1974 = vmatprep.mubr.f32.mxu0 0.0
        %1975 = vmatmul.mubr.f32.gmra.mrb[0].mxu0 %v1782
        %v1976 = vpop.f32.mrb[0].mxu0
        %v1977 = vadd.f32 0.0, %v1976
        %v1978 = vpop.f32.mrb[0].mxu0
        %1979 = vmatprep.mubr.f32.mxu0 0.0
        %1980 = vmatmul.mubr.f32.gmra.mrb[0].mxu0 %v1785
        %v1981 = vpop.f32.mrb[0].mxu0
        %v1982 = vadd.f32 0.0, %v1981
        %v1983 = vpop.f32.mrb[0].mxu0
        %1984 = vmatprep.mubr.f32.mxu0 0.0
        %1985 = vmatmul.mubr.f32.gmra.mrb[0].mxu0 %v1788
        %v1986 = vpop.f32.mrb[0].mxu0
        %v1987 = vadd.f32 0.0, %v1986
        %v1988 = vpop.f32.mrb[0].mxu0
        %1989 = vmatprep.mubr.f32.mxu0 0.0
        %1990 = vmatmul.mubr.f32.gmra.mrb[0].mxu0 %v1791
        %v1991 = vpop.f32.mrb[0].mxu0
        %v1992 = vadd.f32 0.0, %v1991
        %v1993 = vpop.f32.mrb[0].mxu0
        %1994 = vmatprep.mubr.f32.mxu0 0.0
        %1995 = vmatmul.mubr.f32.gmra.mrb[0].mxu0 %v1794
        %v1996 = vpop.f32.mrb[0].mxu0
        %v1997 = vadd.f32 0.0, %v1996
        %v1998 = vpop.f32.mrb[0].mxu0
        %1999 = vmatprep.mubr.f32.mxu0 0.0
        %2000 = vmatmul.mubr.f32.gmra.mrb[0].mxu0 %v1797
        %v2001 = vpop.f32.mrb[0].mxu0
        %v2002 = vadd.f32 0.0, %v2001
        %v2003 = vpop.f32.mrb[0].mxu0
        %2004 = vmatprep.mubr.f32.mxu0 0.0
        %2005 = vmatmul.mubr.f32.gmra.mrb[0].mxu0 %v1800
        %v2006 = vpop.f32.mrb[0].mxu0
        %v2007 = vadd.f32 0.0, %v2006
        %v2008 = vpop.f32.mrb[0].mxu0
        %2009 = vmatprep.mubr.f32.mxu0 0.0
        %2010 = vmatmul.mubr.f32.gmra.mrb[0].mxu0 %v1803
        %v2011 = vpop.f32.mrb[0].mxu0
        %v2012 = vadd.f32 0.0, %v2011
        %v2013 = vpop.f32.mrb[0].mxu0
        %2014 = vmatprep.mubr.f32.mxu0 0.0
        %2015 = vmatmul.mubr.f32.gmra.mrb[0].mxu0 %v1806
        %v2016 = vpop.f32.mrb[0].mxu0
        %v2017 = vadd.f32 0.0, %v2016
        %v2018 = vpop.f32.mrb[0].mxu0
        %2019 = vmatprep.mubr.f32.mxu0 0.0
        %2020 = vmatmul.mubr.f32.gmra.mrb[0].mxu0 %v1809
        %v2021 = vpop.f32.mrb[0].mxu0
        %v2022 = vadd.f32 0.0, %v2021
        %v2023 = vpop.f32.mrb[0].mxu0
        %2024 = vmatprep.mubr.f32.mxu0 0.0
        %2025 = vmatmul.mubr.f32.gmra.mrb[0].mxu0 %v1812
        %v2026 = vpop.f32.mrb[0].mxu0
        %v2027 = vadd.f32 0.0, %v2026
        %v2028 = vpop.f32.mrb[0].mxu0
        %2029 = vmatprep.mubr.f32.mxu0 0.0
        %2030 = vmatmul.mubr.f32.gmra.mrb[0].mxu0 %v1815
        %v2031 = vpop.f32.mrb[0].mxu0
        %v2032 = vadd.f32 0.0, %v2031
        %v2033 = vpop.f32.mrb[0].mxu0
        %2034 = vmatprep.mubr.f32.mxu0 0.0
        %2035 = vmatmul.mubr.f32.gmra.mrb[0].mxu0 %v1818
        %v2036 = vpop.f32.mrb[0].mxu0
        %v2037 = vadd.f32 0.0, %v2036
        %v2038 = vpop.f32.mrb[0].mxu0
        %2039 = vmatprep.mubr.f32.mxu0 0.0
        %2040 = vmatmul.mubr.f32.gmra.mrb[0].mxu0 %v1821
        %v2041 = vpop.f32.mrb[0].mxu0
        %v2042 = vadd.f32 0.0, %v2041
        %v2043 = vpop.f32.mrb[0].mxu0
        %2044 = vmatprep.mubr.f32.mxu0 0.0
        %2045 = vmatmul.mubr.f32.gmra.mrb[0].mxu0 %v1824
        %v2046 = vpop.f32.mrb[0].mxu0
        %v2047 = vadd.f32 0.0, %v2046
        %v2048 = vpop.f32.mrb[0].mxu0
        %2049 = vmatprep.mubr.f32.mxu0 0.0
        %2050 = vmatmul.mubr.f32.gmra.mrb[0].mxu0 %v1827
        %v2051 = vpop.f32.mrb[0].mxu0
        %v2052 = vadd.f32 0.0, %v2051
        %v2053 = vpop.f32.mrb[0].mxu0
        %2054 = vmatprep.mubr.f32.mxu0 0.0
        %2055 = vmatmul.mubr.f32.gmra.mrb[0].mxu0 %v1830
        %v2056 = vpop.f32.mrb[0].mxu0
        %v2057 = vadd.f32 0.0, %v2056
        %v2058 = vpop.f32.mrb[0].mxu0
        %2059 = vdwg.mxu0
        %v2060 = vadd.f32 %v1670, %v1902
        %v2061 = vadd.f32 %v1671, %v1907
        %v2062 = vadd.f32 %v1672, %v1912
        %v2063 = vadd.f32 %v1673, %v1917
        %v2064 = vadd.f32 %v1674, %v1922
        %v2065 = vadd.f32 %v1675, %v1927
        %v2066 = vadd.f32 %v1676, %v1932
        %v2067 = vadd.f32 %v1677, %v1937
        %v2068 = vadd.f32 %v1678, %v1942
        %v2069 = vadd.f32 %v1679, %v1947
        %v2070 = vadd.f32 %v1680, %v1952
        %v2071 = vadd.f32 %v1681, %v1957
        %v2072 = vadd.f32 %v1682, %v1962
        %v2073 = vadd.f32 %v1683, %v1967
        %v2074 = vadd.f32 %v1684, %v1972
        %v2075 = vadd.f32 %v1685, %v1977
        %v2076 = vadd.f32 %v1686, %v1982
        %v2077 = vadd.f32 %v1687, %v1987
        %v2078 = vadd.f32 %v1688, %v1992
        %v2079 = vadd.f32 %v1689, %v1997
        %v2080 = vadd.f32 %v1690, %v2002
        %v2081 = vadd.f32 %v1691, %v2007
        %v2082 = vadd.f32 %v1692, %v2012
        %v2083 = vadd.f32 %v1693, %v2017
        %v2084 = vadd.f32 %v1694, %v2022
        %v2085 = vadd.f32 %v1695, %v2027
        %v2086 = vadd.f32 %v1696, %v2032
        %v2087 = vadd.f32 %v1697, %v2037
        %v2088 = vadd.f32 %v1698, %v2042
        %v2089 = vadd.f32 %v1699, %v2047
        %v2090 = vadd.f32 %v1700, %v2052
        %v2091 = vadd.f32 %v1701, %v2057
        %v2092 = vld [vmem:[%s1311 + $0x2] sm:$0xff]
        %v2093 = vld [vmem:[%s1311 + $0xa] sm:$0xff]
        %v2094 = vld [vmem:[%s1311 + $0x1a] sm:$0xff]
        %v2095 = vld [vmem:[%s1311 + $0x22] sm:$0xff]
        %v2096 = vld [vmem:[%s1311 + $0x32] sm:$0xff]
        %v2097 = vld [vmem:[%s1311 + $0x3a] sm:$0xff]
        %v2098 = vld [vmem:[%s1311 + $0x4a] sm:$0xff]
        %v2099 = vld [vmem:[%s1311 + $0x52] sm:$0xff]
        %v2100 = vld [vmem:[%s1311 + $0x62] sm:$0xff]
        %v2101 = vld [vmem:[%s1311 + $0x6a] sm:$0xff]
        %v2102 = vld [vmem:[%s1311 + $0x7a] sm:$0xff]
        %v2103 = vld [vmem:[%s1311 + $0x82] sm:$0xff]
        %v2104 = vld [vmem:[%s1311 + $0x92] sm:$0xff]
        %v2105 = vld [vmem:[%s1311 + $0x9a] sm:$0xff]
        %v2106 = vld [vmem:[%s1311 + $0xaa] sm:$0xff]
        %v2107 = vld [vmem:[%s1311 + $0xb2] sm:$0xff]
        %v2108 = vld [vmem:[%s1311 + $0xc2] sm:$0xff]
        %v2109 = vld [vmem:[%s1311 + $0xca] sm:$0xff]
        %v2110 = vld [vmem:[%s1311 + $0xda] sm:$0xff]
        %v2111 = vld [vmem:[%s1311 + $0xe2] sm:$0xff]
        %v2112 = vld [vmem:[%s1311 + $0xf2] sm:$0xff]
        %v2113 = vld [vmem:[%s1311 + $0xfa] sm:$0xff]
        %v2114 = vld [vmem:[%s1311 + $0x10a] sm:$0xff]
        %v2115 = vld [vmem:[%s1311 + $0x112] sm:$0xff]
        %v2116 = vld [vmem:[%s1311 + $0x122] sm:$0xff]
        %v2117 = vld [vmem:[%s1311 + $0x12a] sm:$0xff]
        %v2118 = vld [vmem:[%s1311 + $0x13a] sm:$0xff]
        %v2119 = vld [vmem:[%s1311 + $0x142] sm:$0xff]
        %v2120 = vld [vmem:[%s1311 + $0x152] sm:$0xff]
        %v2121 = vld [vmem:[%s1311 + $0x15a] sm:$0xff]
        %v2122 = vld [vmem:[%s1311 + $0x16a] sm:$0xff]
        %v2123 = vld [vmem:[%s1311 + $0x172] sm:$0xff]
        %s2124 = scalar_lea.vmem %s1, 20
        %v2125 = vld [vmem:[%s2124] sm:$0xf]
        %v2127 = vsel %vm269, %v2092, 0
        %v2130 = vsel %vm269, %v2093, 0
        %v2133 = vsel %vm269, %v2094, 0
        %v2136 = vsel %vm269, %v2095, 0
        %v2139 = vsel %vm269, %v2096, 0
        %v2142 = vsel %vm269, %v2097, 0
        %v2145 = vsel %vm269, %v2098, 0
        %v2148 = vsel %vm269, %v2099, 0
        %v2151 = vsel %vm269, %v2100, 0
        %v2154 = vsel %vm269, %v2101, 0
        %v2157 = vsel %vm269, %v2102, 0
        %v2160 = vsel %vm269, %v2103, 0
        %v2163 = vsel %vm269, %v2104, 0
        %v2166 = vsel %vm269, %v2105, 0
        %v2169 = vsel %vm269, %v2106, 0
        %v2172 = vsel %vm269, %v2107, 0
        %v2175 = vsel %vm269, %v2108, 0
        %v2178 = vsel %vm269, %v2109, 0
        %v2181 = vsel %vm269, %v2110, 0
        %v2184 = vsel %vm269, %v2111, 0
        %v2187 = vsel %vm269, %v2112, 0
        %v2190 = vsel %vm269, %v2113, 0
        %v2193 = vsel %vm269, %v2114, 0
        %v2196 = vsel %vm269, %v2115, 0
        %v2199 = vsel %vm269, %v2116, 0
        %v2202 = vsel %vm269, %v2117, 0
        %v2205 = vsel %vm269, %v2118, 0
        %v2208 = vsel %vm269, %v2119, 0
        %v2211 = vsel %vm269, %v2120, 0
        %v2214 = vsel %vm269, %v2121, 0
        %v2217 = vsel %vm269, %v2122, 0
        %v2220 = vsel %vm269, %v2123, 0
        %v2223 = vsel %vm366, %v2125, 0
        %2225 = vmatprep.subr.mxu0 0.0
        %2226 = vmatpush1.msra.mxu0 %v2223
        %2227 = vmatprep.subr.mxu0 0.0
        %2228 = vmatpush1.msra.mxu0 0.0
        %2229 = vmatprep.subr.mxu0 0.0
        %2230 = vmatpush1.msra.mxu0 0.0
        %2231 = vmatprep.subr.mxu0 0.0
        %2232 = vmatpush1.msra.mxu0 0.0
        %2233 = vmatprep.subr.mxu0 0.0
        %2234 = vmatpush1.msra.mxu0 0.0
        %2235 = vmatprep.subr.mxu0 0.0
        %2236 = vmatpush1.msra.mxu0 0.0
        %2237 = vmatprep.subr.mxu0 0.0
        %2238 = vmatpush1.msra.mxu0 0.0
        %2239 = vmatprep.subr.mxu0 0.0
        %2240 = vmatpush1.msra.mxu0 0.0
        %2241 = vmatprep.subr.mxu0 0.0
        %2242 = vmatpush1.msra.mxu0 0.0
        %2243 = vmatprep.subr.mxu0 0.0
        %2244 = vmatpush1.msra.mxu0 0.0
        %2245 = vmatprep.subr.mxu0 0.0
        %2246 = vmatpush1.msra.mxu0 0.0
        %2247 = vmatprep.subr.mxu0 0.0
        %2248 = vmatpush1.msra.mxu0 0.0
        %2249 = vmatprep.subr.mxu0 0.0
        %2250 = vmatpush1.msra.mxu0 0.0
        %2251 = vmatprep.subr.mxu0 0.0
        %2252 = vmatpush1.msra.mxu0 0.0
        %2253 = vmatprep.subr.mxu0 0.0
        %2254 = vmatpush1.msra.mxu0 0.0
        %2255 = vmatprep.subr.mxu0 0.0
        %2256 = vmatpush1.msra.mxu0 0.0
        %2257 = vmatprep.subr.mxu0 0.0
        %2258 = vmatpush1.msra.mxu0 0.0
        %2259 = vmatprep.subr.mxu0 0.0
        %2260 = vmatpush1.msra.mxu0 0.0
        %2261 = vmatprep.subr.mxu0 0.0
        %2262 = vmatpush1.msra.mxu0 0.0
        %2263 = vmatprep.subr.mxu0 0.0
        %2264 = vmatpush1.msra.mxu0 0.0
        %2265 = vmatprep.subr.mxu0 0.0
        %2266 = vmatpush1.msra.mxu0 0.0
        %2267 = vmatprep.subr.mxu0 0.0
        %2268 = vmatpush1.msra.mxu0 0.0
        %2269 = vmatprep.subr.mxu0 0.0
        %2270 = vmatpush1.msra.mxu0 0.0
        %2271 = vmatprep.subr.mxu0 0.0
        %2272 = vmatpush1.msra.mxu0 0.0
        %2273 = vmatprep.subr.mxu0 0.0
        %2274 = vmatpush1.msra.mxu0 0.0
        %2275 = vmatprep.subr.mxu0 0.0
        %2276 = vmatpush1.msra.mxu0 0.0
        %2277 = vmatprep.subr.mxu0 0.0
        %2278 = vmatpush1.msra.mxu0 0.0
        %2279 = vmatprep.subr.mxu0 0.0
        %2280 = vmatpush1.msra.mxu0 0.0
        %2281 = vmatprep.subr.mxu0 0.0
        %2282 = vmatpush1.msra.mxu0 0.0
        %2283 = vmatprep.subr.mxu0 0.0
        %2284 = vmatpush1.msra.mxu0 0.0
        %2285 = vmatprep.subr.mxu0 0.0
        %2286 = vmatpush1.msra.mxu0 0.0
        %2287 = vmatprep.subr.mxu0 0.0
        %2288 = vmatpush1.msra.mxu0 0.0
        %2289 = vmatprep.mubr.f32.mxu0 0.0
        %2290 = vmatmul.mubr.f32.gmra.mrb[0].mxu0 %v2127
        %v2291 = vpop.f32.mrb[0].mxu0
        %v2292 = vadd.f32 0.0, %v2291
        %v2293 = vpop.f32.mrb[0].mxu0
        %2294 = vmatprep.mubr.f32.mxu0 0.0
        %2295 = vmatmul.mubr.f32.gmra.mrb[0].mxu0 %v2130
        %v2296 = vpop.f32.mrb[0].mxu0
        %v2297 = vadd.f32 0.0, %v2296
        %v2298 = vpop.f32.mrb[0].mxu0
        %2299 = vmatprep.mubr.f32.mxu0 0.0
        %2300 = vmatmul.mubr.f32.gmra.mrb[0].mxu0 %v2133
        %v2301 = vpop.f32.mrb[0].mxu0
        %v2302 = vadd.f32 0.0, %v2301
        %v2303 = vpop.f32.mrb[0].mxu0
        %2304 = vmatprep.mubr.f32.mxu0 0.0
        %2305 = vmatmul.mubr.f32.gmra.mrb[0].mxu0 %v2136
        %v2306 = vpop.f32.mrb[0].mxu0
        %v2307 = vadd.f32 0.0, %v2306
        %v2308 = vpop.f32.mrb[0].mxu0
        %2309 = vmatprep.mubr.f32.mxu0 0.0
        %2310 = vmatmul.mubr.f32.gmra.mrb[0].mxu0 %v2139
        %v2311 = vpop.f32.mrb[0].mxu0
        %v2312 = vadd.f32 0.0, %v2311
        %v2313 = vpop.f32.mrb[0].mxu0
        %2314 = vmatprep.mubr.f32.mxu0 0.0
        %2315 = vmatmul.mubr.f32.gmra.mrb[0].mxu0 %v2142
        %v2316 = vpop.f32.mrb[0].mxu0
        %v2317 = vadd.f32 0.0, %v2316
        %v2318 = vpop.f32.mrb[0].mxu0
        %2319 = vmatprep.mubr.f32.mxu0 0.0
        %2320 = vmatmul.mubr.f32.gmra.mrb[0].mxu0 %v2145
        %v2321 = vpop.f32.mrb[0].mxu0
        %v2322 = vadd.f32 0.0, %v2321
        %v2323 = vpop.f32.mrb[0].mxu0
        %2324 = vmatprep.mubr.f32.mxu0 0.0
        %2325 = vmatmul.mubr.f32.gmra.mrb[0].mxu0 %v2148
        %v2326 = vpop.f32.mrb[0].mxu0
        %v2327 = vadd.f32 0.0, %v2326
        %v2328 = vpop.f32.mrb[0].mxu0
        %2329 = vmatprep.mubr.f32.mxu0 0.0
        %2330 = vmatmul.mubr.f32.gmra.mrb[0].mxu0 %v2151
        %v2331 = vpop.f32.mrb[0].mxu0
        %v2332 = vadd.f32 0.0, %v2331
        %v2333 = vpop.f32.mrb[0].mxu0
        %2334 = vmatprep.mubr.f32.mxu0 0.0
        %2335 = vmatmul.mubr.f32.gmra.mrb[0].mxu0 %v2154
        %v2336 = vpop.f32.mrb[0].mxu0
        %v2337 = vadd.f32 0.0, %v2336
        %v2338 = vpop.f32.mrb[0].mxu0
        %2339 = vmatprep.mubr.f32.mxu0 0.0
        %2340 = vmatmul.mubr.f32.gmra.mrb[0].mxu0 %v2157
        %v2341 = vpop.f32.mrb[0].mxu0
        %v2342 = vadd.f32 0.0, %v2341
        %v2343 = vpop.f32.mrb[0].mxu0
        %2344 = vmatprep.mubr.f32.mxu0 0.0
        %2345 = vmatmul.mubr.f32.gmra.mrb[0].mxu0 %v2160
        %v2346 = vpop.f32.mrb[0].mxu0
        %v2347 = vadd.f32 0.0, %v2346
        %v2348 = vpop.f32.mrb[0].mxu0
        %2349 = vmatprep.mubr.f32.mxu0 0.0
        %2350 = vmatmul.mubr.f32.gmra.mrb[0].mxu0 %v2163
        %v2351 = vpop.f32.mrb[0].mxu0
        %v2352 = vadd.f32 0.0, %v2351
        %v2353 = vpop.f32.mrb[0].mxu0
        %2354 = vmatprep.mubr.f32.mxu0 0.0
        %2355 = vmatmul.mubr.f32.gmra.mrb[0].mxu0 %v2166
        %v2356 = vpop.f32.mrb[0].mxu0
        %v2357 = vadd.f32 0.0, %v2356
        %v2358 = vpop.f32.mrb[0].mxu0
        %2359 = vmatprep.mubr.f32.mxu0 0.0
        %2360 = vmatmul.mubr.f32.gmra.mrb[0].mxu0 %v2169
        %v2361 = vpop.f32.mrb[0].mxu0
        %v2362 = vadd.f32 0.0, %v2361
        %v2363 = vpop.f32.mrb[0].mxu0
        %2364 = vmatprep.mubr.f32.mxu0 0.0
        %2365 = vmatmul.mubr.f32.gmra.mrb[0].mxu0 %v2172
        %v2366 = vpop.f32.mrb[0].mxu0
        %v2367 = vadd.f32 0.0, %v2366
        %v2368 = vpop.f32.mrb[0].mxu0
        %2369 = vmatprep.mubr.f32.mxu0 0.0
        %2370 = vmatmul.mubr.f32.gmra.mrb[0].mxu0 %v2175
        %v2371 = vpop.f32.mrb[0].mxu0
        %v2372 = vadd.f32 0.0, %v2371
        %v2373 = vpop.f32.mrb[0].mxu0
        %2374 = vmatprep.mubr.f32.mxu0 0.0
        %2375 = vmatmul.mubr.f32.gmra.mrb[0].mxu0 %v2178
        %v2376 = vpop.f32.mrb[0].mxu0
        %v2377 = vadd.f32 0.0, %v2376
        %v2378 = vpop.f32.mrb[0].mxu0
        %2379 = vmatprep.mubr.f32.mxu0 0.0
        %2380 = vmatmul.mubr.f32.gmra.mrb[0].mxu0 %v2181
        %v2381 = vpop.f32.mrb[0].mxu0
        %v2382 = vadd.f32 0.0, %v2381
        %v2383 = vpop.f32.mrb[0].mxu0
        %2384 = vmatprep.mubr.f32.mxu0 0.0
        %2385 = vmatmul.mubr.f32.gmra.mrb[0].mxu0 %v2184
        %v2386 = vpop.f32.mrb[0].mxu0
        %v2387 = vadd.f32 0.0, %v2386
        %v2388 = vpop.f32.mrb[0].mxu0
        %2389 = vmatprep.mubr.f32.mxu0 0.0
        %2390 = vmatmul.mubr.f32.gmra.mrb[0].mxu0 %v2187
        %v2391 = vpop.f32.mrb[0].mxu0
        %v2392 = vadd.f32 0.0, %v2391
        %v2393 = vpop.f32.mrb[0].mxu0
        %2394 = vmatprep.mubr.f32.mxu0 0.0
        %2395 = vmatmul.mubr.f32.gmra.mrb[0].mxu0 %v2190
        %v2396 = vpop.f32.mrb[0].mxu0
        %v2397 = vadd.f32 0.0, %v2396
        %v2398 = vpop.f32.mrb[0].mxu0
        %2399 = vmatprep.mubr.f32.mxu0 0.0
        %2400 = vmatmul.mubr.f32.gmra.mrb[0].mxu0 %v2193
        %v2401 = vpop.f32.mrb[0].mxu0
        %v2402 = vadd.f32 0.0, %v2401
        %v2403 = vpop.f32.mrb[0].mxu0
        %2404 = vmatprep.mubr.f32.mxu0 0.0
        %2405 = vmatmul.mubr.f32.gmra.mrb[0].mxu0 %v2196
        %v2406 = vpop.f32.mrb[0].mxu0
        %v2407 = vadd.f32 0.0, %v2406
        %v2408 = vpop.f32.mrb[0].mxu0
        %2409 = vmatprep.mubr.f32.mxu0 0.0
        %2410 = vmatmul.mubr.f32.gmra.mrb[0].mxu0 %v2199
        %v2411 = vpop.f32.mrb[0].mxu0
        %v2412 = vadd.f32 0.0, %v2411
        %v2413 = vpop.f32.mrb[0].mxu0
        %2414 = vmatprep.mubr.f32.mxu0 0.0
        %2415 = vmatmul.mubr.f32.gmra.mrb[0].mxu0 %v2202
        %v2416 = vpop.f32.mrb[0].mxu0
        %v2417 = vadd.f32 0.0, %v2416
        %v2418 = vpop.f32.mrb[0].mxu0
        %2419 = vmatprep.mubr.f32.mxu0 0.0
        %2420 = vmatmul.mubr.f32.gmra.mrb[0].mxu0 %v2205
        %v2421 = vpop.f32.mrb[0].mxu0
        %v2422 = vadd.f32 0.0, %v2421
        %v2423 = vpop.f32.mrb[0].mxu0
        %2424 = vmatprep.mubr.f32.mxu0 0.0
        %2425 = vmatmul.mubr.f32.gmra.mrb[0].mxu0 %v2208
        %v2426 = vpop.f32.mrb[0].mxu0
        %v2427 = vadd.f32 0.0, %v2426
        %v2428 = vpop.f32.mrb[0].mxu0
        %2429 = vmatprep.mubr.f32.mxu0 0.0
        %2430 = vmatmul.mubr.f32.gmra.mrb[0].mxu0 %v2211
        %v2431 = vpop.f32.mrb[0].mxu0
        %v2432 = vadd.f32 0.0, %v2431
        %v2433 = vpop.f32.mrb[0].mxu0
        %2434 = vmatprep.mubr.f32.mxu0 0.0
        %2435 = vmatmul.mubr.f32.gmra.mrb[0].mxu0 %v2214
        %v2436 = vpop.f32.mrb[0].mxu0
        %v2437 = vadd.f32 0.0, %v2436
        %v2438 = vpop.f32.mrb[0].mxu0
        %2439 = vmatprep.mubr.f32.mxu0 0.0
        %2440 = vmatmul.mubr.f32.gmra.mrb[0].mxu0 %v2217
        %v2441 = vpop.f32.mrb[0].mxu0
        %v2442 = vadd.f32 0.0, %v2441
        %v2443 = vpop.f32.mrb[0].mxu0
        %2444 = vmatprep.mubr.f32.mxu0 0.0
        %2445 = vmatmul.mubr.f32.gmra.mrb[0].mxu0 %v2220
        %v2446 = vpop.f32.mrb[0].mxu0
        %v2447 = vadd.f32 0.0, %v2446
        %v2448 = vpop.f32.mrb[0].mxu0
        %2449 = vdwg.mxu0
        %v2450 = vadd.f32 %v2060, %v2292
        %v2451 = vadd.f32 %v2061, %v2297
        %v2452 = vadd.f32 %v2062, %v2302
        %v2453 = vadd.f32 %v2063, %v2307
        %v2454 = vadd.f32 %v2064, %v2312
        %v2455 = vadd.f32 %v2065, %v2317
        %v2456 = vadd.f32 %v2066, %v2322
        %v2457 = vadd.f32 %v2067, %v2327
        %v2458 = vadd.f32 %v2068, %v2332
        %v2459 = vadd.f32 %v2069, %v2337
        %v2460 = vadd.f32 %v2070, %v2342
        %v2461 = vadd.f32 %v2071, %v2347
        %v2462 = vadd.f32 %v2072, %v2352
        %v2463 = vadd.f32 %v2073, %v2357
        %v2464 = vadd.f32 %v2074, %v2362
        %v2465 = vadd.f32 %v2075, %v2367
        %v2466 = vadd.f32 %v2076, %v2372
        %v2467 = vadd.f32 %v2077, %v2377
        %v2468 = vadd.f32 %v2078, %v2382
        %v2469 = vadd.f32 %v2079, %v2387
        %v2470 = vadd.f32 %v2080, %v2392
        %v2471 = vadd.f32 %v2081, %v2397
        %v2472 = vadd.f32 %v2082, %v2402
        %v2473 = vadd.f32 %v2083, %v2407
        %v2474 = vadd.f32 %v2084, %v2412
        %v2475 = vadd.f32 %v2085, %v2417
        %v2476 = vadd.f32 %v2086, %v2422
        %v2477 = vadd.f32 %v2087, %v2427
        %v2478 = vadd.f32 %v2088, %v2432
        %v2479 = vadd.f32 %v2089, %v2437
        %v2480 = vadd.f32 %v2090, %v2442
        %v2481 = vadd.f32 %v2091, %v2447
        %s2482 = sadd.s32 %s199, 2
        %s2483 = smul.u32 %s2482, 24
        %s2484 = scalar_lea.vmem %s195, %s2483
        %v2485 = vld [vmem:[%s2484] sm:$0xff]
        %v2486 = vld [vmem:[%s2484 + $0x8] sm:$0xff]
        %v2487 = vld [vmem:[%s2484 + $0x18] sm:$0xff]
        %v2488 = vld [vmem:[%s2484 + $0x20] sm:$0xff]
        %v2489 = vld [vmem:[%s2484 + $0x30] sm:$0xff]
        %v2490 = vld [vmem:[%s2484 + $0x38] sm:$0xff]
        %v2491 = vld [vmem:[%s2484 + $0x48] sm:$0xff]
        %v2492 = vld [vmem:[%s2484 + $0x50] sm:$0xff]
        %v2493 = vld [vmem:[%s2484 + $0x60] sm:$0xff]
        %v2494 = vld [vmem:[%s2484 + $0x68] sm:$0xff]
        %v2495 = vld [vmem:[%s2484 + $0x78] sm:$0xff]
        %v2496 = vld [vmem:[%s2484 + $0x80] sm:$0xff]
        %v2497 = vld [vmem:[%s2484 + $0x90] sm:$0xff]
        %v2498 = vld [vmem:[%s2484 + $0x98] sm:$0xff]
        %v2499 = vld [vmem:[%s2484 + $0xa8] sm:$0xff]
        %v2500 = vld [vmem:[%s2484 + $0xb0] sm:$0xff]
        %v2501 = vld [vmem:[%s2484 + $0xc0] sm:$0xff]
        %v2502 = vld [vmem:[%s2484 + $0xc8] sm:$0xff]
        %v2503 = vld [vmem:[%s2484 + $0xd8] sm:$0xff]
        %v2504 = vld [vmem:[%s2484 + $0xe0] sm:$0xff]
        %v2505 = vld [vmem:[%s2484 + $0xf0] sm:$0xff]
        %v2506 = vld [vmem:[%s2484 + $0xf8] sm:$0xff]
        %v2507 = vld [vmem:[%s2484 + $0x108] sm:$0xff]
        %v2508 = vld [vmem:[%s2484 + $0x110] sm:$0xff]
        %v2509 = vld [vmem:[%s2484 + $0x120] sm:$0xff]
        %v2510 = vld [vmem:[%s2484 + $0x128] sm:$0xff]
        %v2511 = vld [vmem:[%s2484 + $0x138] sm:$0xff]
        %v2512 = vld [vmem:[%s2484 + $0x140] sm:$0xff]
        %v2513 = vld [vmem:[%s2484 + $0x150] sm:$0xff]
        %v2514 = vld [vmem:[%s2484 + $0x158] sm:$0xff]
        %v2515 = vld [vmem:[%s2484 + $0x168] sm:$0xff]
        %v2516 = vld [vmem:[%s2484 + $0x170] sm:$0xff]
        %s2517 = scalar_lea.vmem %s1, 24
        %v2518 = vld [vmem:[%s2517] sm:$0xf]
        %v2520 = vsel %vm269, %v2485, 0
        %v2523 = vsel %vm269, %v2486, 0
        %v2526 = vsel %vm269, %v2487, 0
        %v2529 = vsel %vm269, %v2488, 0
        %v2532 = vsel %vm269, %v2489, 0
        %v2535 = vsel %vm269, %v2490, 0
        %v2538 = vsel %vm269, %v2491, 0
        %v2541 = vsel %vm269, %v2492, 0
        %v2544 = vsel %vm269, %v2493, 0
        %v2547 = vsel %vm269, %v2494, 0
        %v2550 = vsel %vm269, %v2495, 0
        %v2553 = vsel %vm269, %v2496, 0
        %v2556 = vsel %vm269, %v2497, 0
        %v2559 = vsel %vm269, %v2498, 0
        %v2562 = vsel %vm269, %v2499, 0
        %v2565 = vsel %vm269, %v2500, 0
        %v2568 = vsel %vm269, %v2501, 0
        %v2571 = vsel %vm269, %v2502, 0
        %v2574 = vsel %vm269, %v2503, 0
        %v2577 = vsel %vm269, %v2504, 0
        %v2580 = vsel %vm269, %v2505, 0
        %v2583 = vsel %vm269, %v2506, 0
        %v2586 = vsel %vm269, %v2507, 0
        %v2589 = vsel %vm269, %v2508, 0
        %v2592 = vsel %vm269, %v2509, 0
        %v2595 = vsel %vm269, %v2510, 0
        %v2598 = vsel %vm269, %v2511, 0
        %v2601 = vsel %vm269, %v2512, 0
        %v2604 = vsel %vm269, %v2513, 0
        %v2607 = vsel %vm269, %v2514, 0
        %v2610 = vsel %vm269, %v2515, 0
        %v2613 = vsel %vm269, %v2516, 0
        %v2616 = vsel %vm366, %v2518, 0
        %2618 = vmatprep.subr.mxu0 0.0
        %2619 = vmatpush1.msra.mxu0 %v2616
        %2620 = vmatprep.subr.mxu0 0.0
        %2621 = vmatpush1.msra.mxu0 0.0
        %2622 = vmatprep.subr.mxu0 0.0
        %2623 = vmatpush1.msra.mxu0 0.0
        %2624 = vmatprep.subr.mxu0 0.0
        %2625 = vmatpush1.msra.mxu0 0.0
        %2626 = vmatprep.subr.mxu0 0.0
        %2627 = vmatpush1.msra.mxu0 0.0
        %2628 = vmatprep.subr.mxu0 0.0
        %2629 = vmatpush1.msra.mxu0 0.0
        %2630 = vmatprep.subr.mxu0 0.0
        %2631 = vmatpush1.msra.mxu0 0.0
        %2632 = vmatprep.subr.mxu0 0.0
        %2633 = vmatpush1.msra.mxu0 0.0
        %2634 = vmatprep.subr.mxu0 0.0
        %2635 = vmatpush1.msra.mxu0 0.0
        %2636 = vmatprep.subr.mxu0 0.0
        %2637 = vmatpush1.msra.mxu0 0.0
        %2638 = vmatprep.subr.mxu0 0.0
        %2639 = vmatpush1.msra.mxu0 0.0
        %2640 = vmatprep.subr.mxu0 0.0
        %2641 = vmatpush1.msra.mxu0 0.0
        %2642 = vmatprep.subr.mxu0 0.0
        %2643 = vmatpush1.msra.mxu0 0.0
        %2644 = vmatprep.subr.mxu0 0.0
        %2645 = vmatpush1.msra.mxu0 0.0
        %2646 = vmatprep.subr.mxu0 0.0
        %2647 = vmatpush1.msra.mxu0 0.0
        %2648 = vmatprep.subr.mxu0 0.0
        %2649 = vmatpush1.msra.mxu0 0.0
        %2650 = vmatprep.subr.mxu0 0.0
        %2651 = vmatpush1.msra.mxu0 0.0
        %2652 = vmatprep.subr.mxu0 0.0
        %2653 = vmatpush1.msra.mxu0 0.0
        %2654 = vmatprep.subr.mxu0 0.0
        %2655 = vmatpush1.msra.mxu0 0.0
        %2656 = vmatprep.subr.mxu0 0.0
        %2657 = vmatpush1.msra.mxu0 0.0
        %2658 = vmatprep.subr.mxu0 0.0
        %2659 = vmatpush1.msra.mxu0 0.0
        %2660 = vmatprep.subr.mxu0 0.0
        %2661 = vmatpush1.msra.mxu0 0.0
        %2662 = vmatprep.subr.mxu0 0.0
        %2663 = vmatpush1.msra.mxu0 0.0
        %2664 = vmatprep.subr.mxu0 0.0
        %2665 = vmatpush1.msra.mxu0 0.0
        %2666 = vmatprep.subr.mxu0 0.0
        %2667 = vmatpush1.msra.mxu0 0.0
        %2668 = vmatprep.subr.mxu0 0.0
        %2669 = vmatpush1.msra.mxu0 0.0
        %2670 = vmatprep.subr.mxu0 0.0
        %2671 = vmatpush1.msra.mxu0 0.0
        %2672 = vmatprep.subr.mxu0 0.0
        %2673 = vmatpush1.msra.mxu0 0.0
        %2674 = vmatprep.subr.mxu0 0.0
        %2675 = vmatpush1.msra.mxu0 0.0
        %2676 = vmatprep.subr.mxu0 0.0
        %2677 = vmatpush1.msra.mxu0 0.0
        %2678 = vmatprep.subr.mxu0 0.0
        %2679 = vmatpush1.msra.mxu0 0.0
        %2680 = vmatprep.subr.mxu0 0.0
        %2681 = vmatpush1.msra.mxu0 0.0
        %2682 = vmatprep.mubr.f32.mxu0 0.0
        %2683 = vmatmul.mubr.f32.gmra.mrb[0].mxu0 %v2520
        %v2684 = vpop.f32.mrb[0].mxu0
        %v2685 = vadd.f32 0.0, %v2684
        %v2686 = vpop.f32.mrb[0].mxu0
        %2687 = vmatprep.mubr.f32.mxu0 0.0
        %2688 = vmatmul.mubr.f32.gmra.mrb[0].mxu0 %v2523
        %v2689 = vpop.f32.mrb[0].mxu0
        %v2690 = vadd.f32 0.0, %v2689
        %v2691 = vpop.f32.mrb[0].mxu0
        %2692 = vmatprep.mubr.f32.mxu0 0.0
        %2693 = vmatmul.mubr.f32.gmra.mrb[0].mxu0 %v2526
        %v2694 = vpop.f32.mrb[0].mxu0
        %v2695 = vadd.f32 0.0, %v2694
        %v2696 = vpop.f32.mrb[0].mxu0
        %2697 = vmatprep.mubr.f32.mxu0 0.0
        %2698 = vmatmul.mubr.f32.gmra.mrb[0].mxu0 %v2529
        %v2699 = vpop.f32.mrb[0].mxu0
        %v2700 = vadd.f32 0.0, %v2699
        %v2701 = vpop.f32.mrb[0].mxu0
        %2702 = vmatprep.mubr.f32.mxu0 0.0
        %2703 = vmatmul.mubr.f32.gmra.mrb[0].mxu0 %v2532
        %v2704 = vpop.f32.mrb[0].mxu0
        %v2705 = vadd.f32 0.0, %v2704
        %v2706 = vpop.f32.mrb[0].mxu0
        %2707 = vmatprep.mubr.f32.mxu0 0.0
        %2708 = vmatmul.mubr.f32.gmra.mrb[0].mxu0 %v2535
        %v2709 = vpop.f32.mrb[0].mxu0
        %v2710 = vadd.f32 0.0, %v2709
        %v2711 = vpop.f32.mrb[0].mxu0
        %2712 = vmatprep.mubr.f32.mxu0 0.0
        %2713 = vmatmul.mubr.f32.gmra.mrb[0].mxu0 %v2538
        %v2714 = vpop.f32.mrb[0].mxu0
        %v2715 = vadd.f32 0.0, %v2714
        %v2716 = vpop.f32.mrb[0].mxu0
        %2717 = vmatprep.mubr.f32.mxu0 0.0
        %2718 = vmatmul.mubr.f32.gmra.mrb[0].mxu0 %v2541
        %v2719 = vpop.f32.mrb[0].mxu0
        %v2720 = vadd.f32 0.0, %v2719
        %v2721 = vpop.f32.mrb[0].mxu0
        %2722 = vmatprep.mubr.f32.mxu0 0.0
        %2723 = vmatmul.mubr.f32.gmra.mrb[0].mxu0 %v2544
        %v2724 = vpop.f32.mrb[0].mxu0
        %v2725 = vadd.f32 0.0, %v2724
        %v2726 = vpop.f32.mrb[0].mxu0
        %2727 = vmatprep.mubr.f32.mxu0 0.0
        %2728 = vmatmul.mubr.f32.gmra.mrb[0].mxu0 %v2547
        %v2729 = vpop.f32.mrb[0].mxu0
        %v2730 = vadd.f32 0.0, %v2729
        %v2731 = vpop.f32.mrb[0].mxu0
        %2732 = vmatprep.mubr.f32.mxu0 0.0
        %2733 = vmatmul.mubr.f32.gmra.mrb[0].mxu0 %v2550
        %v2734 = vpop.f32.mrb[0].mxu0
        %v2735 = vadd.f32 0.0, %v2734
        %v2736 = vpop.f32.mrb[0].mxu0
        %2737 = vmatprep.mubr.f32.mxu0 0.0
        %2738 = vmatmul.mubr.f32.gmra.mrb[0].mxu0 %v2553
        %v2739 = vpop.f32.mrb[0].mxu0
        %v2740 = vadd.f32 0.0, %v2739
        %v2741 = vpop.f32.mrb[0].mxu0
        %2742 = vmatprep.mubr.f32.mxu0 0.0
        %2743 = vmatmul.mubr.f32.gmra.mrb[0].mxu0 %v2556
        %v2744 = vpop.f32.mrb[0].mxu0
        %v2745 = vadd.f32 0.0, %v2744
        %v2746 = vpop.f32.mrb[0].mxu0
        %2747 = vmatprep.mubr.f32.mxu0 0.0
        %2748 = vmatmul.mubr.f32.gmra.mrb[0].mxu0 %v2559
        %v2749 = vpop.f32.mrb[0].mxu0
        %v2750 = vadd.f32 0.0, %v2749
        %v2751 = vpop.f32.mrb[0].mxu0
        %2752 = vmatprep.mubr.f32.mxu0 0.0
        %2753 = vmatmul.mubr.f32.gmra.mrb[0].mxu0 %v2562
        %v2754 = vpop.f32.mrb[0].mxu0
        %v2755 = vadd.f32 0.0, %v2754
        %v2756 = vpop.f32.mrb[0].mxu0
        %2757 = vmatprep.mubr.f32.mxu0 0.0
        %2758 = vmatmul.mubr.f32.gmra.mrb[0].mxu0 %v2565
        %v2759 = vpop.f32.mrb[0].mxu0
        %v2760 = vadd.f32 0.0, %v2759
        %v2761 = vpop.f32.mrb[0].mxu0
        %2762 = vmatprep.mubr.f32.mxu0 0.0
        %2763 = vmatmul.mubr.f32.gmra.mrb[0].mxu0 %v2568
        %v2764 = vpop.f32.mrb[0].mxu0
        %v2765 = vadd.f32 0.0, %v2764
        %v2766 = vpop.f32.mrb[0].mxu0
        %2767 = vmatprep.mubr.f32.mxu0 0.0
        %2768 = vmatmul.mubr.f32.gmra.mrb[0].mxu0 %v2571
        %v2769 = vpop.f32.mrb[0].mxu0
        %v2770 = vadd.f32 0.0, %v2769
        %v2771 = vpop.f32.mrb[0].mxu0
        %2772 = vmatprep.mubr.f32.mxu0 0.0
        %2773 = vmatmul.mubr.f32.gmra.mrb[0].mxu0 %v2574
        %v2774 = vpop.f32.mrb[0].mxu0
        %v2775 = vadd.f32 0.0, %v2774
        %v2776 = vpop.f32.mrb[0].mxu0
        %2777 = vmatprep.mubr.f32.mxu0 0.0
        %2778 = vmatmul.mubr.f32.gmra.mrb[0].mxu0 %v2577
        %v2779 = vpop.f32.mrb[0].mxu0
        %v2780 = vadd.f32 0.0, %v2779
        %v2781 = vpop.f32.mrb[0].mxu0
        %2782 = vmatprep.mubr.f32.mxu0 0.0
        %2783 = vmatmul.mubr.f32.gmra.mrb[0].mxu0 %v2580
        %v2784 = vpop.f32.mrb[0].mxu0
        %v2785 = vadd.f32 0.0, %v2784
        %v2786 = vpop.f32.mrb[0].mxu0
        %2787 = vmatprep.mubr.f32.mxu0 0.0
        %2788 = vmatmul.mubr.f32.gmra.mrb[0].mxu0 %v2583
        %v2789 = vpop.f32.mrb[0].mxu0
        %v2790 = vadd.f32 0.0, %v2789
        %v2791 = vpop.f32.mrb[0].mxu0
        %2792 = vmatprep.mubr.f32.mxu0 0.0
        %2793 = vmatmul.mubr.f32.gmra.mrb[0].mxu0 %v2586
        %v2794 = vpop.f32.mrb[0].mxu0
        %v2795 = vadd.f32 0.0, %v2794
        %v2796 = vpop.f32.mrb[0].mxu0
        %2797 = vmatprep.mubr.f32.mxu0 0.0
        %2798 = vmatmul.mubr.f32.gmra.mrb[0].mxu0 %v2589
        %v2799 = vpop.f32.mrb[0].mxu0
        %v2800 = vadd.f32 0.0, %v2799
        %v2801 = vpop.f32.mrb[0].mxu0
        %2802 = vmatprep.mubr.f32.mxu0 0.0
        %2803 = vmatmul.mubr.f32.gmra.mrb[0].mxu0 %v2592
        %v2804 = vpop.f32.mrb[0].mxu0
        %v2805 = vadd.f32 0.0, %v2804
        %v2806 = vpop.f32.mrb[0].mxu0
        %2807 = vmatprep.mubr.f32.mxu0 0.0
        %2808 = vmatmul.mubr.f32.gmra.mrb[0].mxu0 %v2595
        %v2809 = vpop.f32.mrb[0].mxu0
        %v2810 = vadd.f32 0.0, %v2809
        %v2811 = vpop.f32.mrb[0].mxu0
        %2812 = vmatprep.mubr.f32.mxu0 0.0
        %2813 = vmatmul.mubr.f32.gmra.mrb[0].mxu0 %v2598
        %v2814 = vpop.f32.mrb[0].mxu0
        %v2815 = vadd.f32 0.0, %v2814
        %v2816 = vpop.f32.mrb[0].mxu0
        %2817 = vmatprep.mubr.f32.mxu0 0.0
        %2818 = vmatmul.mubr.f32.gmra.mrb[0].mxu0 %v2601
        %v2819 = vpop.f32.mrb[0].mxu0
        %v2820 = vadd.f32 0.0, %v2819
        %v2821 = vpop.f32.mrb[0].mxu0
        %2822 = vmatprep.mubr.f32.mxu0 0.0
        %2823 = vmatmul.mubr.f32.gmra.mrb[0].mxu0 %v2604
        %v2824 = vpop.f32.mrb[0].mxu0
        %v2825 = vadd.f32 0.0, %v2824
        %v2826 = vpop.f32.mrb[0].mxu0
        %2827 = vmatprep.mubr.f32.mxu0 0.0
        %2828 = vmatmul.mubr.f32.gmra.mrb[0].mxu0 %v2607
        %v2829 = vpop.f32.mrb[0].mxu0
        %v2830 = vadd.f32 0.0, %v2829
        %v2831 = vpop.f32.mrb[0].mxu0
        %2832 = vmatprep.mubr.f32.mxu0 0.0
        %2833 = vmatmul.mubr.f32.gmra.mrb[0].mxu0 %v2610
        %v2834 = vpop.f32.mrb[0].mxu0
        %v2835 = vadd.f32 0.0, %v2834
        %v2836 = vpop.f32.mrb[0].mxu0
        %2837 = vmatprep.mubr.f32.mxu0 0.0
        %2838 = vmatmul.mubr.f32.gmra.mrb[0].mxu0 %v2613
        %v2839 = vpop.f32.mrb[0].mxu0
        %v2840 = vadd.f32 0.0, %v2839
        %v2841 = vpop.f32.mrb[0].mxu0
        %2842 = vdwg.mxu0
        %v2843 = vadd.f32 %v2450, %v2685
        %v2844 = vadd.f32 %v2451, %v2690
        %v2845 = vadd.f32 %v2452, %v2695
        %v2846 = vadd.f32 %v2453, %v2700
        %v2847 = vadd.f32 %v2454, %v2705
        %v2848 = vadd.f32 %v2455, %v2710
        %v2849 = vadd.f32 %v2456, %v2715
        %v2850 = vadd.f32 %v2457, %v2720
        %v2851 = vadd.f32 %v2458, %v2725
        %v2852 = vadd.f32 %v2459, %v2730
        %v2853 = vadd.f32 %v2460, %v2735
        %v2854 = vadd.f32 %v2461, %v2740
        %v2855 = vadd.f32 %v2462, %v2745
        %v2856 = vadd.f32 %v2463, %v2750
        %v2857 = vadd.f32 %v2464, %v2755
        %v2858 = vadd.f32 %v2465, %v2760
        %v2859 = vadd.f32 %v2466, %v2765
        %v2860 = vadd.f32 %v2467, %v2770
        %v2861 = vadd.f32 %v2468, %v2775
        %v2862 = vadd.f32 %v2469, %v2780
        %v2863 = vadd.f32 %v2470, %v2785
        %v2864 = vadd.f32 %v2471, %v2790
        %v2865 = vadd.f32 %v2472, %v2795
        %v2866 = vadd.f32 %v2473, %v2800
        %v2867 = vadd.f32 %v2474, %v2805
        %v2868 = vadd.f32 %v2475, %v2810
        %v2869 = vadd.f32 %v2476, %v2815
        %v2870 = vadd.f32 %v2477, %v2820
        %v2871 = vadd.f32 %v2478, %v2825
        %v2872 = vadd.f32 %v2479, %v2830
        %v2873 = vadd.f32 %v2480, %v2835
        %v2874 = vadd.f32 %v2481, %v2840
        %v2875 = vld [vmem:[%s2484 + $0x1] sm:$0xff]
        %v2876 = vld [vmem:[%s2484 + $0x9] sm:$0xff]
        %v2877 = vld [vmem:[%s2484 + $0x19] sm:$0xff]
        %v2878 = vld [vmem:[%s2484 + $0x21] sm:$0xff]
        %v2879 = vld [vmem:[%s2484 + $0x31] sm:$0xff]
        %v2880 = vld [vmem:[%s2484 + $0x39] sm:$0xff]
        %v2881 = vld [vmem:[%s2484 + $0x49] sm:$0xff]
        %v2882 = vld [vmem:[%s2484 + $0x51] sm:$0xff]
        %v2883 = vld [vmem:[%s2484 + $0x61] sm:$0xff]
        %v2884 = vld [vmem:[%s2484 + $0x69] sm:$0xff]
        %v2885 = vld [vmem:[%s2484 + $0x79] sm:$0xff]
        %v2886 = vld [vmem:[%s2484 + $0x81] sm:$0xff]
        %v2887 = vld [vmem:[%s2484 + $0x91] sm:$0xff]
        %v2888 = vld [vmem:[%s2484 + $0x99] sm:$0xff]
        %v2889 = vld [vmem:[%s2484 + $0xa9] sm:$0xff]
        %v2890 = vld [vmem:[%s2484 + $0xb1] sm:$0xff]
        %v2891 = vld [vmem:[%s2484 + $0xc1] sm:$0xff]
        %v2892 = vld [vmem:[%s2484 + $0xc9] sm:$0xff]
        %v2893 = vld [vmem:[%s2484 + $0xd9] sm:$0xff]
        %v2894 = vld [vmem:[%s2484 + $0xe1] sm:$0xff]
        %v2895 = vld [vmem:[%s2484 + $0xf1] sm:$0xff]
        %v2896 = vld [vmem:[%s2484 + $0xf9] sm:$0xff]
        %v2897 = vld [vmem:[%s2484 + $0x109] sm:$0xff]
        %v2898 = vld [vmem:[%s2484 + $0x111] sm:$0xff]
        %v2899 = vld [vmem:[%s2484 + $0x121] sm:$0xff]
        %v2900 = vld [vmem:[%s2484 + $0x129] sm:$0xff]
        %v2901 = vld [vmem:[%s2484 + $0x139] sm:$0xff]
        %v2902 = vld [vmem:[%s2484 + $0x141] sm:$0xff]
        %v2903 = vld [vmem:[%s2484 + $0x151] sm:$0xff]
        %v2904 = vld [vmem:[%s2484 + $0x159] sm:$0xff]
        %v2905 = vld [vmem:[%s2484 + $0x169] sm:$0xff]
        %v2906 = vld [vmem:[%s2484 + $0x171] sm:$0xff]
        %s2907 = scalar_lea.vmem %s1, 28
        %v2908 = vld [vmem:[%s2907] sm:$0xf]
        %v2910 = vsel %vm269, %v2875, 0
        %v2913 = vsel %vm269, %v2876, 0
        %v2916 = vsel %vm269, %v2877, 0
        %v2919 = vsel %vm269, %v2878, 0
        %v2922 = vsel %vm269, %v2879, 0
        %v2925 = vsel %vm269, %v2880, 0
        %v2928 = vsel %vm269, %v2881, 0
        %v2931 = vsel %vm269, %v2882, 0
        %v2934 = vsel %vm269, %v2883, 0
        %v2937 = vsel %vm269, %v2884, 0
        %v2940 = vsel %vm269, %v2885, 0
        %v2943 = vsel %vm269, %v2886, 0
        %v2946 = vsel %vm269, %v2887, 0
        %v2949 = vsel %vm269, %v2888, 0
        %v2952 = vsel %vm269, %v2889, 0
        %v2955 = vsel %vm269, %v2890, 0
        %v2958 = vsel %vm269, %v2891, 0
        %v2961 = vsel %vm269, %v2892, 0
        %v2964 = vsel %vm269, %v2893, 0
        %v2967 = vsel %vm269, %v2894, 0
        %v2970 = vsel %vm269, %v2895, 0
        %v2973 = vsel %vm269, %v2896, 0
        %v2976 = vsel %vm269, %v2897, 0
        %v2979 = vsel %vm269, %v2898, 0
        %v2982 = vsel %vm269, %v2899, 0
        %v2985 = vsel %vm269, %v2900, 0
        %v2988 = vsel %vm269, %v2901, 0
        %v2991 = vsel %vm269, %v2902, 0
        %v2994 = vsel %vm269, %v2903, 0
        %v2997 = vsel %vm269, %v2904, 0
        %v3000 = vsel %vm269, %v2905, 0
        %v3003 = vsel %vm269, %v2906, 0
        %v3006 = vsel %vm366, %v2908, 0
        %3008 = vmatprep.subr.mxu0 0.0
        %3009 = vmatpush1.msra.mxu0 %v3006
        %3010 = vmatprep.subr.mxu0 0.0
        %3011 = vmatpush1.msra.mxu0 0.0
        %3012 = vmatprep.subr.mxu0 0.0
        %3013 = vmatpush1.msra.mxu0 0.0
        %3014 = vmatprep.subr.mxu0 0.0
        %3015 = vmatpush1.msra.mxu0 0.0
        %3016 = vmatprep.subr.mxu0 0.0
        %3017 = vmatpush1.msra.mxu0 0.0
        %3018 = vmatprep.subr.mxu0 0.0
        %3019 = vmatpush1.msra.mxu0 0.0
        %3020 = vmatprep.subr.mxu0 0.0
        %3021 = vmatpush1.msra.mxu0 0.0
        %3022 = vmatprep.subr.mxu0 0.0
        %3023 = vmatpush1.msra.mxu0 0.0
        %3024 = vmatprep.subr.mxu0 0.0
        %3025 = vmatpush1.msra.mxu0 0.0
        %3026 = vmatprep.subr.mxu0 0.0
        %3027 = vmatpush1.msra.mxu0 0.0
        %3028 = vmatprep.subr.mxu0 0.0
        %3029 = vmatpush1.msra.mxu0 0.0
        %3030 = vmatprep.subr.mxu0 0.0
        %3031 = vmatpush1.msra.mxu0 0.0
        %3032 = vmatprep.subr.mxu0 0.0
        %3033 = vmatpush1.msra.mxu0 0.0
        %3034 = vmatprep.subr.mxu0 0.0
        %3035 = vmatpush1.msra.mxu0 0.0
        %3036 = vmatprep.subr.mxu0 0.0
        %3037 = vmatpush1.msra.mxu0 0.0
        %3038 = vmatprep.subr.mxu0 0.0
        %3039 = vmatpush1.msra.mxu0 0.0
        %3040 = vmatprep.subr.mxu0 0.0
        %3041 = vmatpush1.msra.mxu0 0.0
        %3042 = vmatprep.subr.mxu0 0.0
        %3043 = vmatpush1.msra.mxu0 0.0
        %3044 = vmatprep.subr.mxu0 0.0
        %3045 = vmatpush1.msra.mxu0 0.0
        %3046 = vmatprep.subr.mxu0 0.0
        %3047 = vmatpush1.msra.mxu0 0.0
        %3048 = vmatprep.subr.mxu0 0.0
        %3049 = vmatpush1.msra.mxu0 0.0
        %3050 = vmatprep.subr.mxu0 0.0
        %3051 = vmatpush1.msra.mxu0 0.0
        %3052 = vmatprep.subr.mxu0 0.0
        %3053 = vmatpush1.msra.mxu0 0.0
        %3054 = vmatprep.subr.mxu0 0.0
        %3055 = vmatpush1.msra.mxu0 0.0
        %3056 = vmatprep.subr.mxu0 0.0
        %3057 = vmatpush1.msra.mxu0 0.0
        %3058 = vmatprep.subr.mxu0 0.0
        %3059 = vmatpush1.msra.mxu0 0.0
        %3060 = vmatprep.subr.mxu0 0.0
        %3061 = vmatpush1.msra.mxu0 0.0
        %3062 = vmatprep.subr.mxu0 0.0
        %3063 = vmatpush1.msra.mxu0 0.0
        %3064 = vmatprep.subr.mxu0 0.0
        %3065 = vmatpush1.msra.mxu0 0.0
        %3066 = vmatprep.subr.mxu0 0.0
        %3067 = vmatpush1.msra.mxu0 0.0
        %3068 = vmatprep.subr.mxu0 0.0
        %3069 = vmatpush1.msra.mxu0 0.0
        %3070 = vmatprep.subr.mxu0 0.0
        %3071 = vmatpush1.msra.mxu0 0.0
        %3072 = vmatprep.mubr.f32.mxu0 0.0
        %3073 = vmatmul.mubr.f32.gmra.mrb[0].mxu0 %v2910
        %v3074 = vpop.f32.mrb[0].mxu0
        %v3075 = vadd.f32 0.0, %v3074
        %v3076 = vpop.f32.mrb[0].mxu0
        %3077 = vmatprep.mubr.f32.mxu0 0.0
        %3078 = vmatmul.mubr.f32.gmra.mrb[0].mxu0 %v2913
        %v3079 = vpop.f32.mrb[0].mxu0
        %v3080 = vadd.f32 0.0, %v3079
        %v3081 = vpop.f32.mrb[0].mxu0
        %3082 = vmatprep.mubr.f32.mxu0 0.0
        %3083 = vmatmul.mubr.f32.gmra.mrb[0].mxu0 %v2916
        %v3084 = vpop.f32.mrb[0].mxu0
        %v3085 = vadd.f32 0.0, %v3084
        %v3086 = vpop.f32.mrb[0].mxu0
        %3087 = vmatprep.mubr.f32.mxu0 0.0
        %3088 = vmatmul.mubr.f32.gmra.mrb[0].mxu0 %v2919
        %v3089 = vpop.f32.mrb[0].mxu0
        %v3090 = vadd.f32 0.0, %v3089
        %v3091 = vpop.f32.mrb[0].mxu0
        %3092 = vmatprep.mubr.f32.mxu0 0.0
        %3093 = vmatmul.mubr.f32.gmra.mrb[0].mxu0 %v2922
        %v3094 = vpop.f32.mrb[0].mxu0
        %v3095 = vadd.f32 0.0, %v3094
        %v3096 = vpop.f32.mrb[0].mxu0
        %3097 = vmatprep.mubr.f32.mxu0 0.0
        %3098 = vmatmul.mubr.f32.gmra.mrb[0].mxu0 %v2925
        %v3099 = vpop.f32.mrb[0].mxu0
        %v3100 = vadd.f32 0.0, %v3099
        %v3101 = vpop.f32.mrb[0].mxu0
        %3102 = vmatprep.mubr.f32.mxu0 0.0
        %3103 = vmatmul.mubr.f32.gmra.mrb[0].mxu0 %v2928
        %v3104 = vpop.f32.mrb[0].mxu0
        %v3105 = vadd.f32 0.0, %v3104
        %v3106 = vpop.f32.mrb[0].mxu0
        %3107 = vmatprep.mubr.f32.mxu0 0.0
        %3108 = vmatmul.mubr.f32.gmra.mrb[0].mxu0 %v2931
        %v3109 = vpop.f32.mrb[0].mxu0
        %v3110 = vadd.f32 0.0, %v3109
        %v3111 = vpop.f32.mrb[0].mxu0
        %3112 = vmatprep.mubr.f32.mxu0 0.0
        %3113 = vmatmul.mubr.f32.gmra.mrb[0].mxu0 %v2934
        %v3114 = vpop.f32.mrb[0].mxu0
        %v3115 = vadd.f32 0.0, %v3114
        %v3116 = vpop.f32.mrb[0].mxu0
        %3117 = vmatprep.mubr.f32.mxu0 0.0
        %3118 = vmatmul.mubr.f32.gmra.mrb[0].mxu0 %v2937
        %v3119 = vpop.f32.mrb[0].mxu0
        %v3120 = vadd.f32 0.0, %v3119
        %v3121 = vpop.f32.mrb[0].mxu0
        %3122 = vmatprep.mubr.f32.mxu0 0.0
        %3123 = vmatmul.mubr.f32.gmra.mrb[0].mxu0 %v2940
        %v3124 = vpop.f32.mrb[0].mxu0
        %v3125 = vadd.f32 0.0, %v3124
        %v3126 = vpop.f32.mrb[0].mxu0
        %3127 = vmatprep.mubr.f32.mxu0 0.0
        %3128 = vmatmul.mubr.f32.gmra.mrb[0].mxu0 %v2943
        %v3129 = vpop.f32.mrb[0].mxu0
        %v3130 = vadd.f32 0.0, %v3129
        %v3131 = vpop.f32.mrb[0].mxu0
        %3132 = vmatprep.mubr.f32.mxu0 0.0
        %3133 = vmatmul.mubr.f32.gmra.mrb[0].mxu0 %v2946
        %v3134 = vpop.f32.mrb[0].mxu0
        %v3135 = vadd.f32 0.0, %v3134
        %v3136 = vpop.f32.mrb[0].mxu0
        %3137 = vmatprep.mubr.f32.mxu0 0.0
        %3138 = vmatmul.mubr.f32.gmra.mrb[0].mxu0 %v2949
        %v3139 = vpop.f32.mrb[0].mxu0
        %v3140 = vadd.f32 0.0, %v3139
        %v3141 = vpop.f32.mrb[0].mxu0
        %3142 = vmatprep.mubr.f32.mxu0 0.0
        %3143 = vmatmul.mubr.f32.gmra.mrb[0].mxu0 %v2952
        %v3144 = vpop.f32.mrb[0].mxu0
        %v3145 = vadd.f32 0.0, %v3144
        %v3146 = vpop.f32.mrb[0].mxu0
        %3147 = vmatprep.mubr.f32.mxu0 0.0
        %3148 = vmatmul.mubr.f32.gmra.mrb[0].mxu0 %v2955
        %v3149 = vpop.f32.mrb[0].mxu0
        %v3150 = vadd.f32 0.0, %v3149
        %v3151 = vpop.f32.mrb[0].mxu0
        %3152 = vmatprep.mubr.f32.mxu0 0.0
        %3153 = vmatmul.mubr.f32.gmra.mrb[0].mxu0 %v2958
        %v3154 = vpop.f32.mrb[0].mxu0
        %v3155 = vadd.f32 0.0, %v3154
        %v3156 = vpop.f32.mrb[0].mxu0
        %3157 = vmatprep.mubr.f32.mxu0 0.0
        %3158 = vmatmul.mubr.f32.gmra.mrb[0].mxu0 %v2961
        %v3159 = vpop.f32.mrb[0].mxu0
        %v3160 = vadd.f32 0.0, %v3159
        %v3161 = vpop.f32.mrb[0].mxu0
        %3162 = vmatprep.mubr.f32.mxu0 0.0
        %3163 = vmatmul.mubr.f32.gmra.mrb[0].mxu0 %v2964
        %v3164 = vpop.f32.mrb[0].mxu0
        %v3165 = vadd.f32 0.0, %v3164
        %v3166 = vpop.f32.mrb[0].mxu0
        %3167 = vmatprep.mubr.f32.mxu0 0.0
        %3168 = vmatmul.mubr.f32.gmra.mrb[0].mxu0 %v2967
        %v3169 = vpop.f32.mrb[0].mxu0
        %v3170 = vadd.f32 0.0, %v3169
        %v3171 = vpop.f32.mrb[0].mxu0
        %3172 = vmatprep.mubr.f32.mxu0 0.0
        %3173 = vmatmul.mubr.f32.gmra.mrb[0].mxu0 %v2970
        %v3174 = vpop.f32.mrb[0].mxu0
        %v3175 = vadd.f32 0.0, %v3174
        %v3176 = vpop.f32.mrb[0].mxu0
        %3177 = vmatprep.mubr.f32.mxu0 0.0
        %3178 = vmatmul.mubr.f32.gmra.mrb[0].mxu0 %v2973
        %v3179 = vpop.f32.mrb[0].mxu0
        %v3180 = vadd.f32 0.0, %v3179
        %v3181 = vpop.f32.mrb[0].mxu0
        %3182 = vmatprep.mubr.f32.mxu0 0.0
        %3183 = vmatmul.mubr.f32.gmra.mrb[0].mxu0 %v2976
        %v3184 = vpop.f32.mrb[0].mxu0
        %v3185 = vadd.f32 0.0, %v3184
        %v3186 = vpop.f32.mrb[0].mxu0
        %3187 = vmatprep.mubr.f32.mxu0 0.0
        %3188 = vmatmul.mubr.f32.gmra.mrb[0].mxu0 %v2979
        %v3189 = vpop.f32.mrb[0].mxu0
        %v3190 = vadd.f32 0.0, %v3189
        %v3191 = vpop.f32.mrb[0].mxu0
        %3192 = vmatprep.mubr.f32.mxu0 0.0
        %3193 = vmatmul.mubr.f32.gmra.mrb[0].mxu0 %v2982
        %v3194 = vpop.f32.mrb[0].mxu0
        %v3195 = vadd.f32 0.0, %v3194
        %v3196 = vpop.f32.mrb[0].mxu0
        %3197 = vmatprep.mubr.f32.mxu0 0.0
        %3198 = vmatmul.mubr.f32.gmra.mrb[0].mxu0 %v2985
        %v3199 = vpop.f32.mrb[0].mxu0
        %v3200 = vadd.f32 0.0, %v3199
        %v3201 = vpop.f32.mrb[0].mxu0
        %3202 = vmatprep.mubr.f32.mxu0 0.0
        %3203 = vmatmul.mubr.f32.gmra.mrb[0].mxu0 %v2988
        %v3204 = vpop.f32.mrb[0].mxu0
        %v3205 = vadd.f32 0.0, %v3204
        %v3206 = vpop.f32.mrb[0].mxu0
        %3207 = vmatprep.mubr.f32.mxu0 0.0
        %3208 = vmatmul.mubr.f32.gmra.mrb[0].mxu0 %v2991
        %v3209 = vpop.f32.mrb[0].mxu0
        %v3210 = vadd.f32 0.0, %v3209
        %v3211 = vpop.f32.mrb[0].mxu0
        %3212 = vmatprep.mubr.f32.mxu0 0.0
        %3213 = vmatmul.mubr.f32.gmra.mrb[0].mxu0 %v2994
        %v3214 = vpop.f32.mrb[0].mxu0
        %v3215 = vadd.f32 0.0, %v3214
        %v3216 = vpop.f32.mrb[0].mxu0
        %3217 = vmatprep.mubr.f32.mxu0 0.0
        %3218 = vmatmul.mubr.f32.gmra.mrb[0].mxu0 %v2997
        %v3219 = vpop.f32.mrb[0].mxu0
        %v3220 = vadd.f32 0.0, %v3219
        %v3221 = vpop.f32.mrb[0].mxu0
        %3222 = vmatprep.mubr.f32.mxu0 0.0
        %3223 = vmatmul.mubr.f32.gmra.mrb[0].mxu0 %v3000
        %v3224 = vpop.f32.mrb[0].mxu0
        %v3225 = vadd.f32 0.0, %v3224
        %v3226 = vpop.f32.mrb[0].mxu0
        %3227 = vmatprep.mubr.f32.mxu0 0.0
        %3228 = vmatmul.mubr.f32.gmra.mrb[0].mxu0 %v3003
        %v3229 = vpop.f32.mrb[0].mxu0
        %v3230 = vadd.f32 0.0, %v3229
        %v3231 = vpop.f32.mrb[0].mxu0
        %3232 = vdwg.mxu0
        %v3233 = vadd.f32 %v2843, %v3075
        %v3234 = vadd.f32 %v2844, %v3080
        %v3235 = vadd.f32 %v2845, %v3085
        %v3236 = vadd.f32 %v2846, %v3090
        %v3237 = vadd.f32 %v2847, %v3095
        %v3238 = vadd.f32 %v2848, %v3100
        %v3239 = vadd.f32 %v2849, %v3105
        %v3240 = vadd.f32 %v2850, %v3110
        %v3241 = vadd.f32 %v2851, %v3115
        %v3242 = vadd.f32 %v2852, %v3120
        %v3243 = vadd.f32 %v2853, %v3125
        %v3244 = vadd.f32 %v2854, %v3130
        %v3245 = vadd.f32 %v2855, %v3135
        %v3246 = vadd.f32 %v2856, %v3140
        %v3247 = vadd.f32 %v2857, %v3145
        %v3248 = vadd.f32 %v2858, %v3150
        %v3249 = vadd.f32 %v2859, %v3155
        %v3250 = vadd.f32 %v2860, %v3160
        %v3251 = vadd.f32 %v2861, %v3165
        %v3252 = vadd.f32 %v2862, %v3170
        %v3253 = vadd.f32 %v2863, %v3175
        %v3254 = vadd.f32 %v2864, %v3180
        %v3255 = vadd.f32 %v2865, %v3185
        %v3256 = vadd.f32 %v2866, %v3190
        %v3257 = vadd.f32 %v2867, %v3195
        %v3258 = vadd.f32 %v2868, %v3200
        %v3259 = vadd.f32 %v2869, %v3205
        %v3260 = vadd.f32 %v2870, %v3210
        %v3261 = vadd.f32 %v2871, %v3215
        %v3262 = vadd.f32 %v2872, %v3220
        %v3263 = vadd.f32 %v2873, %v3225
        %v3264 = vadd.f32 %v2874, %v3230
        %v3265 = vld [vmem:[%s2484 + $0x2] sm:$0xff]
        %v3266 = vld [vmem:[%s2484 + $0xa] sm:$0xff]
        %v3267 = vld [vmem:[%s2484 + $0x1a] sm:$0xff]
        %v3268 = vld [vmem:[%s2484 + $0x22] sm:$0xff]
        %v3269 = vld [vmem:[%s2484 + $0x32] sm:$0xff]
        %v3270 = vld [vmem:[%s2484 + $0x3a] sm:$0xff]
        %v3271 = vld [vmem:[%s2484 + $0x4a] sm:$0xff]
        %v3272 = vld [vmem:[%s2484 + $0x52] sm:$0xff]
        %v3273 = vld [vmem:[%s2484 + $0x62] sm:$0xff]
        %v3274 = vld [vmem:[%s2484 + $0x6a] sm:$0xff]
        %v3275 = vld [vmem:[%s2484 + $0x7a] sm:$0xff]
        %v3276 = vld [vmem:[%s2484 + $0x82] sm:$0xff]
        %v3277 = vld [vmem:[%s2484 + $0x92] sm:$0xff]
        %v3278 = vld [vmem:[%s2484 + $0x9a] sm:$0xff]
        %v3279 = vld [vmem:[%s2484 + $0xaa] sm:$0xff]
        %v3280 = vld [vmem:[%s2484 + $0xb2] sm:$0xff]
        %v3281 = vld [vmem:[%s2484 + $0xc2] sm:$0xff]
        %v3282 = vld [vmem:[%s2484 + $0xca] sm:$0xff]
        %v3283 = vld [vmem:[%s2484 + $0xda] sm:$0xff]
        %v3284 = vld [vmem:[%s2484 + $0xe2] sm:$0xff]
        %v3285 = vld [vmem:[%s2484 + $0xf2] sm:$0xff]
        %v3286 = vld [vmem:[%s2484 + $0xfa] sm:$0xff]
        %v3287 = vld [vmem:[%s2484 + $0x10a] sm:$0xff]
        %v3288 = vld [vmem:[%s2484 + $0x112] sm:$0xff]
        %v3289 = vld [vmem:[%s2484 + $0x122] sm:$0xff]
        %v3290 = vld [vmem:[%s2484 + $0x12a] sm:$0xff]
        %v3291 = vld [vmem:[%s2484 + $0x13a] sm:$0xff]
        %v3292 = vld [vmem:[%s2484 + $0x142] sm:$0xff]
        %v3293 = vld [vmem:[%s2484 + $0x152] sm:$0xff]
        %v3294 = vld [vmem:[%s2484 + $0x15a] sm:$0xff]
        %v3295 = vld [vmem:[%s2484 + $0x16a] sm:$0xff]
        %v3296 = vld [vmem:[%s2484 + $0x172] sm:$0xff]
        %s3297 = scalar_lea.vmem %s1, 32
        %v3298 = vld [vmem:[%s3297] sm:$0xf]
        %v3300 = vsel %vm269, %v3265, 0
        %v3303 = vsel %vm269, %v3266, 0
        %v3306 = vsel %vm269, %v3267, 0
        %v3309 = vsel %vm269, %v3268, 0
        %v3312 = vsel %vm269, %v3269, 0
        %v3315 = vsel %vm269, %v3270, 0
        %v3318 = vsel %vm269, %v3271, 0
        %v3321 = vsel %vm269, %v3272, 0
        %v3324 = vsel %vm269, %v3273, 0
        %v3327 = vsel %vm269, %v3274, 0
        %v3330 = vsel %vm269, %v3275, 0
        %v3333 = vsel %vm269, %v3276, 0
        %v3336 = vsel %vm269, %v3277, 0
        %v3339 = vsel %vm269, %v3278, 0
        %v3342 = vsel %vm269, %v3279, 0
        %v3345 = vsel %vm269, %v3280, 0
        %v3348 = vsel %vm269, %v3281, 0
        %v3351 = vsel %vm269, %v3282, 0
        %v3354 = vsel %vm269, %v3283, 0
        %v3357 = vsel %vm269, %v3284, 0
        %v3360 = vsel %vm269, %v3285, 0
        %v3363 = vsel %vm269, %v3286, 0
        %v3366 = vsel %vm269, %v3287, 0
        %v3369 = vsel %vm269, %v3288, 0
        %v3372 = vsel %vm269, %v3289, 0
        %v3375 = vsel %vm269, %v3290, 0
        %v3378 = vsel %vm269, %v3291, 0
        %v3381 = vsel %vm269, %v3292, 0
        %v3384 = vsel %vm269, %v3293, 0
        %v3387 = vsel %vm269, %v3294, 0
        %v3390 = vsel %vm269, %v3295, 0
        %v3393 = vsel %vm269, %v3296, 0
        %v3396 = vsel %vm366, %v3298, 0
        %3398 = vmatprep.subr.mxu0 0.0
        %3399 = vmatpush1.msra.mxu0 %v3396
        %3400 = vmatprep.subr.mxu0 0.0
        %3401 = vmatpush1.msra.mxu0 0.0
        %3402 = vmatprep.subr.mxu0 0.0
        %3403 = vmatpush1.msra.mxu0 0.0
        %3404 = vmatprep.subr.mxu0 0.0
        %3405 = vmatpush1.msra.mxu0 0.0
        %3406 = vmatprep.subr.mxu0 0.0
        %3407 = vmatpush1.msra.mxu0 0.0
        %3408 = vmatprep.subr.mxu0 0.0
        %3409 = vmatpush1.msra.mxu0 0.0
        %3410 = vmatprep.subr.mxu0 0.0
        %3411 = vmatpush1.msra.mxu0 0.0
        %3412 = vmatprep.subr.mxu0 0.0
        %3413 = vmatpush1.msra.mxu0 0.0
        %3414 = vmatprep.subr.mxu0 0.0
        %3415 = vmatpush1.msra.mxu0 0.0
        %3416 = vmatprep.subr.mxu0 0.0
        %3417 = vmatpush1.msra.mxu0 0.0
        %3418 = vmatprep.subr.mxu0 0.0
        %3419 = vmatpush1.msra.mxu0 0.0
        %3420 = vmatprep.subr.mxu0 0.0
        %3421 = vmatpush1.msra.mxu0 0.0
        %3422 = vmatprep.subr.mxu0 0.0
        %3423 = vmatpush1.msra.mxu0 0.0
        %3424 = vmatprep.subr.mxu0 0.0
        %3425 = vmatpush1.msra.mxu0 0.0
        %3426 = vmatprep.subr.mxu0 0.0
        %3427 = vmatpush1.msra.mxu0 0.0
        %3428 = vmatprep.subr.mxu0 0.0
        %3429 = vmatpush1.msra.mxu0 0.0
        %3430 = vmatprep.subr.mxu0 0.0
        %3431 = vmatpush1.msra.mxu0 0.0
        %3432 = vmatprep.subr.mxu0 0.0
        %3433 = vmatpush1.msra.mxu0 0.0
        %3434 = vmatprep.subr.mxu0 0.0
        %3435 = vmatpush1.msra.mxu0 0.0
        %3436 = vmatprep.subr.mxu0 0.0
        %3437 = vmatpush1.msra.mxu0 0.0
        %3438 = vmatprep.subr.mxu0 0.0
        %3439 = vmatpush1.msra.mxu0 0.0
        %3440 = vmatprep.subr.mxu0 0.0
        %3441 = vmatpush1.msra.mxu0 0.0
        %3442 = vmatprep.subr.mxu0 0.0
        %3443 = vmatpush1.msra.mxu0 0.0
        %3444 = vmatprep.subr.mxu0 0.0
        %3445 = vmatpush1.msra.mxu0 0.0
        %3446 = vmatprep.subr.mxu0 0.0
        %3447 = vmatpush1.msra.mxu0 0.0
        %3448 = vmatprep.subr.mxu0 0.0
        %3449 = vmatpush1.msra.mxu0 0.0
        %3450 = vmatprep.subr.mxu0 0.0
        %3451 = vmatpush1.msra.mxu0 0.0
        %3452 = vmatprep.subr.mxu0 0.0
        %3453 = vmatpush1.msra.mxu0 0.0
        %3454 = vmatprep.subr.mxu0 0.0
        %3455 = vmatpush1.msra.mxu0 0.0
        %3456 = vmatprep.subr.mxu0 0.0
        %3457 = vmatpush1.msra.mxu0 0.0
        %3458 = vmatprep.subr.mxu0 0.0
        %3459 = vmatpush1.msra.mxu0 0.0
        %3460 = vmatprep.subr.mxu0 0.0
        %3461 = vmatpush1.msra.mxu0 0.0
        %3462 = vmatprep.mubr.f32.mxu0 0.0
        %3463 = vmatmul.mubr.f32.gmra.mrb[0].mxu0 %v3300
        %v3464 = vpop.f32.mrb[0].mxu0
        %v3465 = vadd.f32 0.0, %v3464
        %v3466 = vpop.f32.mrb[0].mxu0
        %3467 = vmatprep.mubr.f32.mxu0 0.0
        %3468 = vmatmul.mubr.f32.gmra.mrb[0].mxu0 %v3303
        %v3469 = vpop.f32.mrb[0].mxu0
        %v3470 = vadd.f32 0.0, %v3469
        %v3471 = vpop.f32.mrb[0].mxu0
        %3472 = vmatprep.mubr.f32.mxu0 0.0
        %3473 = vmatmul.mubr.f32.gmra.mrb[0].mxu0 %v3306
        %v3474 = vpop.f32.mrb[0].mxu0
        %v3475 = vadd.f32 0.0, %v3474
        %v3476 = vpop.f32.mrb[0].mxu0
        %3477 = vmatprep.mubr.f32.mxu0 0.0
        %3478 = vmatmul.mubr.f32.gmra.mrb[0].mxu0 %v3309
        %v3479 = vpop.f32.mrb[0].mxu0
        %v3480 = vadd.f32 0.0, %v3479
        %v3481 = vpop.f32.mrb[0].mxu0
        %3482 = vmatprep.mubr.f32.mxu0 0.0
        %3483 = vmatmul.mubr.f32.gmra.mrb[0].mxu0 %v3312
        %v3484 = vpop.f32.mrb[0].mxu0
        %v3485 = vadd.f32 0.0, %v3484
        %v3486 = vpop.f32.mrb[0].mxu0
        %3487 = vmatprep.mubr.f32.mxu0 0.0
        %3488 = vmatmul.mubr.f32.gmra.mrb[0].mxu0 %v3315
        %v3489 = vpop.f32.mrb[0].mxu0
        %v3490 = vadd.f32 0.0, %v3489
        %v3491 = vpop.f32.mrb[0].mxu0
        %3492 = vmatprep.mubr.f32.mxu0 0.0
        %3493 = vmatmul.mubr.f32.gmra.mrb[0].mxu0 %v3318
        %v3494 = vpop.f32.mrb[0].mxu0
        %v3495 = vadd.f32 0.0, %v3494
        %v3496 = vpop.f32.mrb[0].mxu0
        %3497 = vmatprep.mubr.f32.mxu0 0.0
        %3498 = vmatmul.mubr.f32.gmra.mrb[0].mxu0 %v3321
        %v3499 = vpop.f32.mrb[0].mxu0
        %v3500 = vadd.f32 0.0, %v3499
        %v3501 = vpop.f32.mrb[0].mxu0
        %3502 = vmatprep.mubr.f32.mxu0 0.0
        %3503 = vmatmul.mubr.f32.gmra.mrb[0].mxu0 %v3324
        %v3504 = vpop.f32.mrb[0].mxu0
        %v3505 = vadd.f32 0.0, %v3504
        %v3506 = vpop.f32.mrb[0].mxu0
        %3507 = vmatprep.mubr.f32.mxu0 0.0
        %3508 = vmatmul.mubr.f32.gmra.mrb[0].mxu0 %v3327
        %v3509 = vpop.f32.mrb[0].mxu0
        %v3510 = vadd.f32 0.0, %v3509
        %v3511 = vpop.f32.mrb[0].mxu0
        %3512 = vmatprep.mubr.f32.mxu0 0.0
        %3513 = vmatmul.mubr.f32.gmra.mrb[0].mxu0 %v3330
        %v3514 = vpop.f32.mrb[0].mxu0
        %v3515 = vadd.f32 0.0, %v3514
        %v3516 = vpop.f32.mrb[0].mxu0
        %3517 = vmatprep.mubr.f32.mxu0 0.0
        %3518 = vmatmul.mubr.f32.gmra.mrb[0].mxu0 %v3333
        %v3519 = vpop.f32.mrb[0].mxu0
        %v3520 = vadd.f32 0.0, %v3519
        %v3521 = vpop.f32.mrb[0].mxu0
        %3522 = vmatprep.mubr.f32.mxu0 0.0
        %3523 = vmatmul.mubr.f32.gmra.mrb[0].mxu0 %v3336
        %v3524 = vpop.f32.mrb[0].mxu0
        %v3525 = vadd.f32 0.0, %v3524
        %v3526 = vpop.f32.mrb[0].mxu0
        %3527 = vmatprep.mubr.f32.mxu0 0.0
        %3528 = vmatmul.mubr.f32.gmra.mrb[0].mxu0 %v3339
        %v3529 = vpop.f32.mrb[0].mxu0
        %v3530 = vadd.f32 0.0, %v3529
        %v3531 = vpop.f32.mrb[0].mxu0
        %3532 = vmatprep.mubr.f32.mxu0 0.0
        %3533 = vmatmul.mubr.f32.gmra.mrb[0].mxu0 %v3342
        %v3534 = vpop.f32.mrb[0].mxu0
        %v3535 = vadd.f32 0.0, %v3534
        %v3536 = vpop.f32.mrb[0].mxu0
        %3537 = vmatprep.mubr.f32.mxu0 0.0
        %3538 = vmatmul.mubr.f32.gmra.mrb[0].mxu0 %v3345
        %v3539 = vpop.f32.mrb[0].mxu0
        %v3540 = vadd.f32 0.0, %v3539
        %v3541 = vpop.f32.mrb[0].mxu0
        %3542 = vmatprep.mubr.f32.mxu0 0.0
        %3543 = vmatmul.mubr.f32.gmra.mrb[0].mxu0 %v3348
        %v3544 = vpop.f32.mrb[0].mxu0
        %v3545 = vadd.f32 0.0, %v3544
        %v3546 = vpop.f32.mrb[0].mxu0
        %3547 = vmatprep.mubr.f32.mxu0 0.0
        %3548 = vmatmul.mubr.f32.gmra.mrb[0].mxu0 %v3351
        %v3549 = vpop.f32.mrb[0].mxu0
        %v3550 = vadd.f32 0.0, %v3549
        %v3551 = vpop.f32.mrb[0].mxu0
        %3552 = vmatprep.mubr.f32.mxu0 0.0
        %3553 = vmatmul.mubr.f32.gmra.mrb[0].mxu0 %v3354
        %v3554 = vpop.f32.mrb[0].mxu0
        %v3555 = vadd.f32 0.0, %v3554
        %v3556 = vpop.f32.mrb[0].mxu0
        %3557 = vmatprep.mubr.f32.mxu0 0.0
        %3558 = vmatmul.mubr.f32.gmra.mrb[0].mxu0 %v3357
        %v3559 = vpop.f32.mrb[0].mxu0
        %v3560 = vadd.f32 0.0, %v3559
        %v3561 = vpop.f32.mrb[0].mxu0
        %3562 = vmatprep.mubr.f32.mxu0 0.0
        %3563 = vmatmul.mubr.f32.gmra.mrb[0].mxu0 %v3360
        %v3564 = vpop.f32.mrb[0].mxu0
        %v3565 = vadd.f32 0.0, %v3564
        %v3566 = vpop.f32.mrb[0].mxu0
        %3567 = vmatprep.mubr.f32.mxu0 0.0
        %3568 = vmatmul.mubr.f32.gmra.mrb[0].mxu0 %v3363
        %v3569 = vpop.f32.mrb[0].mxu0
        %v3570 = vadd.f32 0.0, %v3569
        %v3571 = vpop.f32.mrb[0].mxu0
        %3572 = vmatprep.mubr.f32.mxu0 0.0
        %3573 = vmatmul.mubr.f32.gmra.mrb[0].mxu0 %v3366
        %v3574 = vpop.f32.mrb[0].mxu0
        %v3575 = vadd.f32 0.0, %v3574
        %v3576 = vpop.f32.mrb[0].mxu0
        %3577 = vmatprep.mubr.f32.mxu0 0.0
        %3578 = vmatmul.mubr.f32.gmra.mrb[0].mxu0 %v3369
        %v3579 = vpop.f32.mrb[0].mxu0
        %v3580 = vadd.f32 0.0, %v3579
        %v3581 = vpop.f32.mrb[0].mxu0
        %3582 = vmatprep.mubr.f32.mxu0 0.0
        %3583 = vmatmul.mubr.f32.gmra.mrb[0].mxu0 %v3372
        %v3584 = vpop.f32.mrb[0].mxu0
        %v3585 = vadd.f32 0.0, %v3584
        %v3586 = vpop.f32.mrb[0].mxu0
        %3587 = vmatprep.mubr.f32.mxu0 0.0
        %3588 = vmatmul.mubr.f32.gmra.mrb[0].mxu0 %v3375
        %v3589 = vpop.f32.mrb[0].mxu0
        %v3590 = vadd.f32 0.0, %v3589
        %v3591 = vpop.f32.mrb[0].mxu0
        %3592 = vmatprep.mubr.f32.mxu0 0.0
        %3593 = vmatmul.mubr.f32.gmra.mrb[0].mxu0 %v3378
        %v3594 = vpop.f32.mrb[0].mxu0
        %v3595 = vadd.f32 0.0, %v3594
        %v3596 = vpop.f32.mrb[0].mxu0
        %3597 = vmatprep.mubr.f32.mxu0 0.0
        %3598 = vmatmul.mubr.f32.gmra.mrb[0].mxu0 %v3381
        %v3599 = vpop.f32.mrb[0].mxu0
        %v3600 = vadd.f32 0.0, %v3599
        %v3601 = vpop.f32.mrb[0].mxu0
        %3602 = vmatprep.mubr.f32.mxu0 0.0
        %3603 = vmatmul.mubr.f32.gmra.mrb[0].mxu0 %v3384
        %v3604 = vpop.f32.mrb[0].mxu0
        %v3605 = vadd.f32 0.0, %v3604
        %v3606 = vpop.f32.mrb[0].mxu0
        %3607 = vmatprep.mubr.f32.mxu0 0.0
        %3608 = vmatmul.mubr.f32.gmra.mrb[0].mxu0 %v3387
        %v3609 = vpop.f32.mrb[0].mxu0
        %v3610 = vadd.f32 0.0, %v3609
        %v3611 = vpop.f32.mrb[0].mxu0
        %3612 = vmatprep.mubr.f32.mxu0 0.0
        %3613 = vmatmul.mubr.f32.gmra.mrb[0].mxu0 %v3390
        %v3614 = vpop.f32.mrb[0].mxu0
        %v3615 = vadd.f32 0.0, %v3614
        %v3616 = vpop.f32.mrb[0].mxu0
        %3617 = vmatprep.mubr.f32.mxu0 0.0
        %3618 = vmatmul.mubr.f32.gmra.mrb[0].mxu0 %v3393
        %v3619 = vpop.f32.mrb[0].mxu0
        %v3620 = vadd.f32 0.0, %v3619
        %v3621 = vpop.f32.mrb[0].mxu0
        %3622 = vdwg.mxu0
        %v3623 = vadd.f32 %v3233, %v3465
        %v3624 = vadd.f32 %v3234, %v3470
        %v3625 = vadd.f32 %v3235, %v3475
        %v3626 = vadd.f32 %v3236, %v3480
        %v3627 = vadd.f32 %v3237, %v3485
        %v3628 = vadd.f32 %v3238, %v3490
        %v3629 = vadd.f32 %v3239, %v3495
        %v3630 = vadd.f32 %v3240, %v3500
        %v3631 = vadd.f32 %v3241, %v3505
        %v3632 = vadd.f32 %v3242, %v3510
        %v3633 = vadd.f32 %v3243, %v3515
        %v3634 = vadd.f32 %v3244, %v3520
        %v3635 = vadd.f32 %v3245, %v3525
        %v3636 = vadd.f32 %v3246, %v3530
        %v3637 = vadd.f32 %v3247, %v3535
        %v3638 = vadd.f32 %v3248, %v3540
        %v3639 = vadd.f32 %v3249, %v3545
        %v3640 = vadd.f32 %v3250, %v3550
        %v3641 = vadd.f32 %v3251, %v3555
        %v3642 = vadd.f32 %v3252, %v3560
        %v3643 = vadd.f32 %v3253, %v3565
        %v3644 = vadd.f32 %v3254, %v3570
        %v3645 = vadd.f32 %v3255, %v3575
        %v3646 = vadd.f32 %v3256, %v3580
        %v3647 = vadd.f32 %v3257, %v3585
        %v3648 = vadd.f32 %v3258, %v3590
        %v3649 = vadd.f32 %v3259, %v3595
        %v3650 = vadd.f32 %v3260, %v3600
        %v3651 = vadd.f32 %v3261, %v3605
        %v3652 = vadd.f32 %v3262, %v3610
        %v3653 = vadd.f32 %v3263, %v3615
        %v3654 = vadd.f32 %v3264, %v3620
        %3655 = vst [vmem:[%s183] sm:$0xff] %v3623
        %3656 = vst [vmem:[%s183 + $0x8] sm:$0xff] %v3624
        %3657 = vst [vmem:[%s183 + $0x10] sm:$0xff] %v3625
        %3658 = vst [vmem:[%s183 + $0x18] sm:$0xff] %v3626
        %3659 = vst [vmem:[%s183 + $0x20] sm:$0xff] %v3627
        %3660 = vst [vmem:[%s183 + $0x28] sm:$0xff] %v3628
        %3661 = vst [vmem:[%s183 + $0x30] sm:$0xff] %v3629
        %3662 = vst [vmem:[%s183 + $0x38] sm:$0xff] %v3630
        %3663 = vst [vmem:[%s183 + $0x40] sm:$0xff] %v3631
        %3664 = vst [vmem:[%s183 + $0x48] sm:$0xff] %v3632
        %3665 = vst [vmem:[%s183 + $0x50] sm:$0xff] %v3633
        %3666 = vst [vmem:[%s183 + $0x58] sm:$0xff] %v3634
        %3667 = vst [vmem:[%s183 + $0x60] sm:$0xff] %v3635
        %3668 = vst [vmem:[%s183 + $0x68] sm:$0xff] %v3636
        %3669 = vst [vmem:[%s183 + $0x70] sm:$0xff] %v3637
        %3670 = vst [vmem:[%s183 + $0x78] sm:$0xff] %v3638
        %3671 = vst [vmem:[%s183 + $0x80] sm:$0xff] %v3639
        %3672 = vst [vmem:[%s183 + $0x88] sm:$0xff] %v3640
        %3673 = vst [vmem:[%s183 + $0x90] sm:$0xff] %v3641
        %3674 = vst [vmem:[%s183 + $0x98] sm:$0xff] %v3642
        %3675 = vst [vmem:[%s183 + $0xa0] sm:$0xff] %v3643
        %3676 = vst [vmem:[%s183 + $0xa8] sm:$0xff] %v3644
        %3677 = vst [vmem:[%s183 + $0xb0] sm:$0xff] %v3645
        %3678 = vst [vmem:[%s183 + $0xb8] sm:$0xff] %v3646
        %3679 = vst [vmem:[%s183 + $0xc0] sm:$0xff] %v3647
        %3680 = vst [vmem:[%s183 + $0xc8] sm:$0xff] %v3648
        %3681 = vst [vmem:[%s183 + $0xd0] sm:$0xff] %v3649
        %3682 = vst [vmem:[%s183 + $0xd8] sm:$0xff] %v3650
        %3683 = vst [vmem:[%s183 + $0xe0] sm:$0xff] %v3651
        %3684 = vst [vmem:[%s183 + $0xe8] sm:$0xff] %v3652
        %3685 = vst [vmem:[%s183 + $0xf0] sm:$0xff] %v3653
        %3686 = vst [vmem:[%s183 + $0xf8] sm:$0xff] %v3654
        %v3687 = vadd.f32 %v3623, %v3624
        %v3688 = vadd.f32 %v3687, %v3625
        %v3689 = vadd.f32 %v3688, %v3626
        %v3690 = vadd.f32 %v3689, %v3627
        %v3691 = vadd.f32 %v3690, %v3628
        %v3692 = vadd.f32 %v3691, %v3629
        %v3693 = vadd.f32 %v3692, %v3630
        %v3694 = vadd.f32 %v3693, %v3631
        %v3695 = vadd.f32 %v3694, %v3632
        %v3696 = vadd.f32 %v3695, %v3633
        %v3697 = vadd.f32 %v3696, %v3634
        %v3698 = vadd.f32 %v3697, %v3635
        %v3699 = vadd.f32 %v3698, %v3636
        %v3700 = vadd.f32 %v3699, %v3637
        %v3701 = vadd.f32 %v3700, %v3638
        %v3702 = vadd.f32 %v3701, %v3639
        %v3703 = vadd.f32 %v3702, %v3640
        %v3704 = vadd.f32 %v3703, %v3641
        %v3705 = vadd.f32 %v3704, %v3642
        %v3706 = vadd.f32 %v3705, %v3643
        %v3707 = vadd.f32 %v3706, %v3644
        %v3708 = vadd.f32 %v3707, %v3645
        %v3709 = vadd.f32 %v3708, %v3646
        %v3710 = vadd.f32 %v3709, %v3647
        %v3711 = vadd.f32 %v3710, %v3648
        %v3712 = vadd.f32 %v3711, %v3649
        %v3713 = vadd.f32 %v3712, %v3650
        %v3714 = vadd.f32 %v3713, %v3651
        %v3715 = vadd.f32 %v3714, %v3652
        %v3716 = vadd.f32 %v3715, %v3653
        %v3717 = vadd.f32 %v3716, %v3654
        %v3718 = vrot.slane %v3717, 4
        %v3719 = vadd.f32 %v3717, %v3718
        %v3720 = vrot.slane %v3719, 2
        %v3721 = vadd.f32 %v3719, %v3720
        %v3722 = vrot.slane %v3721, 1
        %v3723 = vadd.f32 %v3721, %v3722
        %3724 = vst [vmem:[%s190] sm:$0x1] %v3723
        %v3725 = vmul.f32 %v3623, %v3623
        %v3726 = vmul.f32 %v3624, %v3624
        %v3727 = vmul.f32 %v3625, %v3625
        %v3728 = vmul.f32 %v3626, %v3626
        %v3729 = vmul.f32 %v3627, %v3627
        %v3730 = vmul.f32 %v3628, %v3628
        %v3731 = vmul.f32 %v3629, %v3629
        %v3732 = vmul.f32 %v3630, %v3630
        %v3733 = vmul.f32 %v3631, %v3631
        %v3734 = vmul.f32 %v3632, %v3632
        %v3735 = vmul.f32 %v3633, %v3633
        %v3736 = vmul.f32 %v3634, %v3634
        %v3737 = vmul.f32 %v3635, %v3635
        %v3738 = vmul.f32 %v3636, %v3636
        %v3739 = vmul.f32 %v3637, %v3637
        %v3740 = vmul.f32 %v3638, %v3638
        %v3741 = vmul.f32 %v3639, %v3639
        %v3742 = vmul.f32 %v3640, %v3640
        %v3743 = vmul.f32 %v3641, %v3641
        %v3744 = vmul.f32 %v3642, %v3642
        %v3745 = vmul.f32 %v3643, %v3643
        %v3746 = vmul.f32 %v3644, %v3644
        %v3747 = vmul.f32 %v3645, %v3645
        %v3748 = vmul.f32 %v3646, %v3646
        %v3749 = vmul.f32 %v3647, %v3647
        %v3750 = vmul.f32 %v3648, %v3648
        %v3751 = vmul.f32 %v3649, %v3649
        %v3752 = vmul.f32 %v3650, %v3650
        %v3753 = vmul.f32 %v3651, %v3651
        %v3754 = vmul.f32 %v3652, %v3652
        %v3755 = vmul.f32 %v3653, %v3653
        %v3756 = vmul.f32 %v3654, %v3654
        %v3757 = vadd.f32 %v3725, %v3726
        %v3758 = vadd.f32 %v3757, %v3727
        %v3759 = vadd.f32 %v3758, %v3728
        %v3760 = vadd.f32 %v3759, %v3729
        %v3761 = vadd.f32 %v3760, %v3730
        %v3762 = vadd.f32 %v3761, %v3731
        %v3763 = vadd.f32 %v3762, %v3732
        %v3764 = vadd.f32 %v3763, %v3733
        %v3765 = vadd.f32 %v3764, %v3734
        %v3766 = vadd.f32 %v3765, %v3735
        %v3767 = vadd.f32 %v3766, %v3736
        %v3768 = vadd.f32 %v3767, %v3737
        %v3769 = vadd.f32 %v3768, %v3738
        %v3770 = vadd.f32 %v3769, %v3739
        %v3771 = vadd.f32 %v3770, %v3740
        %v3772 = vadd.f32 %v3771, %v3741
        %v3773 = vadd.f32 %v3772, %v3742
        %v3774 = vadd.f32 %v3773, %v3743
        %v3775 = vadd.f32 %v3774, %v3744
        %v3776 = vadd.f32 %v3775, %v3745
        %v3777 = vadd.f32 %v3776, %v3746
        %v3778 = vadd.f32 %v3777, %v3747
        %v3779 = vadd.f32 %v3778, %v3748
        %v3780 = vadd.f32 %v3779, %v3749
        %v3781 = vadd.f32 %v3780, %v3750
        %v3782 = vadd.f32 %v3781, %v3751
        %v3783 = vadd.f32 %v3782, %v3752
        %v3784 = vadd.f32 %v3783, %v3753
        %v3785 = vadd.f32 %v3784, %v3754
        %v3786 = vadd.f32 %v3785, %v3755
        %v3787 = vadd.f32 %v3786, %v3756
        %v3788 = vrot.slane %v3787, 4
        %v3789 = vadd.f32 %v3787, %v3788
        %v3790 = vrot.slane %v3789, 2
        %v3791 = vadd.f32 %v3789, %v3790
        %v3792 = vrot.slane %v3791, 1
        %v3793 = vadd.f32 %v3791, %v3792
        %3794 = vst [vmem:[%s190 + $0x1] sm:$0x1] %v3793
        %3795 = vst [vmem:[%s190 + $0x2] sm:$0x3f] 0.0
        %s3796 = sand.u32 %s90, 1
        %s3797 = scalar_lea.sflag [#allocation3], %s3796
        %s3798 = sand.u32 %s90, 1
        %s3799 = smul.addr %s3798, 256
        %s3800 = scalar_lea.vmem [#allocation2], %s3799
        %s3801 = sand.u32 %s118, 1
        %s3802 = scalar_lea.sflag [#allocation5], %s3801
        %s3803 = sand.u32 %s118, 1
        %s3804 = smul.addr %s3803, 8
        %s3805 = scalar_lea.vmem [#allocation4], %s3804
        // Predicated region
        $region29: #{tpu_custom_call.1} parent=27 // pred_check
          %p3806 = pneg %p100
        $region30: #{tpu_custom_call.1} parent=27 // pred_check_branch
          %3808 = sbr.rel (%p3806) target = $region32
        $region31: #{tpu_custom_call.1} parent=27 // pred_region
          %s3809 = sadd.s32 %s25, %s26
          %s3810 = smul.u32 32, %s3809
          %s3812 = ssub.s32 4096, 4096
          %3813 = vsyncadd %s3797, %s3812
          %s3814 = smul.addr %s3810, 128
          %s3815 = scalar_lea.hbm %s2, %s3814
          %s3816 = sshll.u32 %s3800, 4
          %s3817 = int_to_ptr.vmem [resolvable:$true] %s3816
          %3822 = dma.vmem_to_hbm [thread:$0]  %s3817, 4096, %s3815, %s3797, 128, 128, 8
        $region32: #{tpu_custom_call.1} parent=27 // pred_fallthru
          _
        // Predicated region
        $region33: #{tpu_custom_call.1} parent=27 // pred_check
          %p3823 = pneg %p128
        $region34: #{tpu_custom_call.1} parent=27 // pred_check_branch
          %3825 = sbr.rel (%p3823) target = $region36
        $region35: #{tpu_custom_call.1} parent=27 // pred_region
          %s3826 = sadd.s32 %s25, %s26
          %s3828 = ssub.s32 128, 128
          %3829 = vsyncadd %s3802, %s3828
          %s3830 = smul.addr %s3826, 128
          %s3831 = scalar_lea.hbm %s3, %s3830
          %s3833 = sshll.u32 %s3805, 4
          %s3834 = int_to_ptr.vmem [resolvable:$true] %s3833
          %3836 = dma.vmem_to_hbm [thread:$0]  %s3834, 128, %s3831, %s3802
        $region36: #{tpu_custom_call.1} parent=27 // pred_fallthru
          _
      $region28: #{tpu_custom_call.1} parent=5 // pred_fallthru
        _
      %p3837 = scmp.le.s32.totalorder 2, %s16
      // Predicated region
      $region37: #{tpu_custom_call.1} parent=5 // pred_check
        %p3838 = pneg %p3837
      $region38: #{tpu_custom_call.1} parent=5 // pred_check_branch
        %3840 = sbr.rel (%p3838) target = $region40
      $region39: #{tpu_custom_call.1} parent=5 // pred_region
        %s3841 = ssub.s32 %s16, 2
        // Predicated region
        $region41: #{tpu_custom_call.1} parent=39 // pred_check
          %p3842 = pneg %p106
        $region42: #{tpu_custom_call.1} parent=39 // pred_check_branch
          %3844 = sbr.rel (%p3842) target = $region44
        $region43: #{tpu_custom_call.1} parent=39 // pred_region
          %s3845 = sand.u32 %s91, 1
          %s3846 = scalar_lea.sflag [#allocation3], %s3845
          %s3847 = sand.u32 %s91, 1
          %s3848 = smul.addr %s3847, 256
          %s3849 = scalar_lea.vmem [#allocation2], %s3848
          %3850 = dma.done %s3846, 4096
        $region44: #{tpu_custom_call.1} parent=39 // pred_fallthru
          _
        // Predicated region
        $region45: #{tpu_custom_call.1} parent=39 // pred_check
          %p3851 = pneg %p134
        $region46: #{tpu_custom_call.1} parent=39 // pred_check_branch
          %3853 = sbr.rel (%p3851) target = $region48
        $region47: #{tpu_custom_call.1} parent=39 // pred_region
          %s3854 = sand.u32 %s119, 1
          %s3855 = scalar_lea.sflag [#allocation5], %s3854
          %s3856 = sand.u32 %s119, 1
          %s3857 = smul.addr %s3856, 8
          %s3858 = scalar_lea.vmem [#allocation4], %s3857
          %3859 = dma.done %s3855, 128
        $region48: #{tpu_custom_call.1} parent=39 // pred_fallthru
          _
      $region40: #{tpu_custom_call.1} parent=5 // pred_fallthru
        _
    $region6: #{tpu_custom_call.1} parent=1 // loop_footer
      %s20 = sadd.s32 1, %s16
    $region7: #{tpu_custom_call.1} parent=1 // loop_footer_branch
      %15 = sbr.rel target = $region3
    $region8: #{tpu_custom_call.1} parent=1 // loop_exit
      _
    %3860 = vsyncpa [#allocation3], 1
    %s3861 = scalar_lea.sflag [#allocation3], 1
    %3862 = vsyncpa %s3861, 1
    %3863 = vsyncpa [#allocation5], 1
    %s3864 = scalar_lea.sflag [#allocation5], 1
    %3865 = vsyncpa %s3864, 1

</llo_original>
